<compile_context>
chip_gen: v6e
topology: v6e:2x2x1
jax: 0.10.0
libtpu: 0.0.40
codegen_flags: <defaults>
</compile_context>

<pallas_src>
import functools

import jax
import jax.numpy as jnp
from jax.experimental import pallas as pl
from jax.experimental.pallas import tpu as pltpu

BN_EPS = 1e-5


def _round_up(x, m):
    return (x + m - 1) // m * m


# ----------------------------- fused stem kernel -----------------------------

def _stem_kernel(H1, Wc, S,
                 p1_ref, w1_ref, s1_ref, b1_ref,
                 w2_ref, s2_ref, b2_ref,
                 w3_ref, s3_ref, b3_ref,
                 mask_ref, out_ref,
                 buf1, buf2, buf3):
    """One image per grid step.

    Canvas layout: an (H1+2, Wc) spatial grid flattened row-major into M rows
    (channels on lanes).  Rows 1..H1 x cols 1..W1 hold data, everything else is
    zero, so a row shift of +/-(Wc +/- 1) implements the 3x3 'same' padding.
    buf1/buf2 have S slack rows of zeros on both ends so every tap read of M
    rows stays in bounds."""
    R = H1 + 2
    M = R * Wc
    mask = mask_ref[...]                                     # (M, 1) f32

    def conv_taps(buf, w_ref, cout):
        # 3x3 conv = 9 accumulating bf16 MXU matmuls over shifted canvas views.
        acc = jnp.zeros((M, cout), jnp.float32)
        for kh in range(3):
            for kw in range(3):
                d = (kh - 1) * Wc + (kw - 1)
                tap = buf[pl.ds(S + d, M), :].astype(jnp.bfloat16)   # (M, Cin)
                acc = acc + jnp.dot(tap, w_ref[kh * 3 + kw],
                                    preferred_element_type=jnp.float32)
        return acc

    def to_canvas(buf, act):
        # Keep slack rows at zero, then write the activation rows (aligned).
        zeros = jnp.zeros((S, buf.shape[1]), jnp.float32)
        buf[pl.ds(0, S), :] = zeros
        buf[pl.ds(S + M, S), :] = zeros
        buf[pl.ds(S, M), :] = act

    # ---- conv1 + bn1 + relu: (M, K1) @ (K1, C1) from canvas-layout patches ----
    acc1 = jnp.dot(p1_ref[0], w1_ref[...], preferred_element_type=jnp.float32)
    a1 = jnp.maximum(acc1 * s1_ref[...] + b1_ref[...], 0.0) * mask
    to_canvas(buf1, a1)

    # ---- conv2 + bn2 + relu (taps read canvas1 straight from VMEM) ----
    acc2 = conv_taps(buf1, w2_ref, w2_ref.shape[2])
    a2 = jnp.maximum(acc2 * s2_ref[...] + b2_ref[...], 0.0) * mask
    to_canvas(buf2, a2)

    # ---- conv3 + bn3 + relu (junk border rows are dropped by the pool lattice,
    #      so no mask is needed here) ----
    acc3 = conv_taps(buf2, w3_ref, w3_ref.shape[2])
    a3 = jnp.maximum(acc3 * s3_ref[...] + b3_ref[...], 0.0)
    buf3[pl.ds(0, M), :] = a3
    buf3[pl.ds(M, 8), :] = jnp.zeros((8, buf3.shape[1]), jnp.float32)

    # ---- 2x2 average pool: dense 4-neighbour average of the conv3 map; the
    #      valid pooled values live on the (even row, odd col) lattice. ----
    n_rows = H1 * Wc
    pooled = (buf3[pl.ds(Wc, n_rows), :] +
              buf3[pl.ds(Wc + 1, n_rows), :] +
              buf3[pl.ds(2 * Wc, n_rows), :] +
              buf3[pl.ds(2 * Wc + 1, n_rows), :]) * 0.25
    out_ref[0] = pooled


# --------------------------------- wrapper -----------------------------------

def _fold_bn(gamma, beta, mean, var):
    scale = gamma / jnp.sqrt(var + BN_EPS)
    bias = beta - mean * scale
    return scale.astype(jnp.float32), bias.astype(jnp.float32)


def thermal_module_forward(x_nchw, params):
    """Forward pass matching the PyTorch thermal_module (eval mode), NCHW in/out."""
    x = jnp.transpose(x_nchw, (0, 2, 3, 1)).astype(jnp.float32)      # NHWC
    N, H, W, Cin = x.shape
    w1, w2, w3 = params["w1"], params["w2"], params["w3"]
    C1, C2, C3 = w1.shape[0], w2.shape[0], w3.shape[0]

    H1 = (H + 2 - 3) // 2 + 1                                        # conv1: stride 2, pad 1
    W1 = (W + 2 - 3) // 2 + 1
    assert H1 % 2 == 0 and W1 % 2 == 0, "stem expects spatial dims divisible by 4"
    H4, W4 = H1 // 2, W1 // 2

    R = H1 + 2                               # canvas rows (1-row zero border)
    Wc = _round_up(W1 + 2, 8)                # canvas cols (border + alignment pad)
    M = R * Wc                               # flattened canvas rows
    S = _round_up(Wc + 1, 8)                 # zero slack so tap reads stay in-bounds
    L = M + 2 * S

    # --- conv1 im2col patches (only 3 input channels -> negligible HBM bytes),
    #     laid out directly on the zero-bordered canvas, cast to bf16 ---
    K = 9 * Cin
    Kp = _round_up(K, 8)
    xp = jnp.pad(x, ((0, 0), (1, 1), (1, 1), (0, 0)))
    cols = []
    for kh in range(3):
        for kw in range(3):
            cols.append(xp[:, kh:kh + 2 * H1:2, kw:kw + 2 * W1:2, :])
    p1 = jnp.concatenate(cols, axis=-1)                              # (N, H1, W1, 9*Cin)
    p1 = jnp.pad(p1, ((0, 0), (1, 1), (1, Wc - W1 - 1), (0, Kp - K)))
    p1 = p1.reshape(N, M, Kp).astype(jnp.bfloat16)

    # --- weights (Cout, Cin, 3, 3) -> matmul layouts, bf16 ---
    w1f = jnp.transpose(w1, (2, 3, 1, 0)).reshape(K, C1)
    w1f = jnp.pad(w1f, ((0, Kp - K), (0, 0))).astype(jnp.bfloat16)   # (Kp, C1)

    def taps(w):  # (Cout, Cin, 3, 3) -> (9, Cin, Cout)
        return jnp.transpose(w, (2, 3, 1, 0)).reshape(
            9, w.shape[1], w.shape[0]).astype(jnp.bfloat16)

    w2t, w3t = taps(w2), taps(w3)

    # --- folded eval-mode BatchNorm ---
    s1, b1 = _fold_bn(*params["bn1"])
    s2, b2 = _fold_bn(*params["bn2"])
    s3, b3 = _fold_bn(*params["bn3"])
    s1, b1 = s1.reshape(1, C1), b1.reshape(1, C1)
    s2, b2 = s2.reshape(1, C2), b2.reshape(1, C2)
    s3, b3 = s3.reshape(1, C3), b3.reshape(1, C3)

    # --- canvas validity mask (1 inside the H1 x W1 region, 0 elsewhere) ---
    ii = jnp.arange(R)[:, None]
    jj = jnp.arange(Wc)[None, :]
    mask = ((ii >= 1) & (ii <= H1) & (jj >= 1) & (jj <= W1))
    mask = mask.astype(jnp.float32).reshape(M, 1)

    kernel = functools.partial(_stem_kernel, H1, Wc, S)
    rep2 = lambda n: (0, 0)
    rep3 = lambda n: (0, 0, 0)

    out_flat = pl.pallas_call(
        kernel,
        out_shape=jax.ShapeDtypeStruct((N, H1 * Wc, C3), jnp.float32),
        grid=(N,),
        in_specs=[
            pl.BlockSpec((1, M, Kp), lambda n: (n, 0, 0)),           # conv1 patches
            pl.BlockSpec((Kp, C1), rep2),                            # w1
            pl.BlockSpec((1, C1), rep2), pl.BlockSpec((1, C1), rep2),
            pl.BlockSpec((9, C1, C2), rep3),                         # w2 taps
            pl.BlockSpec((1, C2), rep2), pl.BlockSpec((1, C2), rep2),
            pl.BlockSpec((9, C2, C3), rep3),                         # w3 taps
            pl.BlockSpec((1, C3), rep2), pl.BlockSpec((1, C3), rep2),
            pl.BlockSpec((M, 1), rep2),                              # canvas mask
        ],
        out_specs=pl.BlockSpec((1, H1 * Wc, C3), lambda n: (n, 0, 0)),
        scratch_shapes=[
            pltpu.VMEM((L, C1), jnp.float32),                        # canvas1
            pltpu.VMEM((L, C2), jnp.float32),                        # canvas2
            pltpu.VMEM((M + 8, C3), jnp.float32),                    # conv3 map
        ],
        compiler_params=pltpu.CompilerParams(
            dimension_semantics=("parallel",)),
    )(p1, w1f, s1, b1, w2t, s2, b2, w3t, s3, b3, mask)

    # TODO(synk): final stride-2 lattice pick + NCHW transpose stay in XLA (cheap layout glue).
    pooled = out_flat.reshape(N, H1, Wc, C3)[:, 0:H1:2, 1:W1:2, :]   # (N, H4, W4, C3)
    assert pooled.shape == (N, H4, W4, C3)
    return jnp.transpose(pooled, (0, 3, 1, 2))                       # NCHW


# ----------------------------- pure-JAX reference -----------------------------

def _ref_forward(x_nchw, params, operand_dtype=jnp.float32):
    def conv_bn_relu(x, w, gamma, beta, mean, var, stride):
        y = jax.lax.conv_general_dilated(
            x.astype(operand_dtype), w.astype(operand_dtype),
            window_strides=(stride, stride), padding=[(1, 1), (1, 1)],
            dimension_numbers=("NCHW", "OIHW", "NCHW"),
            preferred_element_type=jnp.float32)
        scale = gamma / jnp.sqrt(var + BN_EPS)
        bias = beta - mean * scale
        return jnp.maximum(y * scale.reshape(1, -1, 1, 1) + bias.reshape(1, -1, 1, 1), 0.0)

    x = conv_bn_relu(x_nchw, params["w1"], *params["bn1"], 2)
    x = conv_bn_relu(x, params["w2"], *params["bn2"], 1)
    x = conv_bn_relu(x, params["w3"], *params["bn3"], 1)
    N, C, H, W = x.shape
    return x.reshape(N, C, H // 2, 2, W // 2, 2).mean(axis=(3, 5))


# ----------------------- deterministic init & run -----------------------

def make_params(key, width=8, cin=3):
    c_half = width // 2
    ks = jax.random.split(key, 6)

    def bn(k, c):
        kg, kb, km, kv = jax.random.split(k, 4)
        gamma = jax.random.uniform(kg, (c,), jnp.float32, 0.5, 1.5)
        beta = jax.random.normal(kb, (c,), jnp.float32) * 0.1
        mean = jax.random.normal(km, (c,), jnp.float32) * 0.1
        var = jax.random.uniform(kv, (c,), jnp.float32, 0.5, 1.5)
        return (gamma, beta, mean, var)

    return {
        "w1": jax.random.normal(ks[0], (c_half, cin, 3, 3), jnp.float32) * 0.1,
        "bn1": bn(ks[1], c_half),
        "w2": jax.random.normal(ks[2], (c_half, c_half, 3, 3), jnp.float32) * 0.1,
        "bn2": bn(ks[3], c_half),
        "w3": jax.random.normal(ks[4], (width, c_half, 3, 3), jnp.float32) * 0.1,
        "bn3": bn(ks[5], width),
    }


if __name__ == "__main__":
    key = jax.random.PRNGKey(0)
    kx, kp = jax.random.split(key)

    # Small shapes: batch=2, 3 input channels (RGB/thermal), 16x16, stem width=8.
    x = jax.random.normal(kx, (2, 3, 16, 16), jnp.float32)           # NCHW
    params = make_params(kp, width=8, cin=3)

    out = jax.block_until_ready(thermal_module_forward(x, params))
    assert out.shape == (2, 8, 4, 4), out.shape

    # Tight check against a reference that uses the same bf16 matmul operands,
    # loose check against the pure-f32 module semantics.
    ref_bf16 = _ref_forward(x, params, operand_dtype=jnp.bfloat16)
    ref_f32 = _ref_forward(x, params, operand_dtype=jnp.float32)
    err_bf16 = float(jnp.max(jnp.abs(out - ref_bf16)))
    err_f32 = float(jnp.max(jnp.abs(out - ref_f32)))
    assert err_bf16 < 1e-2, ("bf16-matched reference mismatch", err_bf16)
    assert err_f32 < 5e-2, ("f32 reference mismatch", err_f32)

    print("KERNEL_OK")
</pallas_src>

<mosaic_0001>
module attributes {stable_mosaic.version = 11 : i64} {
  func.func @_stem_kernel(%arg0: i32, %arg1: memref<1x160x32xbf16, #tpu.memory_space<vmem>>, %arg2: memref<32x4xbf16, #tpu.memory_space<vmem>>, %arg3: memref<1x4xf32, #tpu.memory_space<vmem>>, %arg4: memref<1x4xf32, #tpu.memory_space<vmem>>, %arg5: memref<9x4x4xbf16, #tpu.memory_space<vmem>>, %arg6: memref<1x4xf32, #tpu.memory_space<vmem>>, %arg7: memref<1x4xf32, #tpu.memory_space<vmem>>, %arg8: memref<9x4x8xbf16, #tpu.memory_space<vmem>>, %arg9: memref<1x8xf32, #tpu.memory_space<vmem>>, %arg10: memref<1x8xf32, #tpu.memory_space<vmem>>, %arg11: memref<160x1xf32, #tpu.memory_space<vmem>>, %arg12: memref<1x128x8xf32, #tpu.memory_space<vmem>>, %arg13: memref<208x4xf32, #tpu.memory_space<vmem>>, %arg14: memref<208x4xf32, #tpu.memory_space<vmem>>, %arg15: memref<168x8xf32, #tpu.memory_space<vmem>>) attributes {dimension_semantics = [#tpu.dimension_semantics<parallel>], iteration_bounds = array<i64: 2>, scalar_prefetch = 0 : i64, scratch_operands = 3 : i64, tpu.core_type = #tpu.core_type<tc>, window_params = [{transform_indices = @transform_0, window_bounds = array<i64: 1, 160, 32>}, {pipeline_mode = #tpu.pipeline_mode<synchronous>, transform_indices = @transform_1, window_bounds = array<i64: 32, 4>}, {pipeline_mode = #tpu.pipeline_mode<synchronous>, transform_indices = @transform_2, window_bounds = array<i64: 1, 4>}, {pipeline_mode = #tpu.pipeline_mode<synchronous>, transform_indices = @transform_3, window_bounds = array<i64: 1, 4>}, {pipeline_mode = #tpu.pipeline_mode<synchronous>, transform_indices = @transform_4, window_bounds = array<i64: 9, 4, 4>}, {pipeline_mode = #tpu.pipeline_mode<synchronous>, transform_indices = @transform_5, window_bounds = array<i64: 1, 4>}, {pipeline_mode = #tpu.pipeline_mode<synchronous>, transform_indices = @transform_6, window_bounds = array<i64: 1, 4>}, {pipeline_mode = #tpu.pipeline_mode<synchronous>, transform_indices = @transform_7, window_bounds = array<i64: 9, 4, 8>}, {pipeline_mode = #tpu.pipeline_mode<synchronous>, transform_indices = @transform_8, window_bounds = array<i64: 1, 8>}, {pipeline_mode = #tpu.pipeline_mode<synchronous>, transform_indices = @transform_9, window_bounds = array<i64: 1, 8>}, {pipeline_mode = #tpu.pipeline_mode<synchronous>, transform_indices = @transform_10, window_bounds = array<i64: 160, 1>}, {transform_indices = @transform_11, window_bounds = array<i64: 1, 128, 8>}]} {
    %c0 = arith.constant 0 : index
    %c0_0 = arith.constant 0 : index
    %0 = vector.load %arg11[%c0, %c0_0] : memref<160x1xf32, #tpu.memory_space<vmem>>, vector<160x1xf32>
    %c0_1 = arith.constant 0 : index
    %c0_2 = arith.constant 0 : index
    %c0_3 = arith.constant 0 : index
    %1 = vector.load %arg1[%c0_1, %c0_2, %c0_3] : memref<1x160x32xbf16, #tpu.memory_space<vmem>>, vector<1x160x32xbf16>
    %2 = vector.shape_cast %1 : vector<1x160x32xbf16> to vector<160x32xbf16>
    %c0_4 = arith.constant 0 : index
    %c0_5 = arith.constant 0 : index
    %3 = vector.load %arg2[%c0_4, %c0_5] : memref<32x4xbf16, #tpu.memory_space<vmem>>, vector<32x4xbf16>
    %cst = arith.constant dense<0.000000e+00> : vector<160x4xf32>
    %4 = tpu.matmul %2, %3, %cst {dimension_numbers = #tpu.dot_dimension_numbers<[1], [0], [0], [1], [0, 0, 1, 1], [], []>} : vector<160x32xbf16>, vector<32x4xbf16>, vector<160x4xf32> -> vector<160x4xf32>
    %c0_6 = arith.constant 0 : index
    %c0_7 = arith.constant 0 : index
    %5 = vector.load %arg3[%c0_6, %c0_7] : memref<1x4xf32, #tpu.memory_space<vmem>>, vector<1x4xf32>
    %6 = vector.broadcast %5 : vector<1x4xf32> to vector<160x4xf32>
    %7 = arith.mulf %4, %6 : vector<160x4xf32>
    %c0_8 = arith.constant 0 : index
    %c0_9 = arith.constant 0 : index
    %8 = vector.load %arg4[%c0_8, %c0_9] : memref<1x4xf32, #tpu.memory_space<vmem>>, vector<1x4xf32>
    %9 = vector.broadcast %8 : vector<1x4xf32> to vector<160x4xf32>
    %10 = arith.addf %7, %9 : vector<160x4xf32>
    %cst_10 = arith.constant 0.000000e+00 : f32
    %11 = vector.broadcast %cst_10 : f32 to vector<160x4xf32>
    %12 = arith.maximumf %10, %11 : vector<160x4xf32>
    %13 = vector.broadcast %0 : vector<160x1xf32> to vector<160x4xf32>
    %14 = arith.mulf %12, %13 : vector<160x4xf32>
    %cst_11 = arith.constant 0.000000e+00 : f32
    %15 = vector.broadcast %cst_11 : f32 to vector<24x4xf32>
    %c0_12 = arith.constant 0 : index
    %c0_13 = arith.constant 0 : index
    %16 = vector.load %arg13[%c0_12, %c0_13] : memref<208x4xf32, #tpu.memory_space<vmem>>, vector<24x4xf32>
    tpu.vector_store %arg13[%c0_12, %c0_13], %15 {strides = array<i32>} : memref<208x4xf32, #tpu.memory_space<vmem>>, vector<24x4xf32>,
    %c184 = arith.constant 184 : index
    %c0_14 = arith.constant 0 : index
    %17 = vector.load %arg13[%c184, %c0_14] : memref<208x4xf32, #tpu.memory_space<vmem>>, vector<24x4xf32>
    tpu.vector_store %arg13[%c184, %c0_14], %15 {strides = array<i32>} : memref<208x4xf32, #tpu.memory_space<vmem>>, vector<24x4xf32>,
    %c24 = arith.constant 24 : index
    %c0_15 = arith.constant 0 : index
    %18 = vector.load %arg13[%c24, %c0_15] : memref<208x4xf32, #tpu.memory_space<vmem>>, vector<160x4xf32>
    tpu.vector_store %arg13[%c24, %c0_15], %14 {strides = array<i32>} : memref<208x4xf32, #tpu.memory_space<vmem>>, vector<160x4xf32>,
    %cst_16 = arith.constant 0.000000e+00 : f32
    %19 = vector.broadcast %cst_16 : f32 to vector<160x4xf32>
    %c7 = arith.constant 7 : index
    %c0_17 = arith.constant 0 : index
    %20 = vector.load %arg13[%c7, %c0_17] : memref<208x4xf32, #tpu.memory_space<vmem>>, vector<160x4xf32>
    %21 = arith.truncf %20 : vector<160x4xf32> to vector<160x4xbf16>
    %c0_18 = arith.constant 0 : index
    %c0_19 = arith.constant 0 : index
    %c0_20 = arith.constant 0 : index
    %22 = vector.load %arg5[%c0_18, %c0_19, %c0_20] : memref<9x4x4xbf16, #tpu.memory_space<vmem>>, vector<1x4x4xbf16>
    %23 = vector.shape_cast %22 : vector<1x4x4xbf16> to vector<4x4xbf16>
    %cst_21 = arith.constant dense<0.000000e+00> : vector<160x4xf32>
    %24 = tpu.matmul %21, %23, %cst_21 {dimension_numbers = #tpu.dot_dimension_numbers<[1], [0], [0], [1], [0, 0, 1, 1], [], []>} : vector<160x4xbf16>, vector<4x4xbf16>, vector<160x4xf32> -> vector<160x4xf32>
    %25 = arith.addf %19, %24 : vector<160x4xf32>
    %c8 = arith.constant 8 : index
    %c0_22 = arith.constant 0 : index
    %26 = vector.load %arg13[%c8, %c0_22] : memref<208x4xf32, #tpu.memory_space<vmem>>, vector<160x4xf32>
    %27 = arith.truncf %26 : vector<160x4xf32> to vector<160x4xbf16>
    %c1 = arith.constant 1 : index
    %c0_23 = arith.constant 0 : index
    %c0_24 = arith.constant 0 : index
    %28 = vector.load %arg5[%c1, %c0_23, %c0_24] : memref<9x4x4xbf16, #tpu.memory_space<vmem>>, vector<1x4x4xbf16>
    %29 = vector.shape_cast %28 : vector<1x4x4xbf16> to vector<4x4xbf16>
    %cst_25 = arith.constant dense<0.000000e+00> : vector<160x4xf32>
    %30 = tpu.matmul %27, %29, %cst_25 {dimension_numbers = #tpu.dot_dimension_numbers<[1], [0], [0], [1], [0, 0, 1, 1], [], []>} : vector<160x4xbf16>, vector<4x4xbf16>, vector<160x4xf32> -> vector<160x4xf32>
    %31 = arith.addf %25, %30 : vector<160x4xf32>
    %c9 = arith.constant 9 : index
    %c0_26 = arith.constant 0 : index
    %32 = vector.load %arg13[%c9, %c0_26] : memref<208x4xf32, #tpu.memory_space<vmem>>, vector<160x4xf32>
    %33 = arith.truncf %32 : vector<160x4xf32> to vector<160x4xbf16>
    %c2 = arith.constant 2 : index
    %c0_27 = arith.constant 0 : index
    %c0_28 = arith.constant 0 : index
    %34 = vector.load %arg5[%c2, %c0_27, %c0_28] : memref<9x4x4xbf16, #tpu.memory_space<vmem>>, vector<1x4x4xbf16>
    %35 = vector.shape_cast %34 : vector<1x4x4xbf16> to vector<4x4xbf16>
    %cst_29 = arith.constant dense<0.000000e+00> : vector<160x4xf32>
    %36 = tpu.matmul %33, %35, %cst_29 {dimension_numbers = #tpu.dot_dimension_numbers<[1], [0], [0], [1], [0, 0, 1, 1], [], []>} : vector<160x4xbf16>, vector<4x4xbf16>, vector<160x4xf32> -> vector<160x4xf32>
    %37 = arith.addf %31, %36 : vector<160x4xf32>
    %c23 = arith.constant 23 : index
    %c0_30 = arith.constant 0 : index
    %38 = vector.load %arg13[%c23, %c0_30] : memref<208x4xf32, #tpu.memory_space<vmem>>, vector<160x4xf32>
    %39 = arith.truncf %38 : vector<160x4xf32> to vector<160x4xbf16>
    %c3 = arith.constant 3 : index
    %c0_31 = arith.constant 0 : index
    %c0_32 = arith.constant 0 : index
    %40 = vector.load %arg5[%c3, %c0_31, %c0_32] : memref<9x4x4xbf16, #tpu.memory_space<vmem>>, vector<1x4x4xbf16>
    %41 = vector.shape_cast %40 : vector<1x4x4xbf16> to vector<4x4xbf16>
    %cst_33 = arith.constant dense<0.000000e+00> : vector<160x4xf32>
    %42 = tpu.matmul %39, %41, %cst_33 {dimension_numbers = #tpu.dot_dimension_numbers<[1], [0], [0], [1], [0, 0, 1, 1], [], []>} : vector<160x4xbf16>, vector<4x4xbf16>, vector<160x4xf32> -> vector<160x4xf32>
    %43 = arith.addf %37, %42 : vector<160x4xf32>
    %c24_34 = arith.constant 24 : index
    %c0_35 = arith.constant 0 : index
    %44 = vector.load %arg13[%c24_34, %c0_35] : memref<208x4xf32, #tpu.memory_space<vmem>>, vector<160x4xf32>
    %45 = arith.truncf %44 : vector<160x4xf32> to vector<160x4xbf16>
    %c4 = arith.constant 4 : index
    %c0_36 = arith.constant 0 : index
    %c0_37 = arith.constant 0 : index
    %46 = vector.load %arg5[%c4, %c0_36, %c0_37] : memref<9x4x4xbf16, #tpu.memory_space<vmem>>, vector<1x4x4xbf16>
    %47 = vector.shape_cast %46 : vector<1x4x4xbf16> to vector<4x4xbf16>
    %cst_38 = arith.constant dense<0.000000e+00> : vector<160x4xf32>
    %48 = tpu.matmul %45, %47, %cst_38 {dimension_numbers = #tpu.dot_dimension_numbers<[1], [0], [0], [1], [0, 0, 1, 1], [], []>} : vector<160x4xbf16>, vector<4x4xbf16>, vector<160x4xf32> -> vector<160x4xf32>
    %49 = arith.addf %43, %48 : vector<160x4xf32>
    %c25 = arith.constant 25 : index
    %c0_39 = arith.constant 0 : index
    %50 = vector.load %arg13[%c25, %c0_39] : memref<208x4xf32, #tpu.memory_space<vmem>>, vector<160x4xf32>
    %51 = arith.truncf %50 : vector<160x4xf32> to vector<160x4xbf16>
    %c5 = arith.constant 5 : index
    %c0_40 = arith.constant 0 : index
    %c0_41 = arith.constant 0 : index
    %52 = vector.load %arg5[%c5, %c0_40, %c0_41] : memref<9x4x4xbf16, #tpu.memory_space<vmem>>, vector<1x4x4xbf16>
    %53 = vector.shape_cast %52 : vector<1x4x4xbf16> to vector<4x4xbf16>
    %cst_42 = arith.constant dense<0.000000e+00> : vector<160x4xf32>
    %54 = tpu.matmul %51, %53, %cst_42 {dimension_numbers = #tpu.dot_dimension_numbers<[1], [0], [0], [1], [0, 0, 1, 1], [], []>} : vector<160x4xbf16>, vector<4x4xbf16>, vector<160x4xf32> -> vector<160x4xf32>
    %55 = arith.addf %49, %54 : vector<160x4xf32>
    %c39 = arith.constant 39 : index
    %c0_43 = arith.constant 0 : index
    %56 = vector.load %arg13[%c39, %c0_43] : memref<208x4xf32, #tpu.memory_space<vmem>>, vector<160x4xf32>
    %57 = arith.truncf %56 : vector<160x4xf32> to vector<160x4xbf16>
    %c6 = arith.constant 6 : index
    %c0_44 = arith.constant 0 : index
    %c0_45 = arith.constant 0 : index
    %58 = vector.load %arg5[%c6, %c0_44, %c0_45] : memref<9x4x4xbf16, #tpu.memory_space<vmem>>, vector<1x4x4xbf16>
    %59 = vector.shape_cast %58 : vector<1x4x4xbf16> to vector<4x4xbf16>
    %cst_46 = arith.constant dense<0.000000e+00> : vector<160x4xf32>
    %60 = tpu.matmul %57, %59, %cst_46 {dimension_numbers = #tpu.dot_dimension_numbers<[1], [0], [0], [1], [0, 0, 1, 1], [], []>} : vector<160x4xbf16>, vector<4x4xbf16>, vector<160x4xf32> -> vector<160x4xf32>
    %61 = arith.addf %55, %60 : vector<160x4xf32>
    %c40 = arith.constant 40 : index
    %c0_47 = arith.constant 0 : index
    %62 = vector.load %arg13[%c40, %c0_47] : memref<208x4xf32, #tpu.memory_space<vmem>>, vector<160x4xf32>
    %63 = arith.truncf %62 : vector<160x4xf32> to vector<160x4xbf16>
    %c7_48 = arith.constant 7 : index
    %c0_49 = arith.constant 0 : index
    %c0_50 = arith.constant 0 : index
    %64 = vector.load %arg5[%c7_48, %c0_49, %c0_50] : memref<9x4x4xbf16, #tpu.memory_space<vmem>>, vector<1x4x4xbf16>
    %65 = vector.shape_cast %64 : vector<1x4x4xbf16> to vector<4x4xbf16>
    %cst_51 = arith.constant dense<0.000000e+00> : vector<160x4xf32>
    %66 = tpu.matmul %63, %65, %cst_51 {dimension_numbers = #tpu.dot_dimension_numbers<[1], [0], [0], [1], [0, 0, 1, 1], [], []>} : vector<160x4xbf16>, vector<4x4xbf16>, vector<160x4xf32> -> vector<160x4xf32>
    %67 = arith.addf %61, %66 : vector<160x4xf32>
    %c41 = arith.constant 41 : index
    %c0_52 = arith.constant 0 : index
    %68 = vector.load %arg13[%c41, %c0_52] : memref<208x4xf32, #tpu.memory_space<vmem>>, vector<160x4xf32>
    %69 = arith.truncf %68 : vector<160x4xf32> to vector<160x4xbf16>
    %c8_53 = arith.constant 8 : index
    %c0_54 = arith.constant 0 : index
    %c0_55 = arith.constant 0 : index
    %70 = vector.load %arg5[%c8_53, %c0_54, %c0_55] : memref<9x4x4xbf16, #tpu.memory_space<vmem>>, vector<1x4x4xbf16>
    %71 = vector.shape_cast %70 : vector<1x4x4xbf16> to vector<4x4xbf16>
    %cst_56 = arith.constant dense<0.000000e+00> : vector<160x4xf32>
    %72 = tpu.matmul %69, %71, %cst_56 {dimension_numbers = #tpu.dot_dimension_numbers<[1], [0], [0], [1], [0, 0, 1, 1], [], []>} : vector<160x4xbf16>, vector<4x4xbf16>, vector<160x4xf32> -> vector<160x4xf32>
    %73 = arith.addf %67, %72 : vector<160x4xf32>
    %c0_57 = arith.constant 0 : index
    %c0_58 = arith.constant 0 : index
    %74 = vector.load %arg6[%c0_57, %c0_58] : memref<1x4xf32, #tpu.memory_space<vmem>>, vector<1x4xf32>
    %75 = vector.broadcast %74 : vector<1x4xf32> to vector<160x4xf32>
    %76 = arith.mulf %73, %75 : vector<160x4xf32>
    %c0_59 = arith.constant 0 : index
    %c0_60 = arith.constant 0 : index
    %77 = vector.load %arg7[%c0_59, %c0_60] : memref<1x4xf32, #tpu.memory_space<vmem>>, vector<1x4xf32>
    %78 = vector.broadcast %77 : vector<1x4xf32> to vector<160x4xf32>
    %79 = arith.addf %76, %78 : vector<160x4xf32>
    %cst_61 = arith.constant 0.000000e+00 : f32
    %80 = vector.broadcast %cst_61 : f32 to vector<160x4xf32>
    %81 = arith.maximumf %79, %80 : vector<160x4xf32>
    %82 = vector.broadcast %0 : vector<160x1xf32> to vector<160x4xf32>
    %83 = arith.mulf %81, %82 : vector<160x4xf32>
    %cst_62 = arith.constant 0.000000e+00 : f32
    %84 = vector.broadcast %cst_62 : f32 to vector<24x4xf32>
    %c0_63 = arith.constant 0 : index
    %c0_64 = arith.constant 0 : index
    %85 = vector.load %arg14[%c0_63, %c0_64] : memref<208x4xf32, #tpu.memory_space<vmem>>, vector<24x4xf32>
    tpu.vector_store %arg14[%c0_63, %c0_64], %84 {strides = array<i32>} : memref<208x4xf32, #tpu.memory_space<vmem>>, vector<24x4xf32>,
    %c184_65 = arith.constant 184 : index
    %c0_66 = arith.constant 0 : index
    %86 = vector.load %arg14[%c184_65, %c0_66] : memref<208x4xf32, #tpu.memory_space<vmem>>, vector<24x4xf32>
    tpu.vector_store %arg14[%c184_65, %c0_66], %84 {strides = array<i32>} : memref<208x4xf32, #tpu.memory_space<vmem>>, vector<24x4xf32>,
    %c24_67 = arith.constant 24 : index
    %c0_68 = arith.constant 0 : index
    %87 = vector.load %arg14[%c24_67, %c0_68] : memref<208x4xf32, #tpu.memory_space<vmem>>, vector<160x4xf32>
    tpu.vector_store %arg14[%c24_67, %c0_68], %83 {strides = array<i32>} : memref<208x4xf32, #tpu.memory_space<vmem>>, vector<160x4xf32>,
    %cst_69 = arith.constant 0.000000e+00 : f32
    %88 = vector.broadcast %cst_69 : f32 to vector<160x8xf32>
    %c7_70 = arith.constant 7 : index
    %c0_71 = arith.constant 0 : index
    %89 = vector.load %arg14[%c7_70, %c0_71] : memref<208x4xf32, #tpu.memory_space<vmem>>, vector<160x4xf32>
    %90 = arith.truncf %89 : vector<160x4xf32> to vector<160x4xbf16>
    %c0_72 = arith.constant 0 : index
    %c0_73 = arith.constant 0 : index
    %c0_74 = arith.constant 0 : index
    %91 = vector.load %arg8[%c0_72, %c0_73, %c0_74] : memref<9x4x8xbf16, #tpu.memory_space<vmem>>, vector<1x4x8xbf16>
    %92 = vector.shape_cast %91 : vector<1x4x8xbf16> to vector<4x8xbf16>
    %cst_75 = arith.constant dense<0.000000e+00> : vector<160x8xf32>
    %93 = tpu.matmul %90, %92, %cst_75 {dimension_numbers = #tpu.dot_dimension_numbers<[1], [0], [0], [1], [0, 0, 1, 1], [], []>} : vector<160x4xbf16>, vector<4x8xbf16>, vector<160x8xf32> -> vector<160x8xf32>
    %94 = arith.addf %88, %93 : vector<160x8xf32>
    %c8_76 = arith.constant 8 : index
    %c0_77 = arith.constant 0 : index
    %95 = vector.load %arg14[%c8_76, %c0_77] : memref<208x4xf32, #tpu.memory_space<vmem>>, vector<160x4xf32>
    %96 = arith.truncf %95 : vector<160x4xf32> to vector<160x4xbf16>
    %c1_78 = arith.constant 1 : index
    %c0_79 = arith.constant 0 : index
    %c0_80 = arith.constant 0 : index
    %97 = vector.load %arg8[%c1_78, %c0_79, %c0_80] : memref<9x4x8xbf16, #tpu.memory_space<vmem>>, vector<1x4x8xbf16>
    %98 = vector.shape_cast %97 : vector<1x4x8xbf16> to vector<4x8xbf16>
    %cst_81 = arith.constant dense<0.000000e+00> : vector<160x8xf32>
    %99 = tpu.matmul %96, %98, %cst_81 {dimension_numbers = #tpu.dot_dimension_numbers<[1], [0], [0], [1], [0, 0, 1, 1], [], []>} : vector<160x4xbf16>, vector<4x8xbf16>, vector<160x8xf32> -> vector<160x8xf32>
    %100 = arith.addf %94, %99 : vector<160x8xf32>
    %c9_82 = arith.constant 9 : index
    %c0_83 = arith.constant 0 : index
    %101 = vector.load %arg14[%c9_82, %c0_83] : memref<208x4xf32, #tpu.memory_space<vmem>>, vector<160x4xf32>
    %102 = arith.truncf %101 : vector<160x4xf32> to vector<160x4xbf16>
    %c2_84 = arith.constant 2 : index
    %c0_85 = arith.constant 0 : index
    %c0_86 = arith.constant 0 : index
    %103 = vector.load %arg8[%c2_84, %c0_85, %c0_86] : memref<9x4x8xbf16, #tpu.memory_space<vmem>>, vector<1x4x8xbf16>
    %104 = vector.shape_cast %103 : vector<1x4x8xbf16> to vector<4x8xbf16>
    %cst_87 = arith.constant dense<0.000000e+00> : vector<160x8xf32>
    %105 = tpu.matmul %102, %104, %cst_87 {dimension_numbers = #tpu.dot_dimension_numbers<[1], [0], [0], [1], [0, 0, 1, 1], [], []>} : vector<160x4xbf16>, vector<4x8xbf16>, vector<160x8xf32> -> vector<160x8xf32>
    %106 = arith.addf %100, %105 : vector<160x8xf32>
    %c23_88 = arith.constant 23 : index
    %c0_89 = arith.constant 0 : index
    %107 = vector.load %arg14[%c23_88, %c0_89] : memref<208x4xf32, #tpu.memory_space<vmem>>, vector<160x4xf32>
    %108 = arith.truncf %107 : vector<160x4xf32> to vector<160x4xbf16>
    %c3_90 = arith.constant 3 : index
    %c0_91 = arith.constant 0 : index
    %c0_92 = arith.constant 0 : index
    %109 = vector.load %arg8[%c3_90, %c0_91, %c0_92] : memref<9x4x8xbf16, #tpu.memory_space<vmem>>, vector<1x4x8xbf16>
    %110 = vector.shape_cast %109 : vector<1x4x8xbf16> to vector<4x8xbf16>
    %cst_93 = arith.constant dense<0.000000e+00> : vector<160x8xf32>
    %111 = tpu.matmul %108, %110, %cst_93 {dimension_numbers = #tpu.dot_dimension_numbers<[1], [0], [0], [1], [0, 0, 1, 1], [], []>} : vector<160x4xbf16>, vector<4x8xbf16>, vector<160x8xf32> -> vector<160x8xf32>
    %112 = arith.addf %106, %111 : vector<160x8xf32>
    %c24_94 = arith.constant 24 : index
    %c0_95 = arith.constant 0 : index
    %113 = vector.load %arg14[%c24_94, %c0_95] : memref<208x4xf32, #tpu.memory_space<vmem>>, vector<160x4xf32>
    %114 = arith.truncf %113 : vector<160x4xf32> to vector<160x4xbf16>
    %c4_96 = arith.constant 4 : index
    %c0_97 = arith.constant 0 : index
    %c0_98 = arith.constant 0 : index
    %115 = vector.load %arg8[%c4_96, %c0_97, %c0_98] : memref<9x4x8xbf16, #tpu.memory_space<vmem>>, vector<1x4x8xbf16>
    %116 = vector.shape_cast %115 : vector<1x4x8xbf16> to vector<4x8xbf16>
    %cst_99 = arith.constant dense<0.000000e+00> : vector<160x8xf32>
    %117 = tpu.matmul %114, %116, %cst_99 {dimension_numbers = #tpu.dot_dimension_numbers<[1], [0], [0], [1], [0, 0, 1, 1], [], []>} : vector<160x4xbf16>, vector<4x8xbf16>, vector<160x8xf32> -> vector<160x8xf32>
    %118 = arith.addf %112, %117 : vector<160x8xf32>
    %c25_100 = arith.constant 25 : index
    %c0_101 = arith.constant 0 : index
    %119 = vector.load %arg14[%c25_100, %c0_101] : memref<208x4xf32, #tpu.memory_space<vmem>>, vector<160x4xf32>
    %120 = arith.truncf %119 : vector<160x4xf32> to vector<160x4xbf16>
    %c5_102 = arith.constant 5 : index
    %c0_103 = arith.constant 0 : index
    %c0_104 = arith.constant 0 : index
    %121 = vector.load %arg8[%c5_102, %c0_103, %c0_104] : memref<9x4x8xbf16, #tpu.memory_space<vmem>>, vector<1x4x8xbf16>
    %122 = vector.shape_cast %121 : vector<1x4x8xbf16> to vector<4x8xbf16>
    %cst_105 = arith.constant dense<0.000000e+00> : vector<160x8xf32>
    %123 = tpu.matmul %120, %122, %cst_105 {dimension_numbers = #tpu.dot_dimension_numbers<[1], [0], [0], [1], [0, 0, 1, 1], [], []>} : vector<160x4xbf16>, vector<4x8xbf16>, vector<160x8xf32> -> vector<160x8xf32>
    %124 = arith.addf %118, %123 : vector<160x8xf32>
    %c39_106 = arith.constant 39 : index
    %c0_107 = arith.constant 0 : index
    %125 = vector.load %arg14[%c39_106, %c0_107] : memref<208x4xf32, #tpu.memory_space<vmem>>, vector<160x4xf32>
    %126 = arith.truncf %125 : vector<160x4xf32> to vector<160x4xbf16>
    %c6_108 = arith.constant 6 : index
    %c0_109 = arith.constant 0 : index
    %c0_110 = arith.constant 0 : index
    %127 = vector.load %arg8[%c6_108, %c0_109, %c0_110] : memref<9x4x8xbf16, #tpu.memory_space<vmem>>, vector<1x4x8xbf16>
    %128 = vector.shape_cast %127 : vector<1x4x8xbf16> to vector<4x8xbf16>
    %cst_111 = arith.constant dense<0.000000e+00> : vector<160x8xf32>
    %129 = tpu.matmul %126, %128, %cst_111 {dimension_numbers = #tpu.dot_dimension_numbers<[1], [0], [0], [1], [0, 0, 1, 1], [], []>} : vector<160x4xbf16>, vector<4x8xbf16>, vector<160x8xf32> -> vector<160x8xf32>
    %130 = arith.addf %124, %129 : vector<160x8xf32>
    %c40_112 = arith.constant 40 : index
    %c0_113 = arith.constant 0 : index
    %131 = vector.load %arg14[%c40_112, %c0_113] : memref<208x4xf32, #tpu.memory_space<vmem>>, vector<160x4xf32>
    %132 = arith.truncf %131 : vector<160x4xf32> to vector<160x4xbf16>
    %c7_114 = arith.constant 7 : index
    %c0_115 = arith.constant 0 : index
    %c0_116 = arith.constant 0 : index
    %133 = vector.load %arg8[%c7_114, %c0_115, %c0_116] : memref<9x4x8xbf16, #tpu.memory_space<vmem>>, vector<1x4x8xbf16>
    %134 = vector.shape_cast %133 : vector<1x4x8xbf16> to vector<4x8xbf16>
    %cst_117 = arith.constant dense<0.000000e+00> : vector<160x8xf32>
    %135 = tpu.matmul %132, %134, %cst_117 {dimension_numbers = #tpu.dot_dimension_numbers<[1], [0], [0], [1], [0, 0, 1, 1], [], []>} : vector<160x4xbf16>, vector<4x8xbf16>, vector<160x8xf32> -> vector<160x8xf32>
    %136 = arith.addf %130, %135 : vector<160x8xf32>
    %c41_118 = arith.constant 41 : index
    %c0_119 = arith.constant 0 : index
    %137 = vector.load %arg14[%c41_118, %c0_119] : memref<208x4xf32, #tpu.memory_space<vmem>>, vector<160x4xf32>
    %138 = arith.truncf %137 : vector<160x4xf32> to vector<160x4xbf16>
    %c8_120 = arith.constant 8 : index
    %c0_121 = arith.constant 0 : index
    %c0_122 = arith.constant 0 : index
    %139 = vector.load %arg8[%c8_120, %c0_121, %c0_122] : memref<9x4x8xbf16, #tpu.memory_space<vmem>>, vector<1x4x8xbf16>
    %140 = vector.shape_cast %139 : vector<1x4x8xbf16> to vector<4x8xbf16>
    %cst_123 = arith.constant dense<0.000000e+00> : vector<160x8xf32>
    %141 = tpu.matmul %138, %140, %cst_123 {dimension_numbers = #tpu.dot_dimension_numbers<[1], [0], [0], [1], [0, 0, 1, 1], [], []>} : vector<160x4xbf16>, vector<4x8xbf16>, vector<160x8xf32> -> vector<160x8xf32>
    %142 = arith.addf %136, %141 : vector<160x8xf32>
    %c0_124 = arith.constant 0 : index
    %c0_125 = arith.constant 0 : index
    %143 = vector.load %arg9[%c0_124, %c0_125] : memref<1x8xf32, #tpu.memory_space<vmem>>, vector<1x8xf32>
    %144 = vector.broadcast %143 : vector<1x8xf32> to vector<160x8xf32>
    %145 = arith.mulf %142, %144 : vector<160x8xf32>
    %c0_126 = arith.constant 0 : index
    %c0_127 = arith.constant 0 : index
    %146 = vector.load %arg10[%c0_126, %c0_127] : memref<1x8xf32, #tpu.memory_space<vmem>>, vector<1x8xf32>
    %147 = vector.broadcast %146 : vector<1x8xf32> to vector<160x8xf32>
    %148 = arith.addf %145, %147 : vector<160x8xf32>
    %cst_128 = arith.constant 0.000000e+00 : f32
    %149 = vector.broadcast %cst_128 : f32 to vector<160x8xf32>
    %150 = arith.maximumf %148, %149 : vector<160x8xf32>
    %c0_129 = arith.constant 0 : index
    %c0_130 = arith.constant 0 : index
    %151 = vector.load %arg15[%c0_129, %c0_130] : memref<168x8xf32, #tpu.memory_space<vmem>>, vector<160x8xf32>
    tpu.vector_store %arg15[%c0_129, %c0_130], %150 {strides = array<i32>} : memref<168x8xf32, #tpu.memory_space<vmem>>, vector<160x8xf32>,
    %cst_131 = arith.constant 0.000000e+00 : f32
    %152 = vector.broadcast %cst_131 : f32 to vector<8x8xf32>
    %c160 = arith.constant 160 : index
    %c0_132 = arith.constant 0 : index
    %153 = vector.load %arg15[%c160, %c0_132] : memref<168x8xf32, #tpu.memory_space<vmem>>, vector<8x8xf32>
    tpu.vector_store %arg15[%c160, %c0_132], %152 {strides = array<i32>} : memref<168x8xf32, #tpu.memory_space<vmem>>, vector<8x8xf32>,
    %c16 = arith.constant 16 : index
    %c0_133 = arith.constant 0 : index
    %154 = vector.load %arg15[%c16, %c0_133] : memref<168x8xf32, #tpu.memory_space<vmem>>, vector<128x8xf32>
    %c17 = arith.constant 17 : index
    %c0_134 = arith.constant 0 : index
    %155 = vector.load %arg15[%c17, %c0_134] : memref<168x8xf32, #tpu.memory_space<vmem>>, vector<128x8xf32>
    %156 = arith.addf %154, %155 : vector<128x8xf32>
    %c32 = arith.constant 32 : index
    %c0_135 = arith.constant 0 : index
    %157 = vector.load %arg15[%c32, %c0_135] : memref<168x8xf32, #tpu.memory_space<vmem>>, vector<128x8xf32>
    %158 = arith.addf %156, %157 : vector<128x8xf32>
    %c33 = arith.constant 33 : index
    %c0_136 = arith.constant 0 : index
    %159 = vector.load %arg15[%c33, %c0_136] : memref<168x8xf32, #tpu.memory_space<vmem>>, vector<128x8xf32>
    %160 = arith.addf %158, %159 : vector<128x8xf32>
    %cst_137 = arith.constant 2.500000e-01 : f32
    %161 = vector.broadcast %cst_137 : f32 to vector<128x8xf32>
    %162 = arith.mulf %160, %161 : vector<128x8xf32>
    %c0_138 = arith.constant 0 : index
    %c0_139 = arith.constant 0 : index
    %c0_140 = arith.constant 0 : index
    %163 = vector.load %arg12[%c0_138, %c0_139, %c0_140] : memref<1x128x8xf32, #tpu.memory_space<vmem>>, vector<1x128x8xf32>
    %164 = vector.shape_cast %163 : vector<1x128x8xf32> to vector<128x8xf32>
    %165 = vector.shape_cast %162 : vector<128x8xf32> to vector<1x128x8xf32>
    tpu.vector_store %arg12[%c0_138, %c0_139, %c0_140], %165 {strides = array<i32>} : memref<1x128x8xf32, #tpu.memory_space<vmem>>, vector<1x128x8xf32>,
    return
  }
  func.func @transform_0(%arg0: i32) -> (i32, i32, i32) {
    %c0_i32 = arith.constant 0 : i32
    %c0_i32_0 = arith.constant 0 : i32
    %c0_i32_1 = arith.constant 0 : i32
    return %arg0, %c0_i32, %c0_i32_0 : i32, i32, i32
  }
  func.func @transform_1(%arg0: i32) -> (i32, i32) {
    %c0_i32 = arith.constant 0 : i32
    %c0_i32_0 = arith.constant 0 : i32
    %c0_i32_1 = arith.constant 0 : i32
    return %c0_i32, %c0_i32_0 : i32, i32
  }
  func.func @transform_2(%arg0: i32) -> (i32, i32) {
    %c0_i32 = arith.constant 0 : i32
    %c0_i32_0 = arith.constant 0 : i32
    %c0_i32_1 = arith.constant 0 : i32
    return %c0_i32, %c0_i32_0 : i32, i32
  }
  func.func @transform_3(%arg0: i32) -> (i32, i32) {
    %c0_i32 = arith.constant 0 : i32
    %c0_i32_0 = arith.constant 0 : i32
    %c0_i32_1 = arith.constant 0 : i32
    return %c0_i32, %c0_i32_0 : i32, i32
  }
  func.func @transform_4(%arg0: i32) -> (i32, i32, i32) {
    %c0_i32 = arith.constant 0 : i32
    %c0_i32_0 = arith.constant 0 : i32
    %c0_i32_1 = arith.constant 0 : i32
    %c0_i32_2 = arith.constant 0 : i32
    return %c0_i32, %c0_i32_0, %c0_i32_1 : i32, i32, i32
  }
  func.func @transform_5(%arg0: i32) -> (i32, i32) {
    %c0_i32 = arith.constant 0 : i32
    %c0_i32_0 = arith.constant 0 : i32
    %c0_i32_1 = arith.constant 0 : i32
    return %c0_i32, %c0_i32_0 : i32, i32
  }
  func.func @transform_6(%arg0: i32) -> (i32, i32) {
    %c0_i32 = arith.constant 0 : i32
    %c0_i32_0 = arith.constant 0 : i32
    %c0_i32_1 = arith.constant 0 : i32
    return %c0_i32, %c0_i32_0 : i32, i32
  }
  func.func @transform_7(%arg0: i32) -> (i32, i32, i32) {
    %c0_i32 = arith.constant 0 : i32
    %c0_i32_0 = arith.constant 0 : i32
    %c0_i32_1 = arith.constant 0 : i32
    %c0_i32_2 = arith.constant 0 : i32
    return %c0_i32, %c0_i32_0, %c0_i32_1 : i32, i32, i32
  }
  func.func @transform_8(%arg0: i32) -> (i32, i32) {
    %c0_i32 = arith.constant 0 : i32
    %c0_i32_0 = arith.constant 0 : i32
    %c0_i32_1 = arith.constant 0 : i32
    return %c0_i32, %c0_i32_0 : i32, i32
  }
  func.func @transform_9(%arg0: i32) -> (i32, i32) {
    %c0_i32 = arith.constant 0 : i32
    %c0_i32_0 = arith.constant 0 : i32
    %c0_i32_1 = arith.constant 0 : i32
    return %c0_i32, %c0_i32_0 : i32, i32
  }
  func.func @transform_10(%arg0: i32) -> (i32, i32) {
    %c0_i32 = arith.constant 0 : i32
    %c0_i32_0 = arith.constant 0 : i32
    %c0_i32_1 = arith.constant 0 : i32
    return %c0_i32, %c0_i32_0 : i32, i32
  }
  func.func @transform_11(%arg0: i32) -> (i32, i32, i32) {
    %c0_i32 = arith.constant 0 : i32
    %c0_i32_0 = arith.constant 0 : i32
    %c0_i32_1 = arith.constant 0 : i32
    return %arg0, %c0_i32, %c0_i32_0 : i32, i32, i32
  }
}

</mosaic_0001>

<llo_original>
// kernel: tpu_custom_call.1
$region0: #{tpu_custom_call.1}
  #allocation0 [shape = 'u32[]', space=smem, size = 0x4, offset = 0x4, fixed_abs, tag = 'smem constant byte address 0x4 - core index']
  #allocation1 [shape = 'u32[144,128]{1,0:T(1,128)}', space=vmem, size = 0x12000, scoped, tag = 'internal scratch']
  #allocation2 [shape = 'f32[208,4]{1,0:T(8,128)}', space=vmem, size = 0x1a000, scoped, tag = 'scratch operand']
  #allocation3 [shape = 'f32[208,4]{1,0:T(8,128)}', space=vmem, size = 0x1a000, scoped, tag = 'scratch operand']
  #allocation4 [shape = 'f32[168,8]{1,0:T(8,128)}', space=vmem, size = 0x15000, scoped, tag = 'scratch operand']
  %s0 = inlined_call_operand.vmem [shape: bf16[2,160,32], index: 0, kind: input, shape index: {}]
  %s1 = inlined_call_operand.vmem [shape: bf16[32,4], index: 1, kind: input, shape index: {}]
  %s2 = inlined_call_operand.vmem [shape: f32[1,4], index: 2, kind: input, shape index: {}]
  %s3 = inlined_call_operand.vmem [shape: f32[1,4], index: 3, kind: input, shape index: {}]
  %s4 = inlined_call_operand.vmem [shape: bf16[9,4,4], index: 4, kind: input, shape index: {}]
  %s5 = inlined_call_operand.vmem [shape: f32[1,4], index: 5, kind: input, shape index: {}]
  %s6 = inlined_call_operand.vmem [shape: f32[1,4], index: 6, kind: input, shape index: {}]
  %s7 = inlined_call_operand.vmem [shape: bf16[9,4,8], index: 7, kind: input, shape index: {}]
  %s8 = inlined_call_operand.vmem [shape: f32[1,8], index: 8, kind: input, shape index: {}]
  %s9 = inlined_call_operand.vmem [shape: f32[1,8], index: 9, kind: input, shape index: {}]
  %s10 = inlined_call_operand.vmem [shape: f32[160,1], index: 10, kind: input, shape index: {}]
  %s11 = inlined_call_operand.vmem [shape: f32[2,128,8], index: 11, kind: output, shape index: {}]
  %s12 = sld [smem:[#allocation0]]
  $region77: #{tpu_custom_call.1} parent=0
    _
  %s14 = ssub.s32 1, %s12
  %s15 = scalar_select 0, %s14, %s12
  loop: start=0, step=1, limit=4
  $region2: #{tpu_custom_call.1} parent=0 // loop_pre_header
    _
  $region3: #{tpu_custom_call.1} parent=0 // loop_header
    %s17 = sphi 0, %s21
    %p18 = scmp.ge.s32.totalorder %s17, 4
    %s27 = sphi 0, %s29
    %s30 = sphi 0, %s27
    %s31 = sphi 0, %s30
    %s47 = sphi 0, %s31
    %s51 = sphi 0, %s51
    %s53 = sphi 0, %s51
    %s54 = sphi 0, %s53
    %s68 = sphi 0, %s54
    %s72 = sphi 0, %s72
    %s74 = sphi 0, %s72
    %s75 = sphi 0, %s74
    %s89 = sphi 0, %s75
    %s93 = sphi 0, %s93
    %s95 = sphi 0, %s93
    %s96 = sphi 0, %s95
    %s110 = sphi 0, %s96
    %s114 = sphi 0, %s114
    %s116 = sphi 0, %s114
    %s117 = sphi 0, %s116
    %s131 = sphi 0, %s117
    %s135 = sphi 0, %s135
    %s137 = sphi 0, %s135
    %s138 = sphi 0, %s137
    %s152 = sphi 0, %s138
    %s156 = sphi 0, %s156
    %s158 = sphi 0, %s156
    %s159 = sphi 0, %s158
    %s173 = sphi 0, %s159
    %s177 = sphi 0, %s177
    %s179 = sphi 0, %s177
    %s180 = sphi 0, %s179
    %s194 = sphi 0, %s180
    %s198 = sphi 0, %s198
    %s200 = sphi 0, %s198
    %s201 = sphi 0, %s200
    %s215 = sphi 0, %s201
    %s219 = sphi 0, %s219
    %s221 = sphi 0, %s219
    %s222 = sphi 0, %s221
    %s236 = sphi 0, %s222
    %s240 = sphi 0, %s240
    %s242 = sphi 0, %s240
    %s243 = sphi 0, %s242
    %s257 = sphi 0, %s243
    %s263 = sphi 0, %s265
    %s266 = sphi 0, %s263
    %s267 = sphi 0, %s266
    %s283 = sphi 0, %s267
  $region4: #{tpu_custom_call.1} parent=0 // loop_header_branch
    %20 = sbr.rel (%p18) target = $region8
  $region5: #{tpu_custom_call.1} parent=0 // loop_body
    %s22 = ssub.s32 %s17, 1
    %s23 = ssub.s32 %s17, 2
    %s24 = sadd.s32 %s17, 1
    %s25 = ssub.s32 %s17, %s24
    %p26 = scmp.eq.s32.totalorder %s25, 0
    %s28 = sadd.s32 %s27, 1
    %s29 = scalar_select %p26, %s27, %s28
    %p32 = pneg %p26
    %p33 = scmp.eq.s32.totalorder %s17, 1
    %p34 = por %p32, %p33
    %p35 = scmp.ne.s32.totalorder %s27, %s30
    %p36 = scmp.eq.s32.totalorder %s17, 0
    %p37 = por %p35, %p36
    %p38 = scmp.ne.s32.totalorder %s27, %s30
    %p39 = scmp.eq.s32.totalorder %s22, 1
    %p40 = por %p38, %p39
    %p41 = scmp.ne.s32.totalorder %s30, %s31
    %p42 = scmp.eq.s32.totalorder %s22, 0
    %p43 = por %p41, %p42
    %p44 = scmp.ne.s32.totalorder %s30, %s31
    %p45 = scmp.eq.s32.totalorder %s23, 1
    %p46 = por %p44, %p45
    %p48 = scmp.ne.s32.totalorder %s31, %s47
    %p49 = scmp.eq.s32.totalorder %s23, 0
    %p50 = por %p48, %p49
    %s52 = sadd.s32 %s51, 1
    %p55 = scmp.eq.s32.totalorder %s17, 1
    %p56 = scmp.ne.s32.totalorder %s51, %s53
    %p57 = scmp.eq.s32.totalorder %s17, 0
    %p58 = por %p56, %p57
    %p59 = scmp.ne.s32.totalorder %s51, %s53
    %p60 = scmp.eq.s32.totalorder %s22, 1
    %p61 = por %p59, %p60
    %p62 = scmp.ne.s32.totalorder %s53, %s54
    %p63 = scmp.eq.s32.totalorder %s22, 0
    %p64 = por %p62, %p63
    %p65 = scmp.ne.s32.totalorder %s53, %s54
    %p66 = scmp.eq.s32.totalorder %s23, 1
    %p67 = por %p65, %p66
    %p69 = scmp.ne.s32.totalorder %s54, %s68
    %p70 = scmp.eq.s32.totalorder %s23, 0
    %p71 = por %p69, %p70
    %s73 = sadd.s32 %s72, 1
    %p76 = scmp.eq.s32.totalorder %s17, 1
    %p77 = scmp.ne.s32.totalorder %s72, %s74
    %p78 = scmp.eq.s32.totalorder %s17, 0
    %p79 = por %p77, %p78
    %p80 = scmp.ne.s32.totalorder %s72, %s74
    %p81 = scmp.eq.s32.totalorder %s22, 1
    %p82 = por %p80, %p81
    %p83 = scmp.ne.s32.totalorder %s74, %s75
    %p84 = scmp.eq.s32.totalorder %s22, 0
    %p85 = por %p83, %p84
    %p86 = scmp.ne.s32.totalorder %s74, %s75
    %p87 = scmp.eq.s32.totalorder %s23, 1
    %p88 = por %p86, %p87
    %p90 = scmp.ne.s32.totalorder %s75, %s89
    %p91 = scmp.eq.s32.totalorder %s23, 0
    %p92 = por %p90, %p91
    %s94 = sadd.s32 %s93, 1
    %p97 = scmp.eq.s32.totalorder %s17, 1
    %p98 = scmp.ne.s32.totalorder %s93, %s95
    %p99 = scmp.eq.s32.totalorder %s17, 0
    %p100 = por %p98, %p99
    %p101 = scmp.ne.s32.totalorder %s93, %s95
    %p102 = scmp.eq.s32.totalorder %s22, 1
    %p103 = por %p101, %p102
    %p104 = scmp.ne.s32.totalorder %s95, %s96
    %p105 = scmp.eq.s32.totalorder %s22, 0
    %p106 = por %p104, %p105
    %p107 = scmp.ne.s32.totalorder %s95, %s96
    %p108 = scmp.eq.s32.totalorder %s23, 1
    %p109 = por %p107, %p108
    %p111 = scmp.ne.s32.totalorder %s96, %s110
    %p112 = scmp.eq.s32.totalorder %s23, 0
    %p113 = por %p111, %p112
    %s115 = sadd.s32 %s114, 1
    %p118 = scmp.eq.s32.totalorder %s17, 1
    %p119 = scmp.ne.s32.totalorder %s114, %s116
    %p120 = scmp.eq.s32.totalorder %s17, 0
    %p121 = por %p119, %p120
    %p122 = scmp.ne.s32.totalorder %s114, %s116
    %p123 = scmp.eq.s32.totalorder %s22, 1
    %p124 = por %p122, %p123
    %p125 = scmp.ne.s32.totalorder %s116, %s117
    %p126 = scmp.eq.s32.totalorder %s22, 0
    %p127 = por %p125, %p126
    %p128 = scmp.ne.s32.totalorder %s116, %s117
    %p129 = scmp.eq.s32.totalorder %s23, 1
    %p130 = por %p128, %p129
    %p132 = scmp.ne.s32.totalorder %s117, %s131
    %p133 = scmp.eq.s32.totalorder %s23, 0
    %p134 = por %p132, %p133
    %s136 = sadd.s32 %s135, 1
    %p139 = scmp.eq.s32.totalorder %s17, 1
    %p140 = scmp.ne.s32.totalorder %s135, %s137
    %p141 = scmp.eq.s32.totalorder %s17, 0
    %p142 = por %p140, %p141
    %p143 = scmp.ne.s32.totalorder %s135, %s137
    %p144 = scmp.eq.s32.totalorder %s22, 1
    %p145 = por %p143, %p144
    %p146 = scmp.ne.s32.totalorder %s137, %s138
    %p147 = scmp.eq.s32.totalorder %s22, 0
    %p148 = por %p146, %p147
    %p149 = scmp.ne.s32.totalorder %s137, %s138
    %p150 = scmp.eq.s32.totalorder %s23, 1
    %p151 = por %p149, %p150
    %p153 = scmp.ne.s32.totalorder %s138, %s152
    %p154 = scmp.eq.s32.totalorder %s23, 0
    %p155 = por %p153, %p154
    %s157 = sadd.s32 %s156, 1
    %p160 = scmp.eq.s32.totalorder %s17, 1
    %p161 = scmp.ne.s32.totalorder %s156, %s158
    %p162 = scmp.eq.s32.totalorder %s17, 0
    %p163 = por %p161, %p162
    %p164 = scmp.ne.s32.totalorder %s156, %s158
    %p165 = scmp.eq.s32.totalorder %s22, 1
    %p166 = por %p164, %p165
    %p167 = scmp.ne.s32.totalorder %s158, %s159
    %p168 = scmp.eq.s32.totalorder %s22, 0
    %p169 = por %p167, %p168
    %p170 = scmp.ne.s32.totalorder %s158, %s159
    %p171 = scmp.eq.s32.totalorder %s23, 1
    %p172 = por %p170, %p171
    %p174 = scmp.ne.s32.totalorder %s159, %s173
    %p175 = scmp.eq.s32.totalorder %s23, 0
    %p176 = por %p174, %p175
    %s178 = sadd.s32 %s177, 1
    %p181 = scmp.eq.s32.totalorder %s17, 1
    %p182 = scmp.ne.s32.totalorder %s177, %s179
    %p183 = scmp.eq.s32.totalorder %s17, 0
    %p184 = por %p182, %p183
    %p185 = scmp.ne.s32.totalorder %s177, %s179
    %p186 = scmp.eq.s32.totalorder %s22, 1
    %p187 = por %p185, %p186
    %p188 = scmp.ne.s32.totalorder %s179, %s180
    %p189 = scmp.eq.s32.totalorder %s22, 0
    %p190 = por %p188, %p189
    %p191 = scmp.ne.s32.totalorder %s179, %s180
    %p192 = scmp.eq.s32.totalorder %s23, 1
    %p193 = por %p191, %p192
    %p195 = scmp.ne.s32.totalorder %s180, %s194
    %p196 = scmp.eq.s32.totalorder %s23, 0
    %p197 = por %p195, %p196
    %s199 = sadd.s32 %s198, 1
    %p202 = scmp.eq.s32.totalorder %s17, 1
    %p203 = scmp.ne.s32.totalorder %s198, %s200
    %p204 = scmp.eq.s32.totalorder %s17, 0
    %p205 = por %p203, %p204
    %p206 = scmp.ne.s32.totalorder %s198, %s200
    %p207 = scmp.eq.s32.totalorder %s22, 1
    %p208 = por %p206, %p207
    %p209 = scmp.ne.s32.totalorder %s200, %s201
    %p210 = scmp.eq.s32.totalorder %s22, 0
    %p211 = por %p209, %p210
    %p212 = scmp.ne.s32.totalorder %s200, %s201
    %p213 = scmp.eq.s32.totalorder %s23, 1
    %p214 = por %p212, %p213
    %p216 = scmp.ne.s32.totalorder %s201, %s215
    %p217 = scmp.eq.s32.totalorder %s23, 0
    %p218 = por %p216, %p217
    %s220 = sadd.s32 %s219, 1
    %p223 = scmp.eq.s32.totalorder %s17, 1
    %p224 = scmp.ne.s32.totalorder %s219, %s221
    %p225 = scmp.eq.s32.totalorder %s17, 0
    %p226 = por %p224, %p225
    %p227 = scmp.ne.s32.totalorder %s219, %s221
    %p228 = scmp.eq.s32.totalorder %s22, 1
    %p229 = por %p227, %p228
    %p230 = scmp.ne.s32.totalorder %s221, %s222
    %p231 = scmp.eq.s32.totalorder %s22, 0
    %p232 = por %p230, %p231
    %p233 = scmp.ne.s32.totalorder %s221, %s222
    %p234 = scmp.eq.s32.totalorder %s23, 1
    %p235 = por %p233, %p234
    %p237 = scmp.ne.s32.totalorder %s222, %s236
    %p238 = scmp.eq.s32.totalorder %s23, 0
    %p239 = por %p237, %p238
    %s241 = sadd.s32 %s240, 1
    %p244 = scmp.eq.s32.totalorder %s17, 1
    %p245 = scmp.ne.s32.totalorder %s240, %s242
    %p246 = scmp.eq.s32.totalorder %s17, 0
    %p247 = por %p245, %p246
    %p248 = scmp.ne.s32.totalorder %s240, %s242
    %p249 = scmp.eq.s32.totalorder %s22, 1
    %p250 = por %p248, %p249
    %p251 = scmp.ne.s32.totalorder %s242, %s243
    %p252 = scmp.eq.s32.totalorder %s22, 0
    %p253 = por %p251, %p252
    %p254 = scmp.ne.s32.totalorder %s242, %s243
    %p255 = scmp.eq.s32.totalorder %s23, 1
    %p256 = por %p254, %p255
    %p258 = scmp.ne.s32.totalorder %s243, %s257
    %p259 = scmp.eq.s32.totalorder %s23, 0
    %p260 = por %p258, %p259
    %s261 = ssub.s32 %s17, %s24
    %p262 = scmp.eq.s32.totalorder %s261, 0
    %s264 = sadd.s32 %s263, 1
    %s265 = scalar_select %p262, %s263, %s264
    %p268 = pneg %p262
    %p269 = scmp.eq.s32.totalorder %s17, 1
    %p270 = por %p268, %p269
    %p271 = scmp.ne.s32.totalorder %s263, %s266
    %p272 = scmp.eq.s32.totalorder %s17, 0
    %p273 = por %p271, %p272
    %p274 = scmp.ne.s32.totalorder %s263, %s266
    %p275 = scmp.eq.s32.totalorder %s22, 1
    %p276 = por %p274, %p275
    %p277 = scmp.ne.s32.totalorder %s266, %s267
    %p278 = scmp.eq.s32.totalorder %s22, 0
    %p279 = por %p277, %p278
    %p280 = scmp.ne.s32.totalorder %s266, %s267
    %p281 = scmp.eq.s32.totalorder %s23, 1
    %p282 = por %p280, %p281
    %p284 = scmp.ne.s32.totalorder %s267, %s283
    %p285 = scmp.eq.s32.totalorder %s23, 0
    %p286 = por %p284, %p285
    %p287 = scmp.le.s32.totalorder 1, %s17
    %p288 = scmp.lt.s32.totalorder %s17, 3
    %p289 = pnand %p287, %p288
    %p290 = pneg %p289
    // Predicated region
    $region9: #{tpu_custom_call.1} parent=5 // pred_check
      _
    $region10: #{tpu_custom_call.1} parent=5 // pred_check_branch
      %292 = sbr.rel (%p289) target = $region12
    $region11: #{tpu_custom_call.1} parent=5 // pred_region
      %s293 = ssub.s32 %s17, 1
      // Predicated region
      $region13: #{tpu_custom_call.1} parent=11 // pred_check
        %p294 = pneg %p64
      $region14: #{tpu_custom_call.1} parent=11 // pred_check_branch
        %296 = sbr.rel (%p294) target = $region16
      $region15: #{tpu_custom_call.1} parent=11 // pred_region
        _
      $region16: #{tpu_custom_call.1} parent=11 // pred_fallthru
        _
      // Predicated region
      $region17: #{tpu_custom_call.1} parent=11 // pred_check
        %p297 = pneg %p85
      $region18: #{tpu_custom_call.1} parent=11 // pred_check_branch
        %299 = sbr.rel (%p297) target = $region20
      $region19: #{tpu_custom_call.1} parent=11 // pred_region
        _
      $region20: #{tpu_custom_call.1} parent=11 // pred_fallthru
        _
      // Predicated region
      $region21: #{tpu_custom_call.1} parent=11 // pred_check
        %p300 = pneg %p106
      $region22: #{tpu_custom_call.1} parent=11 // pred_check_branch
        %302 = sbr.rel (%p300) target = $region24
      $region23: #{tpu_custom_call.1} parent=11 // pred_region
        _
      $region24: #{tpu_custom_call.1} parent=11 // pred_fallthru
        _
      // Predicated region
      $region25: #{tpu_custom_call.1} parent=11 // pred_check
        %p303 = pneg %p127
      $region26: #{tpu_custom_call.1} parent=11 // pred_check_branch
        %305 = sbr.rel (%p303) target = $region28
      $region27: #{tpu_custom_call.1} parent=11 // pred_region
        _
      $region28: #{tpu_custom_call.1} parent=11 // pred_fallthru
        _
      // Predicated region
      $region29: #{tpu_custom_call.1} parent=11 // pred_check
        %p306 = pneg %p148
      $region30: #{tpu_custom_call.1} parent=11 // pred_check_branch
        %308 = sbr.rel (%p306) target = $region32
      $region31: #{tpu_custom_call.1} parent=11 // pred_region
        _
      $region32: #{tpu_custom_call.1} parent=11 // pred_fallthru
        _
      // Predicated region
      $region33: #{tpu_custom_call.1} parent=11 // pred_check
        %p309 = pneg %p169
      $region34: #{tpu_custom_call.1} parent=11 // pred_check_branch
        %311 = sbr.rel (%p309) target = $region36
      $region35: #{tpu_custom_call.1} parent=11 // pred_region
        _
      $region36: #{tpu_custom_call.1} parent=11 // pred_fallthru
        _
      // Predicated region
      $region37: #{tpu_custom_call.1} parent=11 // pred_check
        %p312 = pneg %p190
      $region38: #{tpu_custom_call.1} parent=11 // pred_check_branch
        %314 = sbr.rel (%p312) target = $region40
      $region39: #{tpu_custom_call.1} parent=11 // pred_region
        _
      $region40: #{tpu_custom_call.1} parent=11 // pred_fallthru
        _
      // Predicated region
      $region41: #{tpu_custom_call.1} parent=11 // pred_check
        %p315 = pneg %p211
      $region42: #{tpu_custom_call.1} parent=11 // pred_check_branch
        %317 = sbr.rel (%p315) target = $region44
      $region43: #{tpu_custom_call.1} parent=11 // pred_region
        _
      $region44: #{tpu_custom_call.1} parent=11 // pred_fallthru
        _
      // Predicated region
      $region45: #{tpu_custom_call.1} parent=11 // pred_check
        %p318 = pneg %p232
      $region46: #{tpu_custom_call.1} parent=11 // pred_check_branch
        %320 = sbr.rel (%p318) target = $region48
      $region47: #{tpu_custom_call.1} parent=11 // pred_region
        _
      $region48: #{tpu_custom_call.1} parent=11 // pred_fallthru
        _
      // Predicated region
      $region49: #{tpu_custom_call.1} parent=11 // pred_check
        %p321 = pneg %p253
      $region50: #{tpu_custom_call.1} parent=11 // pred_check_branch
        %323 = sbr.rel (%p321) target = $region52
      $region51: #{tpu_custom_call.1} parent=11 // pred_region
        _
      $region52: #{tpu_custom_call.1} parent=11 // pred_fallthru
        _
    $region12: #{tpu_custom_call.1} parent=5 // pred_fallthru
      _
    %p324 = scmp.lt.s32.totalorder %s17, 2
    // Predicated region
    $region53: #{tpu_custom_call.1} parent=5 // pred_check
      %p325 = pneg %p324
    $region54: #{tpu_custom_call.1} parent=5 // pred_check_branch
      %327 = sbr.rel (%p325) target = $region56
    $region55: #{tpu_custom_call.1} parent=5 // pred_region
      // Predicated region
      $region57: #{tpu_custom_call.1} parent=55 // pred_check
        %p328 = pneg %p37
      $region58: #{tpu_custom_call.1} parent=55 // pred_check_branch
        %330 = sbr.rel (%p328) target = $region60
      $region59: #{tpu_custom_call.1} parent=55 // pred_region
        %p331 = scmp.lt.s32.totalorder %s17, 1
        %s332 = scalar_select %p331, %s17, 1
        %s333 = smul.addr %s332, 20
        %s334 = smul.addr %s333, 4
        %s335 = scalar_lea.vmem %s0, %s334
      $region60: #{tpu_custom_call.1} parent=55 // pred_fallthru
        _
    $region56: #{tpu_custom_call.1} parent=5 // pred_fallthru
      _
    %p336 = scmp.le.s32.totalorder 1, %s17
    %p337 = scmp.lt.s32.totalorder %s17, 3
    %p338 = pnand %p336, %p337
    %p339 = pneg %p338
    // Predicated region
    $region61: #{tpu_custom_call.1} parent=5 // pred_check
      _
    $region62: #{tpu_custom_call.1} parent=5 // pred_check_branch
      %341 = sbr.rel (%p338) target = $region64
    $region63: #{tpu_custom_call.1} parent=5 // pred_region
      %s342 = ssub.s32 %s17, 1
      %p343 = scmp.lt.s32.totalorder %s22, 1
      %s344 = scalar_select %p343, %s22, 1
      %s345 = smul.addr %s344, 20
      %s346 = smul.addr %s345, 4
      %s347 = scalar_lea.vmem %s0, %s346
      %p348 = pneg %p43
      %p349 = pneg %p40
      %p350 = pneg %p64
      %p351 = pneg %p61
      %p352 = pneg %p85
      %p353 = pneg %p82
      %p354 = pneg %p106
      %p355 = pneg %p103
      %p356 = pneg %p127
      %p357 = pneg %p124
      %p358 = pneg %p148
      %p359 = pneg %p145
      %p360 = pneg %p169
      %p361 = pneg %p166
      %p362 = pneg %p190
      %p363 = pneg %p187
      %p364 = pneg %p211
      %p365 = pneg %p208
      %p366 = pneg %p232
      %p367 = pneg %p229
      %p368 = pneg %p253
      %p369 = pneg %p250
      %p370 = pneg %p279
      %p371 = pneg %p276
      %p372 = scmp.lt.s32.totalorder %s22, 1
      %s373 = scalar_select %p372, %s22, 1
      %s374 = smul.addr %s373, 16
      %s375 = smul.addr %s374, 8
      %s376 = scalar_lea.vmem %s11, %s375
      %p377 = scmp.lt.s32.totalorder %s22, 1
      %s378 = scalar_select %p377, %s22, 1
      %s379 = smul.addr %s378, 20
      %s380 = smul.addr %s379, 4
      %s381 = scalar_lea.vmem %s0, %s380
      %p382 = scmp.lt.s32.totalorder %s22, 1
      %s383 = scalar_select %p382, %s22, 1
      %s384 = smul.addr %s383, 16
      %s385 = smul.addr %s384, 8
      %s386 = scalar_lea.vmem %s11, %s385
      %v388 = vld [vmem:[%s10] sm:$0xff]
      %v389 = vld [vmem:[%s10 + $0x8] sm:$0xff]
      %v390 = vld [vmem:[%s10 + $0x10] sm:$0xff]
      %v391 = vld [vmem:[%s10 + $0x18] sm:$0xff]
      %v392 = vld [vmem:[%s10 + $0x20] sm:$0xff]
      %v393 = vld [vmem:[%s10 + $0x28] sm:$0xff]
      %v394 = vld [vmem:[%s10 + $0x30] sm:$0xff]
      %v395 = vld [vmem:[%s10 + $0x38] sm:$0xff]
      %v396 = vld [vmem:[%s10 + $0x40] sm:$0xff]
      %v397 = vld [vmem:[%s10 + $0x48] sm:$0xff]
      %v398 = vld [vmem:[%s10 + $0x50] sm:$0xff]
      %v399 = vld [vmem:[%s10 + $0x58] sm:$0xff]
      %v400 = vld [vmem:[%s10 + $0x60] sm:$0xff]
      %v401 = vld [vmem:[%s10 + $0x68] sm:$0xff]
      %v402 = vld [vmem:[%s10 + $0x70] sm:$0xff]
      %v403 = vld [vmem:[%s10 + $0x78] sm:$0xff]
      %v404 = vld [vmem:[%s10 + $0x80] sm:$0xff]
      %v405 = vld [vmem:[%s10 + $0x88] sm:$0xff]
      %v406 = vld [vmem:[%s10 + $0x90] sm:$0xff]
      %v407 = vld [vmem:[%s10 + $0x98] sm:$0xff]
      %v408 = vld [vmem:[%s381] sm:$0xf]
      %v409 = vld [vmem:[%s381 + $0x4] sm:$0xf]
      %v410 = vld [vmem:[%s381 + $0x8] sm:$0xf]
      %v411 = vld [vmem:[%s381 + $0xc] sm:$0xf]
      %v412 = vld [vmem:[%s381 + $0x10] sm:$0xf]
      %v413 = vld [vmem:[%s381 + $0x14] sm:$0xf]
      %v414 = vld [vmem:[%s381 + $0x18] sm:$0xf]
      %v415 = vld [vmem:[%s381 + $0x1c] sm:$0xf]
      %v416 = vld [vmem:[%s381 + $0x20] sm:$0xf]
      %v417 = vld [vmem:[%s381 + $0x24] sm:$0xf]
      %v418 = vld [vmem:[%s381 + $0x28] sm:$0xf]
      %v419 = vld [vmem:[%s381 + $0x2c] sm:$0xf]
      %v420 = vld [vmem:[%s381 + $0x30] sm:$0xf]
      %v421 = vld [vmem:[%s381 + $0x34] sm:$0xf]
      %v422 = vld [vmem:[%s381 + $0x38] sm:$0xf]
      %v423 = vld [vmem:[%s381 + $0x3c] sm:$0xf]
      %v424 = vld [vmem:[%s381 + $0x40] sm:$0xf]
      %v425 = vld [vmem:[%s381 + $0x44] sm:$0xf]
      %v426 = vld [vmem:[%s381 + $0x48] sm:$0xf]
      %v427 = vld [vmem:[%s381 + $0x4c] sm:$0xf]
      %v428 = vld [vmem:[%s1] sm:$0xf]
      %v429 = vld [vmem:[%s1 + $0x4] sm:$0xf]
      %v430 = vld [vmem:[%s1 + $0x8] sm:$0xf]
      %v431 = vld [vmem:[%s1 + $0xc] sm:$0xf]
      %v452 = vunpack.c.l.b16 %v408
      %v453 = vunpack.c.l.b16 %v409
      %v454 = vunpack.c.l.b16 %v410
      %v455 = vunpack.c.l.b16 %v411
      %v456 = vunpack.c.l.b16 %v412
      %v457 = vunpack.c.l.b16 %v413
      %v458 = vunpack.c.l.b16 %v414
      %v459 = vunpack.c.l.b16 %v415
      %v460 = vunpack.c.l.b16 %v416
      %v461 = vunpack.c.l.b16 %v417
      %v462 = vunpack.c.l.b16 %v418
      %v463 = vunpack.c.l.b16 %v419
      %v464 = vunpack.c.l.b16 %v420
      %v465 = vunpack.c.l.b16 %v421
      %v466 = vunpack.c.l.b16 %v422
      %v467 = vunpack.c.l.b16 %v423
      %v468 = vunpack.c.l.b16 %v424
      %v469 = vunpack.c.l.b16 %v425
      %v470 = vunpack.c.l.b16 %v426
      %v471 = vunpack.c.l.b16 %v427
      %v472 = vpack.c.b16 %v453, %v452
      %v473 = vpack.c.b16 %v455, %v454
      %v474 = vpack.c.b16 %v457, %v456
      %v475 = vpack.c.b16 %v459, %v458
      %v476 = vpack.c.b16 %v461, %v460
      %v477 = vpack.c.b16 %v463, %v462
      %v478 = vpack.c.b16 %v465, %v464
      %v479 = vpack.c.b16 %v467, %v466
      %v480 = vpack.c.b16 %v469, %v468
      %v481 = vpack.c.b16 %v471, %v470
      %v486 = vunpack.c.l.b16 %v428
      %v487 = vunpack.c.l.b16 %v429
      %v488 = vunpack.c.l.b16 %v430
      %v489 = vunpack.c.l.b16 %v431
      %v490 = vpack.c.b16 %v487, %v486
      %v491 = vpack.c.b16 %v489, %v488
      %vm494 = vcmask 261120
      %v496 = vsel %vm494, %v472, 0
      %v499 = vsel %vm494, %v473, 0
      %v502 = vsel %vm494, %v474, 0
      %v505 = vsel %vm494, %v475, 0
      %v508 = vsel %vm494, %v476, 0
      %v511 = vsel %vm494, %v477, 0
      %v514 = vsel %vm494, %v478, 0
      %v517 = vsel %vm494, %v479, 0
      %v520 = vsel %vm494, %v480, 0
      %v523 = vsel %vm494, %v481, 0
      %525 = vmatprep.subr.bf16.mxu0 0
      %526 = vmatpush1.bf16.msra.mxu0 0
      %527 = vmatprep.subr.bf16.mxu0 0
      %528 = vmatpush1.bf16.msra.mxu0 0
      %529 = vmatprep.subr.bf16.mxu0 0
      %530 = vmatpush1.bf16.msra.mxu0 0
      %531 = vmatprep.subr.bf16.mxu0 0
      %532 = vmatpush1.bf16.msra.mxu0 0
      %533 = vmatprep.subr.bf16.mxu0 0
      %534 = vmatpush1.bf16.msra.mxu0 0
      %535 = vmatprep.subr.bf16.mxu0 0
      %536 = vmatpush1.bf16.msra.mxu0 0
      %537 = vmatprep.subr.bf16.mxu0 0
      %538 = vmatpush1.bf16.msra.mxu0 %v491
      %539 = vmatprep.subr.bf16.mxu0 0
      %540 = vmatpush1.bf16.msra.mxu0 %v490
      %541 = vmatprep.subr.bf16.mxu0 0
      %542 = vmatpush2.bf16.msra.mxu0 0
      %543 = vmatprep.subr.bf16.mxu0 0
      %544 = vmatpush2.bf16.msra.mxu0 0
      %545 = vmatprep.subr.bf16.mxu0 0
      %546 = vmatpush2.bf16.msra.mxu0 0
      %547 = vmatprep.subr.bf16.mxu0 0
      %548 = vmatpush2.bf16.msra.mxu0 0
      %549 = vmatprep.subr.bf16.mxu0 0
      %550 = vmatpush2.bf16.msra.mxu0 0
      %551 = vmatprep.subr.bf16.mxu0 0
      %552 = vmatpush2.bf16.msra.mxu0 0
      %553 = vmatprep.subr.bf16.mxu0 0
      %554 = vmatpush2.bf16.msra.mxu0 0
      %555 = vmatprep.subr.bf16.mxu0 0
      %556 = vmatpush2.bf16.msra.mxu0 0
      %557 = vmatprep.mubr.bf16.mxu0 0
      %558 = vmatmul.mubr.bf16.gmra.mxu0 %v496
      %v559 = vpop.f32.mrf.mxu0
      %v560 = vadd.f32 0.0, %v559
      %v561 = vpop.f32.mrf.mxu0
      %v562 = vpop.f32.mrf.mxu0
      %v563 = vadd.f32 0.0, %v562
      %v564 = vpop.f32.mrf.mxu0
      %565 = vmatprep.mubr.bf16.mxu0 0
      %566 = vmatmul.mubr.bf16.gmra.mxu0 %v499
      %v567 = vpop.f32.mrf.mxu0
      %v568 = vadd.f32 0.0, %v567
      %v569 = vpop.f32.mrf.mxu0
      %v570 = vpop.f32.mrf.mxu0
      %v571 = vadd.f32 0.0, %v570
      %v572 = vpop.f32.mrf.mxu0
      %573 = vmatprep.mubr.bf16.mxu0 0
      %574 = vmatmul.mubr.bf16.gmra.mxu0 %v502
      %v575 = vpop.f32.mrf.mxu0
      %v576 = vadd.f32 0.0, %v575
      %v577 = vpop.f32.mrf.mxu0
      %v578 = vpop.f32.mrf.mxu0
      %v579 = vadd.f32 0.0, %v578
      %v580 = vpop.f32.mrf.mxu0
      %581 = vmatprep.mubr.bf16.mxu0 0
      %582 = vmatmul.mubr.bf16.gmra.mxu0 %v505
      %v583 = vpop.f32.mrf.mxu0
      %v584 = vadd.f32 0.0, %v583
      %v585 = vpop.f32.mrf.mxu0
      %v586 = vpop.f32.mrf.mxu0
      %v587 = vadd.f32 0.0, %v586
      %v588 = vpop.f32.mrf.mxu0
      %589 = vmatprep.mubr.bf16.mxu0 0
      %590 = vmatmul.mubr.bf16.gmra.mxu0 %v508
      %v591 = vpop.f32.mrf.mxu0
      %v592 = vadd.f32 0.0, %v591
      %v593 = vpop.f32.mrf.mxu0
      %v594 = vpop.f32.mrf.mxu0
      %v595 = vadd.f32 0.0, %v594
      %v596 = vpop.f32.mrf.mxu0
      %597 = vmatprep.mubr.bf16.mxu0 0
      %598 = vmatmul.mubr.bf16.gmra.mxu0 %v511
      %v599 = vpop.f32.mrf.mxu0
      %v600 = vadd.f32 0.0, %v599
      %v601 = vpop.f32.mrf.mxu0
      %v602 = vpop.f32.mrf.mxu0
      %v603 = vadd.f32 0.0, %v602
      %v604 = vpop.f32.mrf.mxu0
      %605 = vmatprep.mubr.bf16.mxu0 0
      %606 = vmatmul.mubr.bf16.gmra.mxu0 %v514
      %v607 = vpop.f32.mrf.mxu0
      %v608 = vadd.f32 0.0, %v607
      %v609 = vpop.f32.mrf.mxu0
      %v610 = vpop.f32.mrf.mxu0
      %v611 = vadd.f32 0.0, %v610
      %v612 = vpop.f32.mrf.mxu0
      %613 = vmatprep.mubr.bf16.mxu0 0
      %614 = vmatmul.mubr.bf16.gmra.mxu0 %v517
      %v615 = vpop.f32.mrf.mxu0
      %v616 = vadd.f32 0.0, %v615
      %v617 = vpop.f32.mrf.mxu0
      %v618 = vpop.f32.mrf.mxu0
      %v619 = vadd.f32 0.0, %v618
      %v620 = vpop.f32.mrf.mxu0
      %621 = vmatprep.mubr.bf16.mxu0 0
      %622 = vmatmul.mubr.bf16.gmra.mxu0 %v520
      %v623 = vpop.f32.mrf.mxu0
      %v624 = vadd.f32 0.0, %v623
      %v625 = vpop.f32.mrf.mxu0
      %v626 = vpop.f32.mrf.mxu0
      %v627 = vadd.f32 0.0, %v626
      %v628 = vpop.f32.mrf.mxu0
      %629 = vmatprep.mubr.bf16.mxu0 0
      %630 = vmatmul.mubr.bf16.gmra.mxu0 %v523
      %v631 = vpop.f32.mrf.mxu0
      %v632 = vadd.f32 0.0, %v631
      %v633 = vpop.f32.mrf.mxu0
      %v634 = vpop.f32.mrf.mxu0
      %v635 = vadd.f32 0.0, %v634
      %v636 = vpop.f32.mrf.mxu0
      %637 = vdwg.mxu0
      %v638 = vld [vmem:[%s2] sm:$0x1]
      %v640 = vlaneseq
      %v641 = vshrl.u32 %v640, 7
      %v642 = vsub.s32 0, %v641
      %v643 = vrot.slane %v638, %v642
      %v645 = vmul.f32 %v560, %v643
      %v646 = vmul.f32 %v563, %v643
      %v647 = vmul.f32 %v568, %v643
      %v648 = vmul.f32 %v571, %v643
      %v649 = vmul.f32 %v576, %v643
      %v650 = vmul.f32 %v579, %v643
      %v651 = vmul.f32 %v584, %v643
      %v652 = vmul.f32 %v587, %v643
      %v653 = vmul.f32 %v592, %v643
      %v654 = vmul.f32 %v595, %v643
      %v655 = vmul.f32 %v600, %v643
      %v656 = vmul.f32 %v603, %v643
      %v657 = vmul.f32 %v608, %v643
      %v658 = vmul.f32 %v611, %v643
      %v659 = vmul.f32 %v616, %v643
      %v660 = vmul.f32 %v619, %v643
      %v661 = vmul.f32 %v624, %v643
      %v662 = vmul.f32 %v627, %v643
      %v663 = vmul.f32 %v632, %v643
      %v664 = vmul.f32 %v635, %v643
      %v665 = vld [vmem:[%s3] sm:$0x1]
      %v667 = vlaneseq
      %v668 = vshrl.u32 %v667, 7
      %v669 = vsub.s32 0, %v668
      %v670 = vrot.slane %v665, %v669
      %v672 = vadd.f32 %v645, %v670
      %v673 = vadd.f32 %v646, %v670
      %v674 = vadd.f32 %v647, %v670
      %v675 = vadd.f32 %v648, %v670
      %v676 = vadd.f32 %v649, %v670
      %v677 = vadd.f32 %v650, %v670
      %v678 = vadd.f32 %v651, %v670
      %v679 = vadd.f32 %v652, %v670
      %v680 = vadd.f32 %v653, %v670
      %v681 = vadd.f32 %v654, %v670
      %v682 = vadd.f32 %v655, %v670
      %v683 = vadd.f32 %v656, %v670
      %v684 = vadd.f32 %v657, %v670
      %v685 = vadd.f32 %v658, %v670
      %v686 = vadd.f32 %v659, %v670
      %v687 = vadd.f32 %v660, %v670
      %v688 = vadd.f32 %v661, %v670
      %v689 = vadd.f32 %v662, %v670
      %v690 = vadd.f32 %v663, %v670
      %v691 = vadd.f32 %v664, %v670
      %v692 = vmax.f32 %v672, 0.0
      %v693 = vmax.f32 %v673, 0.0
      %v694 = vmax.f32 %v674, 0.0
      %v695 = vmax.f32 %v675, 0.0
      %v696 = vmax.f32 %v676, 0.0
      %v697 = vmax.f32 %v677, 0.0
      %v698 = vmax.f32 %v678, 0.0
      %v699 = vmax.f32 %v679, 0.0
      %v700 = vmax.f32 %v680, 0.0
      %v701 = vmax.f32 %v681, 0.0
      %v702 = vmax.f32 %v682, 0.0
      %v703 = vmax.f32 %v683, 0.0
      %v704 = vmax.f32 %v684, 0.0
      %v705 = vmax.f32 %v685, 0.0
      %v706 = vmax.f32 %v686, 0.0
      %v707 = vmax.f32 %v687, 0.0
      %v708 = vmax.f32 %v688, 0.0
      %v709 = vmax.f32 %v689, 0.0
      %v710 = vmax.f32 %v690, 0.0
      %v711 = vmax.f32 %v691, 0.0
      %713 = vset.pattern.permute.xlu0 0
      %714 = vperm.xlu0 %713, %v388
      %v715 = vpop.permute.xlu0 %714
      %718 = vset.pattern.permute.xlu0 0
      %719 = vperm.xlu0 %718, %v389
      %v720 = vpop.permute.xlu0 %719
      %723 = vset.pattern.permute.xlu0 0
      %724 = vperm.xlu0 %723, %v390
      %v725 = vpop.permute.xlu0 %724
      %728 = vset.pattern.permute.xlu0 0
      %729 = vperm.xlu0 %728, %v391
      %v730 = vpop.permute.xlu0 %729
      %733 = vset.pattern.permute.xlu0 0
      %734 = vperm.xlu0 %733, %v392
      %v735 = vpop.permute.xlu0 %734
      %738 = vset.pattern.permute.xlu0 0
      %739 = vperm.xlu0 %738, %v393
      %v740 = vpop.permute.xlu0 %739
      %743 = vset.pattern.permute.xlu0 0
      %744 = vperm.xlu0 %743, %v394
      %v745 = vpop.permute.xlu0 %744
      %748 = vset.pattern.permute.xlu0 0
      %749 = vperm.xlu0 %748, %v395
      %v750 = vpop.permute.xlu0 %749
      %753 = vset.pattern.permute.xlu0 0
      %754 = vperm.xlu0 %753, %v396
      %v755 = vpop.permute.xlu0 %754
      %758 = vset.pattern.permute.xlu0 0
      %759 = vperm.xlu0 %758, %v397
      %v760 = vpop.permute.xlu0 %759
      %763 = vset.pattern.permute.xlu0 0
      %764 = vperm.xlu0 %763, %v398
      %v765 = vpop.permute.xlu0 %764
      %768 = vset.pattern.permute.xlu0 0
      %769 = vperm.xlu0 %768, %v399
      %v770 = vpop.permute.xlu0 %769
      %773 = vset.pattern.permute.xlu0 0
      %774 = vperm.xlu0 %773, %v400
      %v775 = vpop.permute.xlu0 %774
      %778 = vset.pattern.permute.xlu0 0
      %779 = vperm.xlu0 %778, %v401
      %v780 = vpop.permute.xlu0 %779
      %783 = vset.pattern.permute.xlu0 0
      %784 = vperm.xlu0 %783, %v402
      %v785 = vpop.permute.xlu0 %784
      %788 = vset.pattern.permute.xlu0 0
      %789 = vperm.xlu0 %788, %v403
      %v790 = vpop.permute.xlu0 %789
      %793 = vset.pattern.permute.xlu0 0
      %794 = vperm.xlu0 %793, %v404
      %v795 = vpop.permute.xlu0 %794
      %798 = vset.pattern.permute.xlu0 0
      %799 = vperm.xlu0 %798, %v405
      %v800 = vpop.permute.xlu0 %799
      %803 = vset.pattern.permute.xlu0 0
      %804 = vperm.xlu0 %803, %v406
      %v805 = vpop.permute.xlu0 %804
      %808 = vset.pattern.permute.xlu0 0
      %809 = vperm.xlu0 %808, %v407
      %v810 = vpop.permute.xlu0 %809
      %v812 = vmul.f32 %v692, %v715
      %v813 = vmul.f32 %v693, %v720
      %v814 = vmul.f32 %v694, %v725
      %v815 = vmul.f32 %v695, %v730
      %v816 = vmul.f32 %v696, %v735
      %v817 = vmul.f32 %v697, %v740
      %v818 = vmul.f32 %v698, %v745
      %v819 = vmul.f32 %v699, %v750
      %v820 = vmul.f32 %v700, %v755
      %v821 = vmul.f32 %v701, %v760
      %v822 = vmul.f32 %v702, %v765
      %v823 = vmul.f32 %v703, %v770
      %v824 = vmul.f32 %v704, %v775
      %v825 = vmul.f32 %v705, %v780
      %v826 = vmul.f32 %v706, %v785
      %v827 = vmul.f32 %v707, %v790
      %v828 = vmul.f32 %v708, %v795
      %v829 = vmul.f32 %v709, %v800
      %v830 = vmul.f32 %v710, %v805
      %v831 = vmul.f32 %v711, %v810
      %vm832 = vcmask 31744
      %833 = vst.msk [vmem:[#allocation2] sm:$0xff] %vm832, 0.0
      %834 = vst.msk [vmem:[#allocation2 + $0x8] sm:$0xff] %vm832, 0.0
      %835 = vst.msk [vmem:[#allocation2 + $0x10] sm:$0xff] %vm832, 0.0
      %836 = vst.msk [vmem:[#allocation2 + $0xb8] sm:$0xff] %vm832, 0.0
      %837 = vst.msk [vmem:[#allocation2 + $0xc0] sm:$0xff] %vm832, 0.0
      %838 = vst.msk [vmem:[#allocation2 + $0xc8] sm:$0xff] %vm832, 0.0
      %839 = vst.msk [vmem:[#allocation2 + $0x18] sm:$0xff] %vm832, %v812
      %840 = vst.msk [vmem:[#allocation2 + $0x20] sm:$0xff] %vm832, %v813
      %841 = vst.msk [vmem:[#allocation2 + $0x28] sm:$0xff] %vm832, %v814
      %842 = vst.msk [vmem:[#allocation2 + $0x30] sm:$0xff] %vm832, %v815
      %843 = vst.msk [vmem:[#allocation2 + $0x38] sm:$0xff] %vm832, %v816
      %844 = vst.msk [vmem:[#allocation2 + $0x40] sm:$0xff] %vm832, %v817
      %845 = vst.msk [vmem:[#allocation2 + $0x48] sm:$0xff] %vm832, %v818
      %846 = vst.msk [vmem:[#allocation2 + $0x50] sm:$0xff] %vm832, %v819
      %847 = vst.msk [vmem:[#allocation2 + $0x58] sm:$0xff] %vm832, %v820
      %848 = vst.msk [vmem:[#allocation2 + $0x60] sm:$0xff] %vm832, %v821
      %849 = vst.msk [vmem:[#allocation2 + $0x68] sm:$0xff] %vm832, %v822
      %850 = vst.msk [vmem:[#allocation2 + $0x70] sm:$0xff] %vm832, %v823
      %851 = vst.msk [vmem:[#allocation2 + $0x78] sm:$0xff] %vm832, %v824
      %852 = vst.msk [vmem:[#allocation2 + $0x80] sm:$0xff] %vm832, %v825
      %853 = vst.msk [vmem:[#allocation2 + $0x88] sm:$0xff] %vm832, %v826
      %854 = vst.msk [vmem:[#allocation2 + $0x90] sm:$0xff] %vm832, %v827
      %855 = vst.msk [vmem:[#allocation2 + $0x98] sm:$0xff] %vm832, %v828
      %856 = vst.msk [vmem:[#allocation2 + $0xa0] sm:$0xff] %vm832, %v829
      %857 = vst.msk [vmem:[#allocation2 + $0xa8] sm:$0xff] %vm832, %v830
      %858 = vst.msk [vmem:[#allocation2 + $0xb0] sm:$0xff] %vm832, %v831
      %v859 = vld [vmem:[#allocation2 + $0x7] sm:$0xff]
      %v860 = vld [vmem:[#allocation2 + $0xf] sm:$0xff]
      %v861 = vld [vmem:[#allocation2 + $0x17] sm:$0xff]
      %v862 = vld [vmem:[#allocation2 + $0x1f] sm:$0xff]
      %v863 = vld [vmem:[#allocation2 + $0x27] sm:$0xff]
      %v864 = vld [vmem:[#allocation2 + $0x2f] sm:$0xff]
      %v865 = vld [vmem:[#allocation2 + $0x37] sm:$0xff]
      %v866 = vld [vmem:[#allocation2 + $0x3f] sm:$0xff]
      %v867 = vld [vmem:[#allocation2 + $0x47] sm:$0xff]
      %v868 = vld [vmem:[#allocation2 + $0x4f] sm:$0xff]
      %v869 = vld [vmem:[#allocation2 + $0x57] sm:$0xff]
      %v870 = vld [vmem:[#allocation2 + $0x5f] sm:$0xff]
      %v871 = vld [vmem:[#allocation2 + $0x67] sm:$0xff]
      %v872 = vld [vmem:[#allocation2 + $0x6f] sm:$0xff]
      %v873 = vld [vmem:[#allocation2 + $0x77] sm:$0xff]
      %v874 = vld [vmem:[#allocation2 + $0x7f] sm:$0xff]
      %v875 = vld [vmem:[#allocation2 + $0x87] sm:$0xff]
      %v876 = vld [vmem:[#allocation2 + $0x8f] sm:$0xff]
      %v877 = vld [vmem:[#allocation2 + $0x97] sm:$0xff]
      %v878 = vld [vmem:[#allocation2 + $0x9f] sm:$0xff]
      %v879 = vpack.c.bf16 %v860, %v859
      %v880 = vpack.c.bf16 %v862, %v861
      %v881 = vpack.c.bf16 %v864, %v863
      %v882 = vpack.c.bf16 %v866, %v865
      %v883 = vpack.c.bf16 %v868, %v867
      %v884 = vpack.c.bf16 %v870, %v869
      %v885 = vpack.c.bf16 %v872, %v871
      %v886 = vpack.c.bf16 %v874, %v873
      %v887 = vpack.c.bf16 %v876, %v875
      %v888 = vpack.c.bf16 %v878, %v877
      %v889 = vld [vmem:[%s4] sm:$0x3]
      %v890 = vld [vmem:[#allocation2 + $0x8] sm:$0xff]
      %v891 = vld [vmem:[#allocation2 + $0x10] sm:$0xff]
      %v892 = vld [vmem:[#allocation2 + $0x18] sm:$0xff]
      %v893 = vld [vmem:[#allocation2 + $0x20] sm:$0xff]
      %v894 = vld [vmem:[#allocation2 + $0x28] sm:$0xff]
      %v895 = vld [vmem:[#allocation2 + $0x30] sm:$0xff]
      %v896 = vld [vmem:[#allocation2 + $0x38] sm:$0xff]
      %v897 = vld [vmem:[#allocation2 + $0x40] sm:$0xff]
      %v898 = vld [vmem:[#allocation2 + $0x48] sm:$0xff]
      %v899 = vld [vmem:[#allocation2 + $0x50] sm:$0xff]
      %v900 = vld [vmem:[#allocation2 + $0x58] sm:$0xff]
      %v901 = vld [vmem:[#allocation2 + $0x60] sm:$0xff]
      %v902 = vld [vmem:[#allocation2 + $0x68] sm:$0xff]
      %v903 = vld [vmem:[#allocation2 + $0x70] sm:$0xff]
      %v904 = vld [vmem:[#allocation2 + $0x78] sm:$0xff]
      %v905 = vld [vmem:[#allocation2 + $0x80] sm:$0xff]
      %v906 = vld [vmem:[#allocation2 + $0x88] sm:$0xff]
      %v907 = vld [vmem:[#allocation2 + $0x90] sm:$0xff]
      %v908 = vld [vmem:[#allocation2 + $0x98] sm:$0xff]
      %v909 = vld [vmem:[#allocation2 + $0xa0] sm:$0xff]
      %v910 = vpack.c.bf16 %v891, %v890
      %v911 = vpack.c.bf16 %v893, %v892
      %v912 = vpack.c.bf16 %v895, %v894
      %v913 = vpack.c.bf16 %v897, %v896
      %v914 = vpack.c.bf16 %v899, %v898
      %v915 = vpack.c.bf16 %v901, %v900
      %v916 = vpack.c.bf16 %v903, %v902
      %v917 = vpack.c.bf16 %v905, %v904
      %v918 = vpack.c.bf16 %v907, %v906
      %v919 = vpack.c.bf16 %v909, %v908
      %s920 = scalar_lea.vmem %s4, 2
      %v921 = vld [vmem:[%s920] sm:$0x3]
      %v923 = vsel %vm832, %v910, 0
      %v926 = vsel %vm832, %v911, 0
      %v929 = vsel %vm832, %v912, 0
      %v932 = vsel %vm832, %v913, 0
      %v935 = vsel %vm832, %v914, 0
      %v938 = vsel %vm832, %v915, 0
      %v941 = vsel %vm832, %v916, 0
      %v944 = vsel %vm832, %v917, 0
      %v947 = vsel %vm832, %v918, 0
      %v950 = vsel %vm832, %v919, 0
      %vm952 = vcmask 1041408
      %v954 = vsel %vm952, %v921, 0
      %956 = vmatprep.subr.bf16.mxu0 0
      %957 = vmatpush1.bf16.msra.mxu0 0
      %958 = vmatprep.subr.bf16.mxu0 0
      %959 = vmatpush1.bf16.msra.mxu0 0
      %960 = vmatprep.subr.bf16.mxu0 0
      %961 = vmatpush1.bf16.msra.mxu0 0
      %962 = vmatprep.subr.bf16.mxu0 0
      %963 = vmatpush1.bf16.msra.mxu0 0
      %964 = vmatprep.subr.bf16.mxu0 0
      %965 = vmatpush1.bf16.msra.mxu0 0
      %966 = vmatprep.subr.bf16.mxu0 0
      %967 = vmatpush1.bf16.msra.mxu0 0
      %968 = vmatprep.subr.bf16.mxu0 0
      %969 = vmatpush1.bf16.msra.mxu0 0
      %970 = vmatprep.subr.bf16.mxu0 0
      %971 = vmatpush1.bf16.msra.mxu0 %v954
      %972 = vmatprep.subr.bf16.mxu0 0
      %973 = vmatpush2.bf16.msra.mxu0 0
      %974 = vmatprep.subr.bf16.mxu0 0
      %975 = vmatpush2.bf16.msra.mxu0 0
      %976 = vmatprep.subr.bf16.mxu0 0
      %977 = vmatpush2.bf16.msra.mxu0 0
      %978 = vmatprep.subr.bf16.mxu0 0
      %979 = vmatpush2.bf16.msra.mxu0 0
      %980 = vmatprep.subr.bf16.mxu0 0
      %981 = vmatpush2.bf16.msra.mxu0 0
      %982 = vmatprep.subr.bf16.mxu0 0
      %983 = vmatpush2.bf16.msra.mxu0 0
      %984 = vmatprep.subr.bf16.mxu0 0
      %985 = vmatpush2.bf16.msra.mxu0 0
      %986 = vmatprep.subr.bf16.mxu0 0
      %987 = vmatpush2.bf16.msra.mxu0 0
      %988 = vmatprep.mubr.bf16.mxu0 0
      %989 = vmatmul.mubr.bf16.gmra.mxu0 %v923
      %v990 = vpop.f32.mrf.mxu0
      %v991 = vadd.f32 0.0, %v990
      %v992 = vpop.f32.mrf.mxu0
      %v993 = vpop.f32.mrf.mxu0
      %v994 = vadd.f32 0.0, %v993
      %v995 = vpop.f32.mrf.mxu0
      %996 = vmatprep.mubr.bf16.mxu0 0
      %997 = vmatmul.mubr.bf16.gmra.mxu0 %v926
      %v998 = vpop.f32.mrf.mxu0
      %v999 = vadd.f32 0.0, %v998
      %v1000 = vpop.f32.mrf.mxu0
      %v1001 = vpop.f32.mrf.mxu0
      %v1002 = vadd.f32 0.0, %v1001
      %v1003 = vpop.f32.mrf.mxu0
      %1004 = vmatprep.mubr.bf16.mxu0 0
      %1005 = vmatmul.mubr.bf16.gmra.mxu0 %v929
      %v1006 = vpop.f32.mrf.mxu0
      %v1007 = vadd.f32 0.0, %v1006
      %v1008 = vpop.f32.mrf.mxu0
      %v1009 = vpop.f32.mrf.mxu0
      %v1010 = vadd.f32 0.0, %v1009
      %v1011 = vpop.f32.mrf.mxu0
      %1012 = vmatprep.mubr.bf16.mxu0 0
      %1013 = vmatmul.mubr.bf16.gmra.mxu0 %v932
      %v1014 = vpop.f32.mrf.mxu0
      %v1015 = vadd.f32 0.0, %v1014
      %v1016 = vpop.f32.mrf.mxu0
      %v1017 = vpop.f32.mrf.mxu0
      %v1018 = vadd.f32 0.0, %v1017
      %v1019 = vpop.f32.mrf.mxu0
      %1020 = vmatprep.mubr.bf16.mxu0 0
      %1021 = vmatmul.mubr.bf16.gmra.mxu0 %v935
      %v1022 = vpop.f32.mrf.mxu0
      %v1023 = vadd.f32 0.0, %v1022
      %v1024 = vpop.f32.mrf.mxu0
      %v1025 = vpop.f32.mrf.mxu0
      %v1026 = vadd.f32 0.0, %v1025
      %v1027 = vpop.f32.mrf.mxu0
      %1028 = vmatprep.mubr.bf16.mxu0 0
      %1029 = vmatmul.mubr.bf16.gmra.mxu0 %v938
      %v1030 = vpop.f32.mrf.mxu0
      %v1031 = vadd.f32 0.0, %v1030
      %v1032 = vpop.f32.mrf.mxu0
      %v1033 = vpop.f32.mrf.mxu0
      %v1034 = vadd.f32 0.0, %v1033
      %v1035 = vpop.f32.mrf.mxu0
      %1036 = vmatprep.mubr.bf16.mxu0 0
      %1037 = vmatmul.mubr.bf16.gmra.mxu0 %v941
      %v1038 = vpop.f32.mrf.mxu0
      %v1039 = vadd.f32 0.0, %v1038
      %v1040 = vpop.f32.mrf.mxu0
      %v1041 = vpop.f32.mrf.mxu0
      %v1042 = vadd.f32 0.0, %v1041
      %v1043 = vpop.f32.mrf.mxu0
      %1044 = vmatprep.mubr.bf16.mxu0 0
      %1045 = vmatmul.mubr.bf16.gmra.mxu0 %v944
      %v1046 = vpop.f32.mrf.mxu0
      %v1047 = vadd.f32 0.0, %v1046
      %v1048 = vpop.f32.mrf.mxu0
      %v1049 = vpop.f32.mrf.mxu0
      %v1050 = vadd.f32 0.0, %v1049
      %v1051 = vpop.f32.mrf.mxu0
      %1052 = vmatprep.mubr.bf16.mxu0 0
      %1053 = vmatmul.mubr.bf16.gmra.mxu0 %v947
      %v1054 = vpop.f32.mrf.mxu0
      %v1055 = vadd.f32 0.0, %v1054
      %v1056 = vpop.f32.mrf.mxu0
      %v1057 = vpop.f32.mrf.mxu0
      %v1058 = vadd.f32 0.0, %v1057
      %v1059 = vpop.f32.mrf.mxu0
      %1060 = vmatprep.mubr.bf16.mxu0 0
      %1061 = vmatmul.mubr.bf16.gmra.mxu0 %v950
      %v1062 = vpop.f32.mrf.mxu0
      %v1063 = vadd.f32 0.0, %v1062
      %v1064 = vpop.f32.mrf.mxu0
      %v1065 = vpop.f32.mrf.mxu0
      %v1066 = vadd.f32 0.0, %v1065
      %v1067 = vpop.f32.mrf.mxu0
      %1068 = vdwg.mxu0
      %v1070 = vsel %vm832, %v879, 0
      %v1073 = vsel %vm832, %v880, 0
      %v1076 = vsel %vm832, %v881, 0
      %v1079 = vsel %vm832, %v882, 0
      %v1082 = vsel %vm832, %v883, 0
      %v1085 = vsel %vm832, %v884, 0
      %v1088 = vsel %vm832, %v885, 0
      %v1091 = vsel %vm832, %v886, 0
      %v1094 = vsel %vm832, %v887, 0
      %v1097 = vsel %vm832, %v888, 0
      %v1100 = vsel %vm952, %v889, 0
      %1102 = vmatprep.subr.bf16.mxu0 0
      %1103 = vmatpush1.bf16.msra.mxu0 0
      %1104 = vmatprep.subr.bf16.mxu0 0
      %1105 = vmatpush1.bf16.msra.mxu0 0
      %1106 = vmatprep.subr.bf16.mxu0 0
      %1107 = vmatpush1.bf16.msra.mxu0 0
      %1108 = vmatprep.subr.bf16.mxu0 0
      %1109 = vmatpush1.bf16.msra.mxu0 0
      %1110 = vmatprep.subr.bf16.mxu0 0
      %1111 = vmatpush1.bf16.msra.mxu0 0
      %1112 = vmatprep.subr.bf16.mxu0 0
      %1113 = vmatpush1.bf16.msra.mxu0 0
      %1114 = vmatprep.subr.bf16.mxu0 0
      %1115 = vmatpush1.bf16.msra.mxu0 0
      %1116 = vmatprep.subr.bf16.mxu0 0
      %1117 = vmatpush1.bf16.msra.mxu0 %v1100
      %1118 = vmatprep.subr.bf16.mxu0 0
      %1119 = vmatpush2.bf16.msra.mxu0 0
      %1120 = vmatprep.subr.bf16.mxu0 0
      %1121 = vmatpush2.bf16.msra.mxu0 0
      %1122 = vmatprep.subr.bf16.mxu0 0
      %1123 = vmatpush2.bf16.msra.mxu0 0
      %1124 = vmatprep.subr.bf16.mxu0 0
      %1125 = vmatpush2.bf16.msra.mxu0 0
      %1126 = vmatprep.subr.bf16.mxu0 0
      %1127 = vmatpush2.bf16.msra.mxu0 0
      %1128 = vmatprep.subr.bf16.mxu0 0
      %1129 = vmatpush2.bf16.msra.mxu0 0
      %1130 = vmatprep.subr.bf16.mxu0 0
      %1131 = vmatpush2.bf16.msra.mxu0 0
      %1132 = vmatprep.subr.bf16.mxu0 0
      %1133 = vmatpush2.bf16.msra.mxu0 0
      %1134 = vmatprep.mubr.bf16.mxu0 0
      %1135 = vmatmul.mubr.bf16.gmra.mxu0 %v1070
      %v1136 = vpop.f32.mrf.mxu0
      %v1137 = vadd.f32 %v991, %v1136
      %v1138 = vpop.f32.mrf.mxu0
      %v1139 = vpop.f32.mrf.mxu0
      %v1140 = vadd.f32 %v994, %v1139
      %v1141 = vpop.f32.mrf.mxu0
      %1142 = vmatprep.mubr.bf16.mxu0 0
      %1143 = vmatmul.mubr.bf16.gmra.mxu0 %v1073
      %v1144 = vpop.f32.mrf.mxu0
      %v1145 = vadd.f32 %v999, %v1144
      %v1146 = vpop.f32.mrf.mxu0
      %v1147 = vpop.f32.mrf.mxu0
      %v1148 = vadd.f32 %v1002, %v1147
      %v1149 = vpop.f32.mrf.mxu0
      %1150 = vmatprep.mubr.bf16.mxu0 0
      %1151 = vmatmul.mubr.bf16.gmra.mxu0 %v1076
      %v1152 = vpop.f32.mrf.mxu0
      %v1153 = vadd.f32 %v1007, %v1152
      %v1154 = vpop.f32.mrf.mxu0
      %v1155 = vpop.f32.mrf.mxu0
      %v1156 = vadd.f32 %v1010, %v1155
      %v1157 = vpop.f32.mrf.mxu0
      %1158 = vmatprep.mubr.bf16.mxu0 0
      %1159 = vmatmul.mubr.bf16.gmra.mxu0 %v1079
      %v1160 = vpop.f32.mrf.mxu0
      %v1161 = vadd.f32 %v1015, %v1160
      %v1162 = vpop.f32.mrf.mxu0
      %v1163 = vpop.f32.mrf.mxu0
      %v1164 = vadd.f32 %v1018, %v1163
      %v1165 = vpop.f32.mrf.mxu0
      %1166 = vmatprep.mubr.bf16.mxu0 0
      %1167 = vmatmul.mubr.bf16.gmra.mxu0 %v1082
      %v1168 = vpop.f32.mrf.mxu0
      %v1169 = vadd.f32 %v1023, %v1168
      %v1170 = vpop.f32.mrf.mxu0
      %v1171 = vpop.f32.mrf.mxu0
      %v1172 = vadd.f32 %v1026, %v1171
      %v1173 = vpop.f32.mrf.mxu0
      %1174 = vmatprep.mubr.bf16.mxu0 0
      %1175 = vmatmul.mubr.bf16.gmra.mxu0 %v1085
      %v1176 = vpop.f32.mrf.mxu0
      %v1177 = vadd.f32 %v1031, %v1176
      %v1178 = vpop.f32.mrf.mxu0
      %v1179 = vpop.f32.mrf.mxu0
      %v1180 = vadd.f32 %v1034, %v1179
      %v1181 = vpop.f32.mrf.mxu0
      %1182 = vmatprep.mubr.bf16.mxu0 0
      %1183 = vmatmul.mubr.bf16.gmra.mxu0 %v1088
      %v1184 = vpop.f32.mrf.mxu0
      %v1185 = vadd.f32 %v1039, %v1184
      %v1186 = vpop.f32.mrf.mxu0
      %v1187 = vpop.f32.mrf.mxu0
      %v1188 = vadd.f32 %v1042, %v1187
      %v1189 = vpop.f32.mrf.mxu0
      %1190 = vmatprep.mubr.bf16.mxu0 0
      %1191 = vmatmul.mubr.bf16.gmra.mxu0 %v1091
      %v1192 = vpop.f32.mrf.mxu0
      %v1193 = vadd.f32 %v1047, %v1192
      %v1194 = vpop.f32.mrf.mxu0
      %v1195 = vpop.f32.mrf.mxu0
      %v1196 = vadd.f32 %v1050, %v1195
      %v1197 = vpop.f32.mrf.mxu0
      %1198 = vmatprep.mubr.bf16.mxu0 0
      %1199 = vmatmul.mubr.bf16.gmra.mxu0 %v1094
      %v1200 = vpop.f32.mrf.mxu0
      %v1201 = vadd.f32 %v1055, %v1200
      %v1202 = vpop.f32.mrf.mxu0
      %v1203 = vpop.f32.mrf.mxu0
      %v1204 = vadd.f32 %v1058, %v1203
      %v1205 = vpop.f32.mrf.mxu0
      %1206 = vmatprep.mubr.bf16.mxu0 0
      %1207 = vmatmul.mubr.bf16.gmra.mxu0 %v1097
      %v1208 = vpop.f32.mrf.mxu0
      %v1209 = vadd.f32 %v1063, %v1208
      %v1210 = vpop.f32.mrf.mxu0
      %v1211 = vpop.f32.mrf.mxu0
      %v1212 = vadd.f32 %v1066, %v1211
      %v1213 = vpop.f32.mrf.mxu0
      %1214 = vdwg.mxu0
      %v1215 = vld [vmem:[#allocation2 + $0x9] sm:$0xff]
      %v1216 = vld [vmem:[#allocation2 + $0x11] sm:$0xff]
      %v1217 = vld [vmem:[#allocation2 + $0x19] sm:$0xff]
      %v1218 = vld [vmem:[#allocation2 + $0x21] sm:$0xff]
      %v1219 = vld [vmem:[#allocation2 + $0x29] sm:$0xff]
      %v1220 = vld [vmem:[#allocation2 + $0x31] sm:$0xff]
      %v1221 = vld [vmem:[#allocation2 + $0x39] sm:$0xff]
      %v1222 = vld [vmem:[#allocation2 + $0x41] sm:$0xff]
      %v1223 = vld [vmem:[#allocation2 + $0x49] sm:$0xff]
      %v1224 = vld [vmem:[#allocation2 + $0x51] sm:$0xff]
      %v1225 = vld [vmem:[#allocation2 + $0x59] sm:$0xff]
      %v1226 = vld [vmem:[#allocation2 + $0x61] sm:$0xff]
      %v1227 = vld [vmem:[#allocation2 + $0x69] sm:$0xff]
      %v1228 = vld [vmem:[#allocation2 + $0x71] sm:$0xff]
      %v1229 = vld [vmem:[#allocation2 + $0x79] sm:$0xff]
      %v1230 = vld [vmem:[#allocation2 + $0x81] sm:$0xff]
      %v1231 = vld [vmem:[#allocation2 + $0x89] sm:$0xff]
      %v1232 = vld [vmem:[#allocation2 + $0x91] sm:$0xff]
      %v1233 = vld [vmem:[#allocation2 + $0x99] sm:$0xff]
      %v1234 = vld [vmem:[#allocation2 + $0xa1] sm:$0xff]
      %v1235 = vpack.c.bf16 %v1216, %v1215
      %v1236 = vpack.c.bf16 %v1218, %v1217
      %v1237 = vpack.c.bf16 %v1220, %v1219
      %v1238 = vpack.c.bf16 %v1222, %v1221
      %v1239 = vpack.c.bf16 %v1224, %v1223
      %v1240 = vpack.c.bf16 %v1226, %v1225
      %v1241 = vpack.c.bf16 %v1228, %v1227
      %v1242 = vpack.c.bf16 %v1230, %v1229
      %v1243 = vpack.c.bf16 %v1232, %v1231
      %v1244 = vpack.c.bf16 %v1234, %v1233
      %s1245 = scalar_lea.vmem %s4, 4
      %v1246 = vld [vmem:[%s1245] sm:$0x3]
      %v1248 = vsel %vm832, %v1235, 0
      %v1251 = vsel %vm832, %v1236, 0
      %v1254 = vsel %vm832, %v1237, 0
      %v1257 = vsel %vm832, %v1238, 0
      %v1260 = vsel %vm832, %v1239, 0
      %v1263 = vsel %vm832, %v1240, 0
      %v1266 = vsel %vm832, %v1241, 0
      %v1269 = vsel %vm832, %v1242, 0
      %v1272 = vsel %vm832, %v1243, 0
      %v1275 = vsel %vm832, %v1244, 0
      %v1278 = vsel %vm952, %v1246, 0
      %1280 = vmatprep.subr.bf16.mxu0 0
      %1281 = vmatpush1.bf16.msra.mxu0 0
      %1282 = vmatprep.subr.bf16.mxu0 0
      %1283 = vmatpush1.bf16.msra.mxu0 0
      %1284 = vmatprep.subr.bf16.mxu0 0
      %1285 = vmatpush1.bf16.msra.mxu0 0
      %1286 = vmatprep.subr.bf16.mxu0 0
      %1287 = vmatpush1.bf16.msra.mxu0 0
      %1288 = vmatprep.subr.bf16.mxu0 0
      %1289 = vmatpush1.bf16.msra.mxu0 0
      %1290 = vmatprep.subr.bf16.mxu0 0
      %1291 = vmatpush1.bf16.msra.mxu0 0
      %1292 = vmatprep.subr.bf16.mxu0 0
      %1293 = vmatpush1.bf16.msra.mxu0 0
      %1294 = vmatprep.subr.bf16.mxu0 0
      %1295 = vmatpush1.bf16.msra.mxu0 %v1278
      %1296 = vmatprep.subr.bf16.mxu0 0
      %1297 = vmatpush2.bf16.msra.mxu0 0
      %1298 = vmatprep.subr.bf16.mxu0 0
      %1299 = vmatpush2.bf16.msra.mxu0 0
      %1300 = vmatprep.subr.bf16.mxu0 0
      %1301 = vmatpush2.bf16.msra.mxu0 0
      %1302 = vmatprep.subr.bf16.mxu0 0
      %1303 = vmatpush2.bf16.msra.mxu0 0
      %1304 = vmatprep.subr.bf16.mxu0 0
      %1305 = vmatpush2.bf16.msra.mxu0 0
      %1306 = vmatprep.subr.bf16.mxu0 0
      %1307 = vmatpush2.bf16.msra.mxu0 0
      %1308 = vmatprep.subr.bf16.mxu0 0
      %1309 = vmatpush2.bf16.msra.mxu0 0
      %1310 = vmatprep.subr.bf16.mxu0 0
      %1311 = vmatpush2.bf16.msra.mxu0 0
      %1312 = vmatprep.mubr.bf16.mxu0 0
      %1313 = vmatmul.mubr.bf16.gmra.mxu0 %v1248
      %v1314 = vpop.f32.mrf.mxu0
      %v1315 = vadd.f32 0.0, %v1314
      %v1316 = vpop.f32.mrf.mxu0
      %v1317 = vpop.f32.mrf.mxu0
      %v1318 = vadd.f32 0.0, %v1317
      %v1319 = vpop.f32.mrf.mxu0
      %1320 = vmatprep.mubr.bf16.mxu0 0
      %1321 = vmatmul.mubr.bf16.gmra.mxu0 %v1251
      %v1322 = vpop.f32.mrf.mxu0
      %v1323 = vadd.f32 0.0, %v1322
      %v1324 = vpop.f32.mrf.mxu0
      %v1325 = vpop.f32.mrf.mxu0
      %v1326 = vadd.f32 0.0, %v1325
      %v1327 = vpop.f32.mrf.mxu0
      %1328 = vmatprep.mubr.bf16.mxu0 0
      %1329 = vmatmul.mubr.bf16.gmra.mxu0 %v1254
      %v1330 = vpop.f32.mrf.mxu0
      %v1331 = vadd.f32 0.0, %v1330
      %v1332 = vpop.f32.mrf.mxu0
      %v1333 = vpop.f32.mrf.mxu0
      %v1334 = vadd.f32 0.0, %v1333
      %v1335 = vpop.f32.mrf.mxu0
      %1336 = vmatprep.mubr.bf16.mxu0 0
      %1337 = vmatmul.mubr.bf16.gmra.mxu0 %v1257
      %v1338 = vpop.f32.mrf.mxu0
      %v1339 = vadd.f32 0.0, %v1338
      %v1340 = vpop.f32.mrf.mxu0
      %v1341 = vpop.f32.mrf.mxu0
      %v1342 = vadd.f32 0.0, %v1341
      %v1343 = vpop.f32.mrf.mxu0
      %1344 = vmatprep.mubr.bf16.mxu0 0
      %1345 = vmatmul.mubr.bf16.gmra.mxu0 %v1260
      %v1346 = vpop.f32.mrf.mxu0
      %v1347 = vadd.f32 0.0, %v1346
      %v1348 = vpop.f32.mrf.mxu0
      %v1349 = vpop.f32.mrf.mxu0
      %v1350 = vadd.f32 0.0, %v1349
      %v1351 = vpop.f32.mrf.mxu0
      %1352 = vmatprep.mubr.bf16.mxu0 0
      %1353 = vmatmul.mubr.bf16.gmra.mxu0 %v1263
      %v1354 = vpop.f32.mrf.mxu0
      %v1355 = vadd.f32 0.0, %v1354
      %v1356 = vpop.f32.mrf.mxu0
      %v1357 = vpop.f32.mrf.mxu0
      %v1358 = vadd.f32 0.0, %v1357
      %v1359 = vpop.f32.mrf.mxu0
      %1360 = vmatprep.mubr.bf16.mxu0 0
      %1361 = vmatmul.mubr.bf16.gmra.mxu0 %v1266
      %v1362 = vpop.f32.mrf.mxu0
      %v1363 = vadd.f32 0.0, %v1362
      %v1364 = vpop.f32.mrf.mxu0
      %v1365 = vpop.f32.mrf.mxu0
      %v1366 = vadd.f32 0.0, %v1365
      %v1367 = vpop.f32.mrf.mxu0
      %1368 = vmatprep.mubr.bf16.mxu0 0
      %1369 = vmatmul.mubr.bf16.gmra.mxu0 %v1269
      %v1370 = vpop.f32.mrf.mxu0
      %v1371 = vadd.f32 0.0, %v1370
      %v1372 = vpop.f32.mrf.mxu0
      %v1373 = vpop.f32.mrf.mxu0
      %v1374 = vadd.f32 0.0, %v1373
      %v1375 = vpop.f32.mrf.mxu0
      %1376 = vmatprep.mubr.bf16.mxu0 0
      %1377 = vmatmul.mubr.bf16.gmra.mxu0 %v1272
      %v1378 = vpop.f32.mrf.mxu0
      %v1379 = vadd.f32 0.0, %v1378
      %v1380 = vpop.f32.mrf.mxu0
      %v1381 = vpop.f32.mrf.mxu0
      %v1382 = vadd.f32 0.0, %v1381
      %v1383 = vpop.f32.mrf.mxu0
      %1384 = vmatprep.mubr.bf16.mxu0 0
      %1385 = vmatmul.mubr.bf16.gmra.mxu0 %v1275
      %v1386 = vpop.f32.mrf.mxu0
      %v1387 = vadd.f32 0.0, %v1386
      %v1388 = vpop.f32.mrf.mxu0
      %v1389 = vpop.f32.mrf.mxu0
      %v1390 = vadd.f32 0.0, %v1389
      %v1391 = vpop.f32.mrf.mxu0
      %1392 = vdwg.mxu0
      %v1393 = vadd.f32 %v1137, %v1315
      %v1394 = vadd.f32 %v1140, %v1318
      %v1395 = vadd.f32 %v1145, %v1323
      %v1396 = vadd.f32 %v1148, %v1326
      %v1397 = vadd.f32 %v1153, %v1331
      %v1398 = vadd.f32 %v1156, %v1334
      %v1399 = vadd.f32 %v1161, %v1339
      %v1400 = vadd.f32 %v1164, %v1342
      %v1401 = vadd.f32 %v1169, %v1347
      %v1402 = vadd.f32 %v1172, %v1350
      %v1403 = vadd.f32 %v1177, %v1355
      %v1404 = vadd.f32 %v1180, %v1358
      %v1405 = vadd.f32 %v1185, %v1363
      %v1406 = vadd.f32 %v1188, %v1366
      %v1407 = vadd.f32 %v1193, %v1371
      %v1408 = vadd.f32 %v1196, %v1374
      %v1409 = vadd.f32 %v1201, %v1379
      %v1410 = vadd.f32 %v1204, %v1382
      %v1411 = vadd.f32 %v1209, %v1387
      %v1412 = vadd.f32 %v1212, %v1390
      %v1413 = vld [vmem:[#allocation2 + $0x17] sm:$0xff]
      %v1414 = vld [vmem:[#allocation2 + $0x1f] sm:$0xff]
      %v1415 = vld [vmem:[#allocation2 + $0x27] sm:$0xff]
      %v1416 = vld [vmem:[#allocation2 + $0x2f] sm:$0xff]
      %v1417 = vld [vmem:[#allocation2 + $0x37] sm:$0xff]
      %v1418 = vld [vmem:[#allocation2 + $0x3f] sm:$0xff]
      %v1419 = vld [vmem:[#allocation2 + $0x47] sm:$0xff]
      %v1420 = vld [vmem:[#allocation2 + $0x4f] sm:$0xff]
      %v1421 = vld [vmem:[#allocation2 + $0x57] sm:$0xff]
      %v1422 = vld [vmem:[#allocation2 + $0x5f] sm:$0xff]
      %v1423 = vld [vmem:[#allocation2 + $0x67] sm:$0xff]
      %v1424 = vld [vmem:[#allocation2 + $0x6f] sm:$0xff]
      %v1425 = vld [vmem:[#allocation2 + $0x77] sm:$0xff]
      %v1426 = vld [vmem:[#allocation2 + $0x7f] sm:$0xff]
      %v1427 = vld [vmem:[#allocation2 + $0x87] sm:$0xff]
      %v1428 = vld [vmem:[#allocation2 + $0x8f] sm:$0xff]
      %v1429 = vld [vmem:[#allocation2 + $0x97] sm:$0xff]
      %v1430 = vld [vmem:[#allocation2 + $0x9f] sm:$0xff]
      %v1431 = vld [vmem:[#allocation2 + $0xa7] sm:$0xff]
      %v1432 = vld [vmem:[#allocation2 + $0xaf] sm:$0xff]
      %v1433 = vpack.c.bf16 %v1414, %v1413
      %v1434 = vpack.c.bf16 %v1416, %v1415
      %v1435 = vpack.c.bf16 %v1418, %v1417
      %v1436 = vpack.c.bf16 %v1420, %v1419
      %v1437 = vpack.c.bf16 %v1422, %v1421
      %v1438 = vpack.c.bf16 %v1424, %v1423
      %v1439 = vpack.c.bf16 %v1426, %v1425
      %v1440 = vpack.c.bf16 %v1428, %v1427
      %v1441 = vpack.c.bf16 %v1430, %v1429
      %v1442 = vpack.c.bf16 %v1432, %v1431
      %s1443 = scalar_lea.vmem %s4, 6
      %v1444 = vld [vmem:[%s1443] sm:$0x3]
      %v1446 = vsel %vm832, %v1433, 0
      %v1449 = vsel %vm832, %v1434, 0
      %v1452 = vsel %vm832, %v1435, 0
      %v1455 = vsel %vm832, %v1436, 0
      %v1458 = vsel %vm832, %v1437, 0
      %v1461 = vsel %vm832, %v1438, 0
      %v1464 = vsel %vm832, %v1439, 0
      %v1467 = vsel %vm832, %v1440, 0
      %v1470 = vsel %vm832, %v1441, 0
      %v1473 = vsel %vm832, %v1442, 0
      %v1476 = vsel %vm952, %v1444, 0
      %1478 = vmatprep.subr.bf16.mxu0 0
      %1479 = vmatpush1.bf16.msra.mxu0 0
      %1480 = vmatprep.subr.bf16.mxu0 0
      %1481 = vmatpush1.bf16.msra.mxu0 0
      %1482 = vmatprep.subr.bf16.mxu0 0
      %1483 = vmatpush1.bf16.msra.mxu0 0
      %1484 = vmatprep.subr.bf16.mxu0 0
      %1485 = vmatpush1.bf16.msra.mxu0 0
      %1486 = vmatprep.subr.bf16.mxu0 0
      %1487 = vmatpush1.bf16.msra.mxu0 0
      %1488 = vmatprep.subr.bf16.mxu0 0
      %1489 = vmatpush1.bf16.msra.mxu0 0
      %1490 = vmatprep.subr.bf16.mxu0 0
      %1491 = vmatpush1.bf16.msra.mxu0 0
      %1492 = vmatprep.subr.bf16.mxu0 0
      %1493 = vmatpush1.bf16.msra.mxu0 %v1476
      %1494 = vmatprep.subr.bf16.mxu0 0
      %1495 = vmatpush2.bf16.msra.mxu0 0
      %1496 = vmatprep.subr.bf16.mxu0 0
      %1497 = vmatpush2.bf16.msra.mxu0 0
      %1498 = vmatprep.subr.bf16.mxu0 0
      %1499 = vmatpush2.bf16.msra.mxu0 0
      %1500 = vmatprep.subr.bf16.mxu0 0
      %1501 = vmatpush2.bf16.msra.mxu0 0
      %1502 = vmatprep.subr.bf16.mxu0 0
      %1503 = vmatpush2.bf16.msra.mxu0 0
      %1504 = vmatprep.subr.bf16.mxu0 0
      %1505 = vmatpush2.bf16.msra.mxu0 0
      %1506 = vmatprep.subr.bf16.mxu0 0
      %1507 = vmatpush2.bf16.msra.mxu0 0
      %1508 = vmatprep.subr.bf16.mxu0 0
      %1509 = vmatpush2.bf16.msra.mxu0 0
      %1510 = vmatprep.mubr.bf16.mxu0 0
      %1511 = vmatmul.mubr.bf16.gmra.mxu0 %v1446
      %v1512 = vpop.f32.mrf.mxu0
      %v1513 = vadd.f32 0.0, %v1512
      %v1514 = vpop.f32.mrf.mxu0
      %v1515 = vpop.f32.mrf.mxu0
      %v1516 = vadd.f32 0.0, %v1515
      %v1517 = vpop.f32.mrf.mxu0
      %1518 = vmatprep.mubr.bf16.mxu0 0
      %1519 = vmatmul.mubr.bf16.gmra.mxu0 %v1449
      %v1520 = vpop.f32.mrf.mxu0
      %v1521 = vadd.f32 0.0, %v1520
      %v1522 = vpop.f32.mrf.mxu0
      %v1523 = vpop.f32.mrf.mxu0
      %v1524 = vadd.f32 0.0, %v1523
      %v1525 = vpop.f32.mrf.mxu0
      %1526 = vmatprep.mubr.bf16.mxu0 0
      %1527 = vmatmul.mubr.bf16.gmra.mxu0 %v1452
      %v1528 = vpop.f32.mrf.mxu0
      %v1529 = vadd.f32 0.0, %v1528
      %v1530 = vpop.f32.mrf.mxu0
      %v1531 = vpop.f32.mrf.mxu0
      %v1532 = vadd.f32 0.0, %v1531
      %v1533 = vpop.f32.mrf.mxu0
      %1534 = vmatprep.mubr.bf16.mxu0 0
      %1535 = vmatmul.mubr.bf16.gmra.mxu0 %v1455
      %v1536 = vpop.f32.mrf.mxu0
      %v1537 = vadd.f32 0.0, %v1536
      %v1538 = vpop.f32.mrf.mxu0
      %v1539 = vpop.f32.mrf.mxu0
      %v1540 = vadd.f32 0.0, %v1539
      %v1541 = vpop.f32.mrf.mxu0
      %1542 = vmatprep.mubr.bf16.mxu0 0
      %1543 = vmatmul.mubr.bf16.gmra.mxu0 %v1458
      %v1544 = vpop.f32.mrf.mxu0
      %v1545 = vadd.f32 0.0, %v1544
      %v1546 = vpop.f32.mrf.mxu0
      %v1547 = vpop.f32.mrf.mxu0
      %v1548 = vadd.f32 0.0, %v1547
      %v1549 = vpop.f32.mrf.mxu0
      %1550 = vmatprep.mubr.bf16.mxu0 0
      %1551 = vmatmul.mubr.bf16.gmra.mxu0 %v1461
      %v1552 = vpop.f32.mrf.mxu0
      %v1553 = vadd.f32 0.0, %v1552
      %v1554 = vpop.f32.mrf.mxu0
      %v1555 = vpop.f32.mrf.mxu0
      %v1556 = vadd.f32 0.0, %v1555
      %v1557 = vpop.f32.mrf.mxu0
      %1558 = vmatprep.mubr.bf16.mxu0 0
      %1559 = vmatmul.mubr.bf16.gmra.mxu0 %v1464
      %v1560 = vpop.f32.mrf.mxu0
      %v1561 = vadd.f32 0.0, %v1560
      %v1562 = vpop.f32.mrf.mxu0
      %v1563 = vpop.f32.mrf.mxu0
      %v1564 = vadd.f32 0.0, %v1563
      %v1565 = vpop.f32.mrf.mxu0
      %1566 = vmatprep.mubr.bf16.mxu0 0
      %1567 = vmatmul.mubr.bf16.gmra.mxu0 %v1467
      %v1568 = vpop.f32.mrf.mxu0
      %v1569 = vadd.f32 0.0, %v1568
      %v1570 = vpop.f32.mrf.mxu0
      %v1571 = vpop.f32.mrf.mxu0
      %v1572 = vadd.f32 0.0, %v1571
      %v1573 = vpop.f32.mrf.mxu0
      %1574 = vmatprep.mubr.bf16.mxu0 0
      %1575 = vmatmul.mubr.bf16.gmra.mxu0 %v1470
      %v1576 = vpop.f32.mrf.mxu0
      %v1577 = vadd.f32 0.0, %v1576
      %v1578 = vpop.f32.mrf.mxu0
      %v1579 = vpop.f32.mrf.mxu0
      %v1580 = vadd.f32 0.0, %v1579
      %v1581 = vpop.f32.mrf.mxu0
      %1582 = vmatprep.mubr.bf16.mxu0 0
      %1583 = vmatmul.mubr.bf16.gmra.mxu0 %v1473
      %v1584 = vpop.f32.mrf.mxu0
      %v1585 = vadd.f32 0.0, %v1584
      %v1586 = vpop.f32.mrf.mxu0
      %v1587 = vpop.f32.mrf.mxu0
      %v1588 = vadd.f32 0.0, %v1587
      %v1589 = vpop.f32.mrf.mxu0
      %1590 = vdwg.mxu0
      %v1591 = vadd.f32 %v1393, %v1513
      %v1592 = vadd.f32 %v1394, %v1516
      %v1593 = vadd.f32 %v1395, %v1521
      %v1594 = vadd.f32 %v1396, %v1524
      %v1595 = vadd.f32 %v1397, %v1529
      %v1596 = vadd.f32 %v1398, %v1532
      %v1597 = vadd.f32 %v1399, %v1537
      %v1598 = vadd.f32 %v1400, %v1540
      %v1599 = vadd.f32 %v1401, %v1545
      %v1600 = vadd.f32 %v1402, %v1548
      %v1601 = vadd.f32 %v1403, %v1553
      %v1602 = vadd.f32 %v1404, %v1556
      %v1603 = vadd.f32 %v1405, %v1561
      %v1604 = vadd.f32 %v1406, %v1564
      %v1605 = vadd.f32 %v1407, %v1569
      %v1606 = vadd.f32 %v1408, %v1572
      %v1607 = vadd.f32 %v1409, %v1577
      %v1608 = vadd.f32 %v1410, %v1580
      %v1609 = vadd.f32 %v1411, %v1585
      %v1610 = vadd.f32 %v1412, %v1588
      %v1611 = vld [vmem:[#allocation2 + $0x18] sm:$0xff]
      %v1612 = vld [vmem:[#allocation2 + $0x20] sm:$0xff]
      %v1613 = vld [vmem:[#allocation2 + $0x28] sm:$0xff]
      %v1614 = vld [vmem:[#allocation2 + $0x30] sm:$0xff]
      %v1615 = vld [vmem:[#allocation2 + $0x38] sm:$0xff]
      %v1616 = vld [vmem:[#allocation2 + $0x40] sm:$0xff]
      %v1617 = vld [vmem:[#allocation2 + $0x48] sm:$0xff]
      %v1618 = vld [vmem:[#allocation2 + $0x50] sm:$0xff]
      %v1619 = vld [vmem:[#allocation2 + $0x58] sm:$0xff]
      %v1620 = vld [vmem:[#allocation2 + $0x60] sm:$0xff]
      %v1621 = vld [vmem:[#allocation2 + $0x68] sm:$0xff]
      %v1622 = vld [vmem:[#allocation2 + $0x70] sm:$0xff]
      %v1623 = vld [vmem:[#allocation2 + $0x78] sm:$0xff]
      %v1624 = vld [vmem:[#allocation2 + $0x80] sm:$0xff]
      %v1625 = vld [vmem:[#allocation2 + $0x88] sm:$0xff]
      %v1626 = vld [vmem:[#allocation2 + $0x90] sm:$0xff]
      %v1627 = vld [vmem:[#allocation2 + $0x98] sm:$0xff]
      %v1628 = vld [vmem:[#allocation2 + $0xa0] sm:$0xff]
      %v1629 = vld [vmem:[#allocation2 + $0xa8] sm:$0xff]
      %v1630 = vld [vmem:[#allocation2 + $0xb0] sm:$0xff]
      %v1631 = vpack.c.bf16 %v1612, %v1611
      %v1632 = vpack.c.bf16 %v1614, %v1613
      %v1633 = vpack.c.bf16 %v1616, %v1615
      %v1634 = vpack.c.bf16 %v1618, %v1617
      %v1635 = vpack.c.bf16 %v1620, %v1619
      %v1636 = vpack.c.bf16 %v1622, %v1621
      %v1637 = vpack.c.bf16 %v1624, %v1623
      %v1638 = vpack.c.bf16 %v1626, %v1625
      %v1639 = vpack.c.bf16 %v1628, %v1627
      %v1640 = vpack.c.bf16 %v1630, %v1629
      %s1641 = scalar_lea.vmem %s4, 8
      %v1642 = vld [vmem:[%s1641] sm:$0x3]
      %v1644 = vsel %vm832, %v1631, 0
      %v1647 = vsel %vm832, %v1632, 0
      %v1650 = vsel %vm832, %v1633, 0
      %v1653 = vsel %vm832, %v1634, 0
      %v1656 = vsel %vm832, %v1635, 0
      %v1659 = vsel %vm832, %v1636, 0
      %v1662 = vsel %vm832, %v1637, 0
      %v1665 = vsel %vm832, %v1638, 0
      %v1668 = vsel %vm832, %v1639, 0
      %v1671 = vsel %vm832, %v1640, 0
      %v1674 = vsel %vm952, %v1642, 0
      %1676 = vmatprep.subr.bf16.mxu0 0
      %1677 = vmatpush1.bf16.msra.mxu0 0
      %1678 = vmatprep.subr.bf16.mxu0 0
      %1679 = vmatpush1.bf16.msra.mxu0 0
      %1680 = vmatprep.subr.bf16.mxu0 0
      %1681 = vmatpush1.bf16.msra.mxu0 0
      %1682 = vmatprep.subr.bf16.mxu0 0
      %1683 = vmatpush1.bf16.msra.mxu0 0
      %1684 = vmatprep.subr.bf16.mxu0 0
      %1685 = vmatpush1.bf16.msra.mxu0 0
      %1686 = vmatprep.subr.bf16.mxu0 0
      %1687 = vmatpush1.bf16.msra.mxu0 0
      %1688 = vmatprep.subr.bf16.mxu0 0
      %1689 = vmatpush1.bf16.msra.mxu0 0
      %1690 = vmatprep.subr.bf16.mxu0 0
      %1691 = vmatpush1.bf16.msra.mxu0 %v1674
      %1692 = vmatprep.subr.bf16.mxu0 0
      %1693 = vmatpush2.bf16.msra.mxu0 0
      %1694 = vmatprep.subr.bf16.mxu0 0
      %1695 = vmatpush2.bf16.msra.mxu0 0
      %1696 = vmatprep.subr.bf16.mxu0 0
      %1697 = vmatpush2.bf16.msra.mxu0 0
      %1698 = vmatprep.subr.bf16.mxu0 0
      %1699 = vmatpush2.bf16.msra.mxu0 0
      %1700 = vmatprep.subr.bf16.mxu0 0
      %1701 = vmatpush2.bf16.msra.mxu0 0
      %1702 = vmatprep.subr.bf16.mxu0 0
      %1703 = vmatpush2.bf16.msra.mxu0 0
      %1704 = vmatprep.subr.bf16.mxu0 0
      %1705 = vmatpush2.bf16.msra.mxu0 0
      %1706 = vmatprep.subr.bf16.mxu0 0
      %1707 = vmatpush2.bf16.msra.mxu0 0
      %1708 = vmatprep.mubr.bf16.mxu0 0
      %1709 = vmatmul.mubr.bf16.gmra.mxu0 %v1644
      %v1710 = vpop.f32.mrf.mxu0
      %v1711 = vadd.f32 0.0, %v1710
      %v1712 = vpop.f32.mrf.mxu0
      %v1713 = vpop.f32.mrf.mxu0
      %v1714 = vadd.f32 0.0, %v1713
      %v1715 = vpop.f32.mrf.mxu0
      %1716 = vmatprep.mubr.bf16.mxu0 0
      %1717 = vmatmul.mubr.bf16.gmra.mxu0 %v1647
      %v1718 = vpop.f32.mrf.mxu0
      %v1719 = vadd.f32 0.0, %v1718
      %v1720 = vpop.f32.mrf.mxu0
      %v1721 = vpop.f32.mrf.mxu0
      %v1722 = vadd.f32 0.0, %v1721
      %v1723 = vpop.f32.mrf.mxu0
      %1724 = vmatprep.mubr.bf16.mxu0 0
      %1725 = vmatmul.mubr.bf16.gmra.mxu0 %v1650
      %v1726 = vpop.f32.mrf.mxu0
      %v1727 = vadd.f32 0.0, %v1726
      %v1728 = vpop.f32.mrf.mxu0
      %v1729 = vpop.f32.mrf.mxu0
      %v1730 = vadd.f32 0.0, %v1729
      %v1731 = vpop.f32.mrf.mxu0
      %1732 = vmatprep.mubr.bf16.mxu0 0
      %1733 = vmatmul.mubr.bf16.gmra.mxu0 %v1653
      %v1734 = vpop.f32.mrf.mxu0
      %v1735 = vadd.f32 0.0, %v1734
      %v1736 = vpop.f32.mrf.mxu0
      %v1737 = vpop.f32.mrf.mxu0
      %v1738 = vadd.f32 0.0, %v1737
      %v1739 = vpop.f32.mrf.mxu0
      %1740 = vmatprep.mubr.bf16.mxu0 0
      %1741 = vmatmul.mubr.bf16.gmra.mxu0 %v1656
      %v1742 = vpop.f32.mrf.mxu0
      %v1743 = vadd.f32 0.0, %v1742
      %v1744 = vpop.f32.mrf.mxu0
      %v1745 = vpop.f32.mrf.mxu0
      %v1746 = vadd.f32 0.0, %v1745
      %v1747 = vpop.f32.mrf.mxu0
      %1748 = vmatprep.mubr.bf16.mxu0 0
      %1749 = vmatmul.mubr.bf16.gmra.mxu0 %v1659
      %v1750 = vpop.f32.mrf.mxu0
      %v1751 = vadd.f32 0.0, %v1750
      %v1752 = vpop.f32.mrf.mxu0
      %v1753 = vpop.f32.mrf.mxu0
      %v1754 = vadd.f32 0.0, %v1753
      %v1755 = vpop.f32.mrf.mxu0
      %1756 = vmatprep.mubr.bf16.mxu0 0
      %1757 = vmatmul.mubr.bf16.gmra.mxu0 %v1662
      %v1758 = vpop.f32.mrf.mxu0
      %v1759 = vadd.f32 0.0, %v1758
      %v1760 = vpop.f32.mrf.mxu0
      %v1761 = vpop.f32.mrf.mxu0
      %v1762 = vadd.f32 0.0, %v1761
      %v1763 = vpop.f32.mrf.mxu0
      %1764 = vmatprep.mubr.bf16.mxu0 0
      %1765 = vmatmul.mubr.bf16.gmra.mxu0 %v1665
      %v1766 = vpop.f32.mrf.mxu0
      %v1767 = vadd.f32 0.0, %v1766
      %v1768 = vpop.f32.mrf.mxu0
      %v1769 = vpop.f32.mrf.mxu0
      %v1770 = vadd.f32 0.0, %v1769
      %v1771 = vpop.f32.mrf.mxu0
      %1772 = vmatprep.mubr.bf16.mxu0 0
      %1773 = vmatmul.mubr.bf16.gmra.mxu0 %v1668
      %v1774 = vpop.f32.mrf.mxu0
      %v1775 = vadd.f32 0.0, %v1774
      %v1776 = vpop.f32.mrf.mxu0
      %v1777 = vpop.f32.mrf.mxu0
      %v1778 = vadd.f32 0.0, %v1777
      %v1779 = vpop.f32.mrf.mxu0
      %1780 = vmatprep.mubr.bf16.mxu0 0
      %1781 = vmatmul.mubr.bf16.gmra.mxu0 %v1671
      %v1782 = vpop.f32.mrf.mxu0
      %v1783 = vadd.f32 0.0, %v1782
      %v1784 = vpop.f32.mrf.mxu0
      %v1785 = vpop.f32.mrf.mxu0
      %v1786 = vadd.f32 0.0, %v1785
      %v1787 = vpop.f32.mrf.mxu0
      %1788 = vdwg.mxu0
      %v1789 = vadd.f32 %v1591, %v1711
      %v1790 = vadd.f32 %v1592, %v1714
      %v1791 = vadd.f32 %v1593, %v1719
      %v1792 = vadd.f32 %v1594, %v1722
      %v1793 = vadd.f32 %v1595, %v1727
      %v1794 = vadd.f32 %v1596, %v1730
      %v1795 = vadd.f32 %v1597, %v1735
      %v1796 = vadd.f32 %v1598, %v1738
      %v1797 = vadd.f32 %v1599, %v1743
      %v1798 = vadd.f32 %v1600, %v1746
      %v1799 = vadd.f32 %v1601, %v1751
      %v1800 = vadd.f32 %v1602, %v1754
      %v1801 = vadd.f32 %v1603, %v1759
      %v1802 = vadd.f32 %v1604, %v1762
      %v1803 = vadd.f32 %v1605, %v1767
      %v1804 = vadd.f32 %v1606, %v1770
      %v1805 = vadd.f32 %v1607, %v1775
      %v1806 = vadd.f32 %v1608, %v1778
      %v1807 = vadd.f32 %v1609, %v1783
      %v1808 = vadd.f32 %v1610, %v1786
      %v1809 = vld [vmem:[#allocation2 + $0x19] sm:$0xff]
      %v1810 = vld [vmem:[#allocation2 + $0x21] sm:$0xff]
      %v1811 = vld [vmem:[#allocation2 + $0x29] sm:$0xff]
      %v1812 = vld [vmem:[#allocation2 + $0x31] sm:$0xff]
      %v1813 = vld [vmem:[#allocation2 + $0x39] sm:$0xff]
      %v1814 = vld [vmem:[#allocation2 + $0x41] sm:$0xff]
      %v1815 = vld [vmem:[#allocation2 + $0x49] sm:$0xff]
      %v1816 = vld [vmem:[#allocation2 + $0x51] sm:$0xff]
      %v1817 = vld [vmem:[#allocation2 + $0x59] sm:$0xff]
      %v1818 = vld [vmem:[#allocation2 + $0x61] sm:$0xff]
      %v1819 = vld [vmem:[#allocation2 + $0x69] sm:$0xff]
      %v1820 = vld [vmem:[#allocation2 + $0x71] sm:$0xff]
      %v1821 = vld [vmem:[#allocation2 + $0x79] sm:$0xff]
      %v1822 = vld [vmem:[#allocation2 + $0x81] sm:$0xff]
      %v1823 = vld [vmem:[#allocation2 + $0x89] sm:$0xff]
      %v1824 = vld [vmem:[#allocation2 + $0x91] sm:$0xff]
      %v1825 = vld [vmem:[#allocation2 + $0x99] sm:$0xff]
      %v1826 = vld [vmem:[#allocation2 + $0xa1] sm:$0xff]
      %v1827 = vld [vmem:[#allocation2 + $0xa9] sm:$0xff]
      %v1828 = vld [vmem:[#allocation2 + $0xb1] sm:$0xff]
      %v1829 = vpack.c.bf16 %v1810, %v1809
      %v1830 = vpack.c.bf16 %v1812, %v1811
      %v1831 = vpack.c.bf16 %v1814, %v1813
      %v1832 = vpack.c.bf16 %v1816, %v1815
      %v1833 = vpack.c.bf16 %v1818, %v1817
      %v1834 = vpack.c.bf16 %v1820, %v1819
      %v1835 = vpack.c.bf16 %v1822, %v1821
      %v1836 = vpack.c.bf16 %v1824, %v1823
      %v1837 = vpack.c.bf16 %v1826, %v1825
      %v1838 = vpack.c.bf16 %v1828, %v1827
      %s1839 = scalar_lea.vmem %s4, 10
      %v1840 = vld [vmem:[%s1839] sm:$0x3]
      %v1842 = vsel %vm832, %v1829, 0
      %v1845 = vsel %vm832, %v1830, 0
      %v1848 = vsel %vm832, %v1831, 0
      %v1851 = vsel %vm832, %v1832, 0
      %v1854 = vsel %vm832, %v1833, 0
      %v1857 = vsel %vm832, %v1834, 0
      %v1860 = vsel %vm832, %v1835, 0
      %v1863 = vsel %vm832, %v1836, 0
      %v1866 = vsel %vm832, %v1837, 0
      %v1869 = vsel %vm832, %v1838, 0
      %v1872 = vsel %vm952, %v1840, 0
      %1874 = vmatprep.subr.bf16.mxu0 0
      %1875 = vmatpush1.bf16.msra.mxu0 0
      %1876 = vmatprep.subr.bf16.mxu0 0
      %1877 = vmatpush1.bf16.msra.mxu0 0
      %1878 = vmatprep.subr.bf16.mxu0 0
      %1879 = vmatpush1.bf16.msra.mxu0 0
      %1880 = vmatprep.subr.bf16.mxu0 0
      %1881 = vmatpush1.bf16.msra.mxu0 0
      %1882 = vmatprep.subr.bf16.mxu0 0
      %1883 = vmatpush1.bf16.msra.mxu0 0
      %1884 = vmatprep.subr.bf16.mxu0 0
      %1885 = vmatpush1.bf16.msra.mxu0 0
      %1886 = vmatprep.subr.bf16.mxu0 0
      %1887 = vmatpush1.bf16.msra.mxu0 0
      %1888 = vmatprep.subr.bf16.mxu0 0
      %1889 = vmatpush1.bf16.msra.mxu0 %v1872
      %1890 = vmatprep.subr.bf16.mxu0 0
      %1891 = vmatpush2.bf16.msra.mxu0 0
      %1892 = vmatprep.subr.bf16.mxu0 0
      %1893 = vmatpush2.bf16.msra.mxu0 0
      %1894 = vmatprep.subr.bf16.mxu0 0
      %1895 = vmatpush2.bf16.msra.mxu0 0
      %1896 = vmatprep.subr.bf16.mxu0 0
      %1897 = vmatpush2.bf16.msra.mxu0 0
      %1898 = vmatprep.subr.bf16.mxu0 0
      %1899 = vmatpush2.bf16.msra.mxu0 0
      %1900 = vmatprep.subr.bf16.mxu0 0
      %1901 = vmatpush2.bf16.msra.mxu0 0
      %1902 = vmatprep.subr.bf16.mxu0 0
      %1903 = vmatpush2.bf16.msra.mxu0 0
      %1904 = vmatprep.subr.bf16.mxu0 0
      %1905 = vmatpush2.bf16.msra.mxu0 0
      %1906 = vmatprep.mubr.bf16.mxu0 0
      %1907 = vmatmul.mubr.bf16.gmra.mxu0 %v1842
      %v1908 = vpop.f32.mrf.mxu0
      %v1909 = vadd.f32 0.0, %v1908
      %v1910 = vpop.f32.mrf.mxu0
      %v1911 = vpop.f32.mrf.mxu0
      %v1912 = vadd.f32 0.0, %v1911
      %v1913 = vpop.f32.mrf.mxu0
      %1914 = vmatprep.mubr.bf16.mxu0 0
      %1915 = vmatmul.mubr.bf16.gmra.mxu0 %v1845
      %v1916 = vpop.f32.mrf.mxu0
      %v1917 = vadd.f32 0.0, %v1916
      %v1918 = vpop.f32.mrf.mxu0
      %v1919 = vpop.f32.mrf.mxu0
      %v1920 = vadd.f32 0.0, %v1919
      %v1921 = vpop.f32.mrf.mxu0
      %1922 = vmatprep.mubr.bf16.mxu0 0
      %1923 = vmatmul.mubr.bf16.gmra.mxu0 %v1848
      %v1924 = vpop.f32.mrf.mxu0
      %v1925 = vadd.f32 0.0, %v1924
      %v1926 = vpop.f32.mrf.mxu0
      %v1927 = vpop.f32.mrf.mxu0
      %v1928 = vadd.f32 0.0, %v1927
      %v1929 = vpop.f32.mrf.mxu0
      %1930 = vmatprep.mubr.bf16.mxu0 0
      %1931 = vmatmul.mubr.bf16.gmra.mxu0 %v1851
      %v1932 = vpop.f32.mrf.mxu0
      %v1933 = vadd.f32 0.0, %v1932
      %v1934 = vpop.f32.mrf.mxu0
      %v1935 = vpop.f32.mrf.mxu0
      %v1936 = vadd.f32 0.0, %v1935
      %v1937 = vpop.f32.mrf.mxu0
      %1938 = vmatprep.mubr.bf16.mxu0 0
      %1939 = vmatmul.mubr.bf16.gmra.mxu0 %v1854
      %v1940 = vpop.f32.mrf.mxu0
      %v1941 = vadd.f32 0.0, %v1940
      %v1942 = vpop.f32.mrf.mxu0
      %v1943 = vpop.f32.mrf.mxu0
      %v1944 = vadd.f32 0.0, %v1943
      %v1945 = vpop.f32.mrf.mxu0
      %1946 = vmatprep.mubr.bf16.mxu0 0
      %1947 = vmatmul.mubr.bf16.gmra.mxu0 %v1857
      %v1948 = vpop.f32.mrf.mxu0
      %v1949 = vadd.f32 0.0, %v1948
      %v1950 = vpop.f32.mrf.mxu0
      %v1951 = vpop.f32.mrf.mxu0
      %v1952 = vadd.f32 0.0, %v1951
      %v1953 = vpop.f32.mrf.mxu0
      %1954 = vmatprep.mubr.bf16.mxu0 0
      %1955 = vmatmul.mubr.bf16.gmra.mxu0 %v1860
      %v1956 = vpop.f32.mrf.mxu0
      %v1957 = vadd.f32 0.0, %v1956
      %v1958 = vpop.f32.mrf.mxu0
      %v1959 = vpop.f32.mrf.mxu0
      %v1960 = vadd.f32 0.0, %v1959
      %v1961 = vpop.f32.mrf.mxu0
      %1962 = vmatprep.mubr.bf16.mxu0 0
      %1963 = vmatmul.mubr.bf16.gmra.mxu0 %v1863
      %v1964 = vpop.f32.mrf.mxu0
      %v1965 = vadd.f32 0.0, %v1964
      %v1966 = vpop.f32.mrf.mxu0
      %v1967 = vpop.f32.mrf.mxu0
      %v1968 = vadd.f32 0.0, %v1967
      %v1969 = vpop.f32.mrf.mxu0
      %1970 = vmatprep.mubr.bf16.mxu0 0
      %1971 = vmatmul.mubr.bf16.gmra.mxu0 %v1866
      %v1972 = vpop.f32.mrf.mxu0
      %v1973 = vadd.f32 0.0, %v1972
      %v1974 = vpop.f32.mrf.mxu0
      %v1975 = vpop.f32.mrf.mxu0
      %v1976 = vadd.f32 0.0, %v1975
      %v1977 = vpop.f32.mrf.mxu0
      %1978 = vmatprep.mubr.bf16.mxu0 0
      %1979 = vmatmul.mubr.bf16.gmra.mxu0 %v1869
      %v1980 = vpop.f32.mrf.mxu0
      %v1981 = vadd.f32 0.0, %v1980
      %v1982 = vpop.f32.mrf.mxu0
      %v1983 = vpop.f32.mrf.mxu0
      %v1984 = vadd.f32 0.0, %v1983
      %v1985 = vpop.f32.mrf.mxu0
      %1986 = vdwg.mxu0
      %v1987 = vadd.f32 %v1789, %v1909
      %v1988 = vadd.f32 %v1790, %v1912
      %v1989 = vadd.f32 %v1791, %v1917
      %v1990 = vadd.f32 %v1792, %v1920
      %v1991 = vadd.f32 %v1793, %v1925
      %v1992 = vadd.f32 %v1794, %v1928
      %v1993 = vadd.f32 %v1795, %v1933
      %v1994 = vadd.f32 %v1796, %v1936
      %v1995 = vadd.f32 %v1797, %v1941
      %v1996 = vadd.f32 %v1798, %v1944
      %v1997 = vadd.f32 %v1799, %v1949
      %v1998 = vadd.f32 %v1800, %v1952
      %v1999 = vadd.f32 %v1801, %v1957
      %v2000 = vadd.f32 %v1802, %v1960
      %v2001 = vadd.f32 %v1803, %v1965
      %v2002 = vadd.f32 %v1804, %v1968
      %v2003 = vadd.f32 %v1805, %v1973
      %v2004 = vadd.f32 %v1806, %v1976
      %v2005 = vadd.f32 %v1807, %v1981
      %v2006 = vadd.f32 %v1808, %v1984
      %v2007 = vld [vmem:[#allocation2 + $0x27] sm:$0xff]
      %v2008 = vld [vmem:[#allocation2 + $0x2f] sm:$0xff]
      %v2009 = vld [vmem:[#allocation2 + $0x37] sm:$0xff]
      %v2010 = vld [vmem:[#allocation2 + $0x3f] sm:$0xff]
      %v2011 = vld [vmem:[#allocation2 + $0x47] sm:$0xff]
      %v2012 = vld [vmem:[#allocation2 + $0x4f] sm:$0xff]
      %v2013 = vld [vmem:[#allocation2 + $0x57] sm:$0xff]
      %v2014 = vld [vmem:[#allocation2 + $0x5f] sm:$0xff]
      %v2015 = vld [vmem:[#allocation2 + $0x67] sm:$0xff]
      %v2016 = vld [vmem:[#allocation2 + $0x6f] sm:$0xff]
      %v2017 = vld [vmem:[#allocation2 + $0x77] sm:$0xff]
      %v2018 = vld [vmem:[#allocation2 + $0x7f] sm:$0xff]
      %v2019 = vld [vmem:[#allocation2 + $0x87] sm:$0xff]
      %v2020 = vld [vmem:[#allocation2 + $0x8f] sm:$0xff]
      %v2021 = vld [vmem:[#allocation2 + $0x97] sm:$0xff]
      %v2022 = vld [vmem:[#allocation2 + $0x9f] sm:$0xff]
      %v2023 = vld [vmem:[#allocation2 + $0xa7] sm:$0xff]
      %v2024 = vld [vmem:[#allocation2 + $0xaf] sm:$0xff]
      %v2025 = vld [vmem:[#allocation2 + $0xb7] sm:$0xff]
      %v2026 = vld [vmem:[#allocation2 + $0xbf] sm:$0xff]
      %v2027 = vpack.c.bf16 %v2008, %v2007
      %v2028 = vpack.c.bf16 %v2010, %v2009
      %v2029 = vpack.c.bf16 %v2012, %v2011
      %v2030 = vpack.c.bf16 %v2014, %v2013
      %v2031 = vpack.c.bf16 %v2016, %v2015
      %v2032 = vpack.c.bf16 %v2018, %v2017
      %v2033 = vpack.c.bf16 %v2020, %v2019
      %v2034 = vpack.c.bf16 %v2022, %v2021
      %v2035 = vpack.c.bf16 %v2024, %v2023
      %v2036 = vpack.c.bf16 %v2026, %v2025
      %s2037 = scalar_lea.vmem %s4, 12
      %v2038 = vld [vmem:[%s2037] sm:$0x3]
      %v2040 = vsel %vm832, %v2027, 0
      %v2043 = vsel %vm832, %v2028, 0
      %v2046 = vsel %vm832, %v2029, 0
      %v2049 = vsel %vm832, %v2030, 0
      %v2052 = vsel %vm832, %v2031, 0
      %v2055 = vsel %vm832, %v2032, 0
      %v2058 = vsel %vm832, %v2033, 0
      %v2061 = vsel %vm832, %v2034, 0
      %v2064 = vsel %vm832, %v2035, 0
      %v2067 = vsel %vm832, %v2036, 0
      %v2070 = vsel %vm952, %v2038, 0
      %2072 = vmatprep.subr.bf16.mxu0 0
      %2073 = vmatpush1.bf16.msra.mxu0 0
      %2074 = vmatprep.subr.bf16.mxu0 0
      %2075 = vmatpush1.bf16.msra.mxu0 0
      %2076 = vmatprep.subr.bf16.mxu0 0
      %2077 = vmatpush1.bf16.msra.mxu0 0
      %2078 = vmatprep.subr.bf16.mxu0 0
      %2079 = vmatpush1.bf16.msra.mxu0 0
      %2080 = vmatprep.subr.bf16.mxu0 0
      %2081 = vmatpush1.bf16.msra.mxu0 0
      %2082 = vmatprep.subr.bf16.mxu0 0
      %2083 = vmatpush1.bf16.msra.mxu0 0
      %2084 = vmatprep.subr.bf16.mxu0 0
      %2085 = vmatpush1.bf16.msra.mxu0 0
      %2086 = vmatprep.subr.bf16.mxu0 0
      %2087 = vmatpush1.bf16.msra.mxu0 %v2070
      %2088 = vmatprep.subr.bf16.mxu0 0
      %2089 = vmatpush2.bf16.msra.mxu0 0
      %2090 = vmatprep.subr.bf16.mxu0 0
      %2091 = vmatpush2.bf16.msra.mxu0 0
      %2092 = vmatprep.subr.bf16.mxu0 0
      %2093 = vmatpush2.bf16.msra.mxu0 0
      %2094 = vmatprep.subr.bf16.mxu0 0
      %2095 = vmatpush2.bf16.msra.mxu0 0
      %2096 = vmatprep.subr.bf16.mxu0 0
      %2097 = vmatpush2.bf16.msra.mxu0 0
      %2098 = vmatprep.subr.bf16.mxu0 0
      %2099 = vmatpush2.bf16.msra.mxu0 0
      %2100 = vmatprep.subr.bf16.mxu0 0
      %2101 = vmatpush2.bf16.msra.mxu0 0
      %2102 = vmatprep.subr.bf16.mxu0 0
      %2103 = vmatpush2.bf16.msra.mxu0 0
      %2104 = vmatprep.mubr.bf16.mxu0 0
      %2105 = vmatmul.mubr.bf16.gmra.mxu0 %v2040
      %v2106 = vpop.f32.mrf.mxu0
      %v2107 = vadd.f32 0.0, %v2106
      %v2108 = vpop.f32.mrf.mxu0
      %v2109 = vpop.f32.mrf.mxu0
      %v2110 = vadd.f32 0.0, %v2109
      %v2111 = vpop.f32.mrf.mxu0
      %2112 = vmatprep.mubr.bf16.mxu0 0
      %2113 = vmatmul.mubr.bf16.gmra.mxu0 %v2043
      %v2114 = vpop.f32.mrf.mxu0
      %v2115 = vadd.f32 0.0, %v2114
      %v2116 = vpop.f32.mrf.mxu0
      %v2117 = vpop.f32.mrf.mxu0
      %v2118 = vadd.f32 0.0, %v2117
      %v2119 = vpop.f32.mrf.mxu0
      %2120 = vmatprep.mubr.bf16.mxu0 0
      %2121 = vmatmul.mubr.bf16.gmra.mxu0 %v2046
      %v2122 = vpop.f32.mrf.mxu0
      %v2123 = vadd.f32 0.0, %v2122
      %v2124 = vpop.f32.mrf.mxu0
      %v2125 = vpop.f32.mrf.mxu0
      %v2126 = vadd.f32 0.0, %v2125
      %v2127 = vpop.f32.mrf.mxu0
      %2128 = vmatprep.mubr.bf16.mxu0 0
      %2129 = vmatmul.mubr.bf16.gmra.mxu0 %v2049
      %v2130 = vpop.f32.mrf.mxu0
      %v2131 = vadd.f32 0.0, %v2130
      %v2132 = vpop.f32.mrf.mxu0
      %v2133 = vpop.f32.mrf.mxu0
      %v2134 = vadd.f32 0.0, %v2133
      %v2135 = vpop.f32.mrf.mxu0
      %2136 = vmatprep.mubr.bf16.mxu0 0
      %2137 = vmatmul.mubr.bf16.gmra.mxu0 %v2052
      %v2138 = vpop.f32.mrf.mxu0
      %v2139 = vadd.f32 0.0, %v2138
      %v2140 = vpop.f32.mrf.mxu0
      %v2141 = vpop.f32.mrf.mxu0
      %v2142 = vadd.f32 0.0, %v2141
      %v2143 = vpop.f32.mrf.mxu0
      %2144 = vmatprep.mubr.bf16.mxu0 0
      %2145 = vmatmul.mubr.bf16.gmra.mxu0 %v2055
      %v2146 = vpop.f32.mrf.mxu0
      %v2147 = vadd.f32 0.0, %v2146
      %v2148 = vpop.f32.mrf.mxu0
      %v2149 = vpop.f32.mrf.mxu0
      %v2150 = vadd.f32 0.0, %v2149
      %v2151 = vpop.f32.mrf.mxu0
      %2152 = vmatprep.mubr.bf16.mxu0 0
      %2153 = vmatmul.mubr.bf16.gmra.mxu0 %v2058
      %v2154 = vpop.f32.mrf.mxu0
      %v2155 = vadd.f32 0.0, %v2154
      %v2156 = vpop.f32.mrf.mxu0
      %v2157 = vpop.f32.mrf.mxu0
      %v2158 = vadd.f32 0.0, %v2157
      %v2159 = vpop.f32.mrf.mxu0
      %2160 = vmatprep.mubr.bf16.mxu0 0
      %2161 = vmatmul.mubr.bf16.gmra.mxu0 %v2061
      %v2162 = vpop.f32.mrf.mxu0
      %v2163 = vadd.f32 0.0, %v2162
      %v2164 = vpop.f32.mrf.mxu0
      %v2165 = vpop.f32.mrf.mxu0
      %v2166 = vadd.f32 0.0, %v2165
      %v2167 = vpop.f32.mrf.mxu0
      %2168 = vmatprep.mubr.bf16.mxu0 0
      %2169 = vmatmul.mubr.bf16.gmra.mxu0 %v2064
      %v2170 = vpop.f32.mrf.mxu0
      %v2171 = vadd.f32 0.0, %v2170
      %v2172 = vpop.f32.mrf.mxu0
      %v2173 = vpop.f32.mrf.mxu0
      %v2174 = vadd.f32 0.0, %v2173
      %v2175 = vpop.f32.mrf.mxu0
      %2176 = vmatprep.mubr.bf16.mxu0 0
      %2177 = vmatmul.mubr.bf16.gmra.mxu0 %v2067
      %v2178 = vpop.f32.mrf.mxu0
      %v2179 = vadd.f32 0.0, %v2178
      %v2180 = vpop.f32.mrf.mxu0
      %v2181 = vpop.f32.mrf.mxu0
      %v2182 = vadd.f32 0.0, %v2181
      %v2183 = vpop.f32.mrf.mxu0
      %2184 = vdwg.mxu0
      %v2185 = vadd.f32 %v1987, %v2107
      %v2186 = vadd.f32 %v1988, %v2110
      %v2187 = vadd.f32 %v1989, %v2115
      %v2188 = vadd.f32 %v1990, %v2118
      %v2189 = vadd.f32 %v1991, %v2123
      %v2190 = vadd.f32 %v1992, %v2126
      %v2191 = vadd.f32 %v1993, %v2131
      %v2192 = vadd.f32 %v1994, %v2134
      %v2193 = vadd.f32 %v1995, %v2139
      %v2194 = vadd.f32 %v1996, %v2142
      %v2195 = vadd.f32 %v1997, %v2147
      %v2196 = vadd.f32 %v1998, %v2150
      %v2197 = vadd.f32 %v1999, %v2155
      %v2198 = vadd.f32 %v2000, %v2158
      %v2199 = vadd.f32 %v2001, %v2163
      %v2200 = vadd.f32 %v2002, %v2166
      %v2201 = vadd.f32 %v2003, %v2171
      %v2202 = vadd.f32 %v2004, %v2174
      %v2203 = vadd.f32 %v2005, %v2179
      %v2204 = vadd.f32 %v2006, %v2182
      %v2205 = vld [vmem:[#allocation2 + $0x28] sm:$0xff]
      %v2206 = vld [vmem:[#allocation2 + $0x30] sm:$0xff]
      %v2207 = vld [vmem:[#allocation2 + $0x38] sm:$0xff]
      %v2208 = vld [vmem:[#allocation2 + $0x40] sm:$0xff]
      %v2209 = vld [vmem:[#allocation2 + $0x48] sm:$0xff]
      %v2210 = vld [vmem:[#allocation2 + $0x50] sm:$0xff]
      %v2211 = vld [vmem:[#allocation2 + $0x58] sm:$0xff]
      %v2212 = vld [vmem:[#allocation2 + $0x60] sm:$0xff]
      %v2213 = vld [vmem:[#allocation2 + $0x68] sm:$0xff]
      %v2214 = vld [vmem:[#allocation2 + $0x70] sm:$0xff]
      %v2215 = vld [vmem:[#allocation2 + $0x78] sm:$0xff]
      %v2216 = vld [vmem:[#allocation2 + $0x80] sm:$0xff]
      %v2217 = vld [vmem:[#allocation2 + $0x88] sm:$0xff]
      %v2218 = vld [vmem:[#allocation2 + $0x90] sm:$0xff]
      %v2219 = vld [vmem:[#allocation2 + $0x98] sm:$0xff]
      %v2220 = vld [vmem:[#allocation2 + $0xa0] sm:$0xff]
      %v2221 = vld [vmem:[#allocation2 + $0xa8] sm:$0xff]
      %v2222 = vld [vmem:[#allocation2 + $0xb0] sm:$0xff]
      %v2223 = vld [vmem:[#allocation2 + $0xb8] sm:$0xff]
      %v2224 = vld [vmem:[#allocation2 + $0xc0] sm:$0xff]
      %v2225 = vpack.c.bf16 %v2206, %v2205
      %v2226 = vpack.c.bf16 %v2208, %v2207
      %v2227 = vpack.c.bf16 %v2210, %v2209
      %v2228 = vpack.c.bf16 %v2212, %v2211
      %v2229 = vpack.c.bf16 %v2214, %v2213
      %v2230 = vpack.c.bf16 %v2216, %v2215
      %v2231 = vpack.c.bf16 %v2218, %v2217
      %v2232 = vpack.c.bf16 %v2220, %v2219
      %v2233 = vpack.c.bf16 %v2222, %v2221
      %v2234 = vpack.c.bf16 %v2224, %v2223
      %s2235 = scalar_lea.vmem %s4, 14
      %v2236 = vld [vmem:[%s2235] sm:$0x3]
      %v2238 = vsel %vm832, %v2225, 0
      %v2241 = vsel %vm832, %v2226, 0
      %v2244 = vsel %vm832, %v2227, 0
      %v2247 = vsel %vm832, %v2228, 0
      %v2250 = vsel %vm832, %v2229, 0
      %v2253 = vsel %vm832, %v2230, 0
      %v2256 = vsel %vm832, %v2231, 0
      %v2259 = vsel %vm832, %v2232, 0
      %v2262 = vsel %vm832, %v2233, 0
      %v2265 = vsel %vm832, %v2234, 0
      %v2268 = vsel %vm952, %v2236, 0
      %2270 = vmatprep.subr.bf16.mxu0 0
      %2271 = vmatpush1.bf16.msra.mxu0 0
      %2272 = vmatprep.subr.bf16.mxu0 0
      %2273 = vmatpush1.bf16.msra.mxu0 0
      %2274 = vmatprep.subr.bf16.mxu0 0
      %2275 = vmatpush1.bf16.msra.mxu0 0
      %2276 = vmatprep.subr.bf16.mxu0 0
      %2277 = vmatpush1.bf16.msra.mxu0 0
      %2278 = vmatprep.subr.bf16.mxu0 0
      %2279 = vmatpush1.bf16.msra.mxu0 0
      %2280 = vmatprep.subr.bf16.mxu0 0
      %2281 = vmatpush1.bf16.msra.mxu0 0
      %2282 = vmatprep.subr.bf16.mxu0 0
      %2283 = vmatpush1.bf16.msra.mxu0 0
      %2284 = vmatprep.subr.bf16.mxu0 0
      %2285 = vmatpush1.bf16.msra.mxu0 %v2268
      %2286 = vmatprep.subr.bf16.mxu0 0
      %2287 = vmatpush2.bf16.msra.mxu0 0
      %2288 = vmatprep.subr.bf16.mxu0 0
      %2289 = vmatpush2.bf16.msra.mxu0 0
      %2290 = vmatprep.subr.bf16.mxu0 0
      %2291 = vmatpush2.bf16.msra.mxu0 0
      %2292 = vmatprep.subr.bf16.mxu0 0
      %2293 = vmatpush2.bf16.msra.mxu0 0
      %2294 = vmatprep.subr.bf16.mxu0 0
      %2295 = vmatpush2.bf16.msra.mxu0 0
      %2296 = vmatprep.subr.bf16.mxu0 0
      %2297 = vmatpush2.bf16.msra.mxu0 0
      %2298 = vmatprep.subr.bf16.mxu0 0
      %2299 = vmatpush2.bf16.msra.mxu0 0
      %2300 = vmatprep.subr.bf16.mxu0 0
      %2301 = vmatpush2.bf16.msra.mxu0 0
      %2302 = vmatprep.mubr.bf16.mxu0 0
      %2303 = vmatmul.mubr.bf16.gmra.mxu0 %v2238
      %v2304 = vpop.f32.mrf.mxu0
      %v2305 = vadd.f32 0.0, %v2304
      %v2306 = vpop.f32.mrf.mxu0
      %v2307 = vpop.f32.mrf.mxu0
      %v2308 = vadd.f32 0.0, %v2307
      %v2309 = vpop.f32.mrf.mxu0
      %2310 = vmatprep.mubr.bf16.mxu0 0
      %2311 = vmatmul.mubr.bf16.gmra.mxu0 %v2241
      %v2312 = vpop.f32.mrf.mxu0
      %v2313 = vadd.f32 0.0, %v2312
      %v2314 = vpop.f32.mrf.mxu0
      %v2315 = vpop.f32.mrf.mxu0
      %v2316 = vadd.f32 0.0, %v2315
      %v2317 = vpop.f32.mrf.mxu0
      %2318 = vmatprep.mubr.bf16.mxu0 0
      %2319 = vmatmul.mubr.bf16.gmra.mxu0 %v2244
      %v2320 = vpop.f32.mrf.mxu0
      %v2321 = vadd.f32 0.0, %v2320
      %v2322 = vpop.f32.mrf.mxu0
      %v2323 = vpop.f32.mrf.mxu0
      %v2324 = vadd.f32 0.0, %v2323
      %v2325 = vpop.f32.mrf.mxu0
      %2326 = vmatprep.mubr.bf16.mxu0 0
      %2327 = vmatmul.mubr.bf16.gmra.mxu0 %v2247
      %v2328 = vpop.f32.mrf.mxu0
      %v2329 = vadd.f32 0.0, %v2328
      %v2330 = vpop.f32.mrf.mxu0
      %v2331 = vpop.f32.mrf.mxu0
      %v2332 = vadd.f32 0.0, %v2331
      %v2333 = vpop.f32.mrf.mxu0
      %2334 = vmatprep.mubr.bf16.mxu0 0
      %2335 = vmatmul.mubr.bf16.gmra.mxu0 %v2250
      %v2336 = vpop.f32.mrf.mxu0
      %v2337 = vadd.f32 0.0, %v2336
      %v2338 = vpop.f32.mrf.mxu0
      %v2339 = vpop.f32.mrf.mxu0
      %v2340 = vadd.f32 0.0, %v2339
      %v2341 = vpop.f32.mrf.mxu0
      %2342 = vmatprep.mubr.bf16.mxu0 0
      %2343 = vmatmul.mubr.bf16.gmra.mxu0 %v2253
      %v2344 = vpop.f32.mrf.mxu0
      %v2345 = vadd.f32 0.0, %v2344
      %v2346 = vpop.f32.mrf.mxu0
      %v2347 = vpop.f32.mrf.mxu0
      %v2348 = vadd.f32 0.0, %v2347
      %v2349 = vpop.f32.mrf.mxu0
      %2350 = vmatprep.mubr.bf16.mxu0 0
      %2351 = vmatmul.mubr.bf16.gmra.mxu0 %v2256
      %v2352 = vpop.f32.mrf.mxu0
      %v2353 = vadd.f32 0.0, %v2352
      %v2354 = vpop.f32.mrf.mxu0
      %v2355 = vpop.f32.mrf.mxu0
      %v2356 = vadd.f32 0.0, %v2355
      %v2357 = vpop.f32.mrf.mxu0
      %2358 = vmatprep.mubr.bf16.mxu0 0
      %2359 = vmatmul.mubr.bf16.gmra.mxu0 %v2259
      %v2360 = vpop.f32.mrf.mxu0
      %v2361 = vadd.f32 0.0, %v2360
      %v2362 = vpop.f32.mrf.mxu0
      %v2363 = vpop.f32.mrf.mxu0
      %v2364 = vadd.f32 0.0, %v2363
      %v2365 = vpop.f32.mrf.mxu0
      %2366 = vmatprep.mubr.bf16.mxu0 0
      %2367 = vmatmul.mubr.bf16.gmra.mxu0 %v2262
      %v2368 = vpop.f32.mrf.mxu0
      %v2369 = vadd.f32 0.0, %v2368
      %v2370 = vpop.f32.mrf.mxu0
      %v2371 = vpop.f32.mrf.mxu0
      %v2372 = vadd.f32 0.0, %v2371
      %v2373 = vpop.f32.mrf.mxu0
      %2374 = vmatprep.mubr.bf16.mxu0 0
      %2375 = vmatmul.mubr.bf16.gmra.mxu0 %v2265
      %v2376 = vpop.f32.mrf.mxu0
      %v2377 = vadd.f32 0.0, %v2376
      %v2378 = vpop.f32.mrf.mxu0
      %v2379 = vpop.f32.mrf.mxu0
      %v2380 = vadd.f32 0.0, %v2379
      %v2381 = vpop.f32.mrf.mxu0
      %2382 = vdwg.mxu0
      %v2383 = vadd.f32 %v2185, %v2305
      %v2384 = vadd.f32 %v2186, %v2308
      %v2385 = vadd.f32 %v2187, %v2313
      %v2386 = vadd.f32 %v2188, %v2316
      %v2387 = vadd.f32 %v2189, %v2321
      %v2388 = vadd.f32 %v2190, %v2324
      %v2389 = vadd.f32 %v2191, %v2329
      %v2390 = vadd.f32 %v2192, %v2332
      %v2391 = vadd.f32 %v2193, %v2337
      %v2392 = vadd.f32 %v2194, %v2340
      %v2393 = vadd.f32 %v2195, %v2345
      %v2394 = vadd.f32 %v2196, %v2348
      %v2395 = vadd.f32 %v2197, %v2353
      %v2396 = vadd.f32 %v2198, %v2356
      %v2397 = vadd.f32 %v2199, %v2361
      %v2398 = vadd.f32 %v2200, %v2364
      %v2399 = vadd.f32 %v2201, %v2369
      %v2400 = vadd.f32 %v2202, %v2372
      %v2401 = vadd.f32 %v2203, %v2377
      %v2402 = vadd.f32 %v2204, %v2380
      %v2403 = vld [vmem:[#allocation2 + $0x29] sm:$0xff]
      %v2404 = vld [vmem:[#allocation2 + $0x31] sm:$0xff]
      %v2405 = vld [vmem:[#allocation2 + $0x39] sm:$0xff]
      %v2406 = vld [vmem:[#allocation2 + $0x41] sm:$0xff]
      %v2407 = vld [vmem:[#allocation2 + $0x49] sm:$0xff]
      %v2408 = vld [vmem:[#allocation2 + $0x51] sm:$0xff]
      %v2409 = vld [vmem:[#allocation2 + $0x59] sm:$0xff]
      %v2410 = vld [vmem:[#allocation2 + $0x61] sm:$0xff]
      %v2411 = vld [vmem:[#allocation2 + $0x69] sm:$0xff]
      %v2412 = vld [vmem:[#allocation2 + $0x71] sm:$0xff]
      %v2413 = vld [vmem:[#allocation2 + $0x79] sm:$0xff]
      %v2414 = vld [vmem:[#allocation2 + $0x81] sm:$0xff]
      %v2415 = vld [vmem:[#allocation2 + $0x89] sm:$0xff]
      %v2416 = vld [vmem:[#allocation2 + $0x91] sm:$0xff]
      %v2417 = vld [vmem:[#allocation2 + $0x99] sm:$0xff]
      %v2418 = vld [vmem:[#allocation2 + $0xa1] sm:$0xff]
      %v2419 = vld [vmem:[#allocation2 + $0xa9] sm:$0xff]
      %v2420 = vld [vmem:[#allocation2 + $0xb1] sm:$0xff]
      %v2421 = vld [vmem:[#allocation2 + $0xb9] sm:$0xff]
      %v2422 = vld [vmem:[#allocation2 + $0xc1] sm:$0xff]
      %v2423 = vpack.c.bf16 %v2404, %v2403
      %v2424 = vpack.c.bf16 %v2406, %v2405
      %v2425 = vpack.c.bf16 %v2408, %v2407
      %v2426 = vpack.c.bf16 %v2410, %v2409
      %v2427 = vpack.c.bf16 %v2412, %v2411
      %v2428 = vpack.c.bf16 %v2414, %v2413
      %v2429 = vpack.c.bf16 %v2416, %v2415
      %v2430 = vpack.c.bf16 %v2418, %v2417
      %v2431 = vpack.c.bf16 %v2420, %v2419
      %v2432 = vpack.c.bf16 %v2422, %v2421
      %s2433 = scalar_lea.vmem %s4, 16
      %v2434 = vld [vmem:[%s2433] sm:$0x3]
      %v2436 = vsel %vm832, %v2423, 0
      %v2439 = vsel %vm832, %v2424, 0
      %v2442 = vsel %vm832, %v2425, 0
      %v2445 = vsel %vm832, %v2426, 0
      %v2448 = vsel %vm832, %v2427, 0
      %v2451 = vsel %vm832, %v2428, 0
      %v2454 = vsel %vm832, %v2429, 0
      %v2457 = vsel %vm832, %v2430, 0
      %v2460 = vsel %vm832, %v2431, 0
      %v2463 = vsel %vm832, %v2432, 0
      %v2466 = vsel %vm952, %v2434, 0
      %2468 = vmatprep.subr.bf16.mxu0 0
      %2469 = vmatpush1.bf16.msra.mxu0 0
      %2470 = vmatprep.subr.bf16.mxu0 0
      %2471 = vmatpush1.bf16.msra.mxu0 0
      %2472 = vmatprep.subr.bf16.mxu0 0
      %2473 = vmatpush1.bf16.msra.mxu0 0
      %2474 = vmatprep.subr.bf16.mxu0 0
      %2475 = vmatpush1.bf16.msra.mxu0 0
      %2476 = vmatprep.subr.bf16.mxu0 0
      %2477 = vmatpush1.bf16.msra.mxu0 0
      %2478 = vmatprep.subr.bf16.mxu0 0
      %2479 = vmatpush1.bf16.msra.mxu0 0
      %2480 = vmatprep.subr.bf16.mxu0 0
      %2481 = vmatpush1.bf16.msra.mxu0 0
      %2482 = vmatprep.subr.bf16.mxu0 0
      %2483 = vmatpush1.bf16.msra.mxu0 %v2466
      %2484 = vmatprep.subr.bf16.mxu0 0
      %2485 = vmatpush2.bf16.msra.mxu0 0
      %2486 = vmatprep.subr.bf16.mxu0 0
      %2487 = vmatpush2.bf16.msra.mxu0 0
      %2488 = vmatprep.subr.bf16.mxu0 0
      %2489 = vmatpush2.bf16.msra.mxu0 0
      %2490 = vmatprep.subr.bf16.mxu0 0
      %2491 = vmatpush2.bf16.msra.mxu0 0
      %2492 = vmatprep.subr.bf16.mxu0 0
      %2493 = vmatpush2.bf16.msra.mxu0 0
      %2494 = vmatprep.subr.bf16.mxu0 0
      %2495 = vmatpush2.bf16.msra.mxu0 0
      %2496 = vmatprep.subr.bf16.mxu0 0
      %2497 = vmatpush2.bf16.msra.mxu0 0
      %2498 = vmatprep.subr.bf16.mxu0 0
      %2499 = vmatpush2.bf16.msra.mxu0 0
      %2500 = vmatprep.mubr.bf16.mxu0 0
      %2501 = vmatmul.mubr.bf16.gmra.mxu0 %v2436
      %v2502 = vpop.f32.mrf.mxu0
      %v2503 = vadd.f32 0.0, %v2502
      %v2504 = vpop.f32.mrf.mxu0
      %v2505 = vpop.f32.mrf.mxu0
      %v2506 = vadd.f32 0.0, %v2505
      %v2507 = vpop.f32.mrf.mxu0
      %2508 = vmatprep.mubr.bf16.mxu0 0
      %2509 = vmatmul.mubr.bf16.gmra.mxu0 %v2439
      %v2510 = vpop.f32.mrf.mxu0
      %v2511 = vadd.f32 0.0, %v2510
      %v2512 = vpop.f32.mrf.mxu0
      %v2513 = vpop.f32.mrf.mxu0
      %v2514 = vadd.f32 0.0, %v2513
      %v2515 = vpop.f32.mrf.mxu0
      %2516 = vmatprep.mubr.bf16.mxu0 0
      %2517 = vmatmul.mubr.bf16.gmra.mxu0 %v2442
      %v2518 = vpop.f32.mrf.mxu0
      %v2519 = vadd.f32 0.0, %v2518
      %v2520 = vpop.f32.mrf.mxu0
      %v2521 = vpop.f32.mrf.mxu0
      %v2522 = vadd.f32 0.0, %v2521
      %v2523 = vpop.f32.mrf.mxu0
      %2524 = vmatprep.mubr.bf16.mxu0 0
      %2525 = vmatmul.mubr.bf16.gmra.mxu0 %v2445
      %v2526 = vpop.f32.mrf.mxu0
      %v2527 = vadd.f32 0.0, %v2526
      %v2528 = vpop.f32.mrf.mxu0
      %v2529 = vpop.f32.mrf.mxu0
      %v2530 = vadd.f32 0.0, %v2529
      %v2531 = vpop.f32.mrf.mxu0
      %2532 = vmatprep.mubr.bf16.mxu0 0
      %2533 = vmatmul.mubr.bf16.gmra.mxu0 %v2448
      %v2534 = vpop.f32.mrf.mxu0
      %v2535 = vadd.f32 0.0, %v2534
      %v2536 = vpop.f32.mrf.mxu0
      %v2537 = vpop.f32.mrf.mxu0
      %v2538 = vadd.f32 0.0, %v2537
      %v2539 = vpop.f32.mrf.mxu0
      %2540 = vmatprep.mubr.bf16.mxu0 0
      %2541 = vmatmul.mubr.bf16.gmra.mxu0 %v2451
      %v2542 = vpop.f32.mrf.mxu0
      %v2543 = vadd.f32 0.0, %v2542
      %v2544 = vpop.f32.mrf.mxu0
      %v2545 = vpop.f32.mrf.mxu0
      %v2546 = vadd.f32 0.0, %v2545
      %v2547 = vpop.f32.mrf.mxu0
      %2548 = vmatprep.mubr.bf16.mxu0 0
      %2549 = vmatmul.mubr.bf16.gmra.mxu0 %v2454
      %v2550 = vpop.f32.mrf.mxu0
      %v2551 = vadd.f32 0.0, %v2550
      %v2552 = vpop.f32.mrf.mxu0
      %v2553 = vpop.f32.mrf.mxu0
      %v2554 = vadd.f32 0.0, %v2553
      %v2555 = vpop.f32.mrf.mxu0
      %2556 = vmatprep.mubr.bf16.mxu0 0
      %2557 = vmatmul.mubr.bf16.gmra.mxu0 %v2457
      %v2558 = vpop.f32.mrf.mxu0
      %v2559 = vadd.f32 0.0, %v2558
      %v2560 = vpop.f32.mrf.mxu0
      %v2561 = vpop.f32.mrf.mxu0
      %v2562 = vadd.f32 0.0, %v2561
      %v2563 = vpop.f32.mrf.mxu0
      %2564 = vmatprep.mubr.bf16.mxu0 0
      %2565 = vmatmul.mubr.bf16.gmra.mxu0 %v2460
      %v2566 = vpop.f32.mrf.mxu0
      %v2567 = vadd.f32 0.0, %v2566
      %v2568 = vpop.f32.mrf.mxu0
      %v2569 = vpop.f32.mrf.mxu0
      %v2570 = vadd.f32 0.0, %v2569
      %v2571 = vpop.f32.mrf.mxu0
      %2572 = vmatprep.mubr.bf16.mxu0 0
      %2573 = vmatmul.mubr.bf16.gmra.mxu0 %v2463
      %v2574 = vpop.f32.mrf.mxu0
      %v2575 = vadd.f32 0.0, %v2574
      %v2576 = vpop.f32.mrf.mxu0
      %v2577 = vpop.f32.mrf.mxu0
      %v2578 = vadd.f32 0.0, %v2577
      %v2579 = vpop.f32.mrf.mxu0
      %2580 = vdwg.mxu0
      %v2581 = vadd.f32 %v2383, %v2503
      %v2582 = vadd.f32 %v2384, %v2506
      %v2583 = vadd.f32 %v2385, %v2511
      %v2584 = vadd.f32 %v2386, %v2514
      %v2585 = vadd.f32 %v2387, %v2519
      %v2586 = vadd.f32 %v2388, %v2522
      %v2587 = vadd.f32 %v2389, %v2527
      %v2588 = vadd.f32 %v2390, %v2530
      %v2589 = vadd.f32 %v2391, %v2535
      %v2590 = vadd.f32 %v2392, %v2538
      %v2591 = vadd.f32 %v2393, %v2543
      %v2592 = vadd.f32 %v2394, %v2546
      %v2593 = vadd.f32 %v2395, %v2551
      %v2594 = vadd.f32 %v2396, %v2554
      %v2595 = vadd.f32 %v2397, %v2559
      %v2596 = vadd.f32 %v2398, %v2562
      %v2597 = vadd.f32 %v2399, %v2567
      %v2598 = vadd.f32 %v2400, %v2570
      %v2599 = vadd.f32 %v2401, %v2575
      %v2600 = vadd.f32 %v2402, %v2578
      %v2601 = vld [vmem:[%s5] sm:$0x1]
      %v2603 = vlaneseq
      %v2604 = vshrl.u32 %v2603, 7
      %v2605 = vsub.s32 0, %v2604
      %v2606 = vrot.slane %v2601, %v2605
      %v2608 = vmul.f32 %v2581, %v2606
      %v2609 = vmul.f32 %v2582, %v2606
      %v2610 = vmul.f32 %v2583, %v2606
      %v2611 = vmul.f32 %v2584, %v2606
      %v2612 = vmul.f32 %v2585, %v2606
      %v2613 = vmul.f32 %v2586, %v2606
      %v2614 = vmul.f32 %v2587, %v2606
      %v2615 = vmul.f32 %v2588, %v2606
      %v2616 = vmul.f32 %v2589, %v2606
      %v2617 = vmul.f32 %v2590, %v2606
      %v2618 = vmul.f32 %v2591, %v2606
      %v2619 = vmul.f32 %v2592, %v2606
      %v2620 = vmul.f32 %v2593, %v2606
      %v2621 = vmul.f32 %v2594, %v2606
      %v2622 = vmul.f32 %v2595, %v2606
      %v2623 = vmul.f32 %v2596, %v2606
      %v2624 = vmul.f32 %v2597, %v2606
      %v2625 = vmul.f32 %v2598, %v2606
      %v2626 = vmul.f32 %v2599, %v2606
      %v2627 = vmul.f32 %v2600, %v2606
      %v2628 = vld [vmem:[%s6] sm:$0x1]
      %v2630 = vlaneseq
      %v2631 = vshrl.u32 %v2630, 7
      %v2632 = vsub.s32 0, %v2631
      %v2633 = vrot.slane %v2628, %v2632
      %v2635 = vadd.f32 %v2608, %v2633
      %v2636 = vadd.f32 %v2609, %v2633
      %v2637 = vadd.f32 %v2610, %v2633
      %v2638 = vadd.f32 %v2611, %v2633
      %v2639 = vadd.f32 %v2612, %v2633
      %v2640 = vadd.f32 %v2613, %v2633
      %v2641 = vadd.f32 %v2614, %v2633
      %v2642 = vadd.f32 %v2615, %v2633
      %v2643 = vadd.f32 %v2616, %v2633
      %v2644 = vadd.f32 %v2617, %v2633
      %v2645 = vadd.f32 %v2618, %v2633
      %v2646 = vadd.f32 %v2619, %v2633
      %v2647 = vadd.f32 %v2620, %v2633
      %v2648 = vadd.f32 %v2621, %v2633
      %v2649 = vadd.f32 %v2622, %v2633
      %v2650 = vadd.f32 %v2623, %v2633
      %v2651 = vadd.f32 %v2624, %v2633
      %v2652 = vadd.f32 %v2625, %v2633
      %v2653 = vadd.f32 %v2626, %v2633
      %v2654 = vadd.f32 %v2627, %v2633
      %v2655 = vmax.f32 %v2635, 0.0
      %v2656 = vmax.f32 %v2636, 0.0
      %v2657 = vmax.f32 %v2637, 0.0
      %v2658 = vmax.f32 %v2638, 0.0
      %v2659 = vmax.f32 %v2639, 0.0
      %v2660 = vmax.f32 %v2640, 0.0
      %v2661 = vmax.f32 %v2641, 0.0
      %v2662 = vmax.f32 %v2642, 0.0
      %v2663 = vmax.f32 %v2643, 0.0
      %v2664 = vmax.f32 %v2644, 0.0
      %v2665 = vmax.f32 %v2645, 0.0
      %v2666 = vmax.f32 %v2646, 0.0
      %v2667 = vmax.f32 %v2647, 0.0
      %v2668 = vmax.f32 %v2648, 0.0
      %v2669 = vmax.f32 %v2649, 0.0
      %v2670 = vmax.f32 %v2650, 0.0
      %v2671 = vmax.f32 %v2651, 0.0
      %v2672 = vmax.f32 %v2652, 0.0
      %v2673 = vmax.f32 %v2653, 0.0
      %v2674 = vmax.f32 %v2654, 0.0
      %v2675 = vmul.f32 %v2655, %v715
      %v2676 = vmul.f32 %v2656, %v720
      %v2677 = vmul.f32 %v2657, %v725
      %v2678 = vmul.f32 %v2658, %v730
      %v2679 = vmul.f32 %v2659, %v735
      %v2680 = vmul.f32 %v2660, %v740
      %v2681 = vmul.f32 %v2661, %v745
      %v2682 = vmul.f32 %v2662, %v750
      %v2683 = vmul.f32 %v2663, %v755
      %v2684 = vmul.f32 %v2664, %v760
      %v2685 = vmul.f32 %v2665, %v765
      %v2686 = vmul.f32 %v2666, %v770
      %v2687 = vmul.f32 %v2667, %v775
      %v2688 = vmul.f32 %v2668, %v780
      %v2689 = vmul.f32 %v2669, %v785
      %v2690 = vmul.f32 %v2670, %v790
      %v2691 = vmul.f32 %v2671, %v795
      %v2692 = vmul.f32 %v2672, %v800
      %v2693 = vmul.f32 %v2673, %v805
      %v2694 = vmul.f32 %v2674, %v810
      %2695 = vst.msk [vmem:[#allocation3] sm:$0xff] %vm832, 0.0
      %2696 = vst.msk [vmem:[#allocation3 + $0x8] sm:$0xff] %vm832, 0.0
      %2697 = vst.msk [vmem:[#allocation3 + $0x10] sm:$0xff] %vm832, 0.0
      %2698 = vst.msk [vmem:[#allocation3 + $0xb8] sm:$0xff] %vm832, 0.0
      %2699 = vst.msk [vmem:[#allocation3 + $0xc0] sm:$0xff] %vm832, 0.0
      %2700 = vst.msk [vmem:[#allocation3 + $0xc8] sm:$0xff] %vm832, 0.0
      %2701 = vst.msk [vmem:[#allocation3 + $0x18] sm:$0xff] %vm832, %v2675
      %2702 = vst.msk [vmem:[#allocation3 + $0x20] sm:$0xff] %vm832, %v2676
      %2703 = vst.msk [vmem:[#allocation3 + $0x28] sm:$0xff] %vm832, %v2677
      %2704 = vst.msk [vmem:[#allocation3 + $0x30] sm:$0xff] %vm832, %v2678
      %2705 = vst.msk [vmem:[#allocation3 + $0x38] sm:$0xff] %vm832, %v2679
      %2706 = vst.msk [vmem:[#allocation3 + $0x40] sm:$0xff] %vm832, %v2680
      %2707 = vst.msk [vmem:[#allocation3 + $0x48] sm:$0xff] %vm832, %v2681
      %2708 = vst.msk [vmem:[#allocation3 + $0x50] sm:$0xff] %vm832, %v2682
      %2709 = vst.msk [vmem:[#allocation3 + $0x58] sm:$0xff] %vm832, %v2683
      %2710 = vst.msk [vmem:[#allocation3 + $0x60] sm:$0xff] %vm832, %v2684
      %2711 = vst.msk [vmem:[#allocation3 + $0x68] sm:$0xff] %vm832, %v2685
      %2712 = vst.msk [vmem:[#allocation3 + $0x70] sm:$0xff] %vm832, %v2686
      %2713 = vst.msk [vmem:[#allocation3 + $0x78] sm:$0xff] %vm832, %v2687
      %2714 = vst.msk [vmem:[#allocation3 + $0x80] sm:$0xff] %vm832, %v2688
      %2715 = vst.msk [vmem:[#allocation3 + $0x88] sm:$0xff] %vm832, %v2689
      %2716 = vst.msk [vmem:[#allocation3 + $0x90] sm:$0xff] %vm832, %v2690
      %2717 = vst.msk [vmem:[#allocation3 + $0x98] sm:$0xff] %vm832, %v2691
      %2718 = vst.msk [vmem:[#allocation3 + $0xa0] sm:$0xff] %vm832, %v2692
      %2719 = vst.msk [vmem:[#allocation3 + $0xa8] sm:$0xff] %vm832, %v2693
      %2720 = vst.msk [vmem:[#allocation3 + $0xb0] sm:$0xff] %vm832, %v2694
      %v2721 = vld [vmem:[#allocation3 + $0x7] sm:$0xff]
      %v2722 = vld [vmem:[#allocation3 + $0xf] sm:$0xff]
      %v2723 = vld [vmem:[#allocation3 + $0x17] sm:$0xff]
      %v2724 = vld [vmem:[#allocation3 + $0x1f] sm:$0xff]
      %v2725 = vld [vmem:[#allocation3 + $0x27] sm:$0xff]
      %v2726 = vld [vmem:[#allocation3 + $0x2f] sm:$0xff]
      %v2727 = vld [vmem:[#allocation3 + $0x37] sm:$0xff]
      %v2728 = vld [vmem:[#allocation3 + $0x3f] sm:$0xff]
      %v2729 = vld [vmem:[#allocation3 + $0x47] sm:$0xff]
      %v2730 = vld [vmem:[#allocation3 + $0x4f] sm:$0xff]
      %v2731 = vld [vmem:[#allocation3 + $0x57] sm:$0xff]
      %v2732 = vld [vmem:[#allocation3 + $0x5f] sm:$0xff]
      %v2733 = vld [vmem:[#allocation3 + $0x67] sm:$0xff]
      %v2734 = vld [vmem:[#allocation3 + $0x6f] sm:$0xff]
      %v2735 = vld [vmem:[#allocation3 + $0x77] sm:$0xff]
      %v2736 = vld [vmem:[#allocation3 + $0x7f] sm:$0xff]
      %v2737 = vld [vmem:[#allocation3 + $0x87] sm:$0xff]
      %v2738 = vld [vmem:[#allocation3 + $0x8f] sm:$0xff]
      %v2739 = vld [vmem:[#allocation3 + $0x97] sm:$0xff]
      %v2740 = vld [vmem:[#allocation3 + $0x9f] sm:$0xff]
      %v2741 = vpack.c.bf16 %v2722, %v2721
      %v2742 = vpack.c.bf16 %v2724, %v2723
      %v2743 = vpack.c.bf16 %v2726, %v2725
      %v2744 = vpack.c.bf16 %v2728, %v2727
      %v2745 = vpack.c.bf16 %v2730, %v2729
      %v2746 = vpack.c.bf16 %v2732, %v2731
      %v2747 = vpack.c.bf16 %v2734, %v2733
      %v2748 = vpack.c.bf16 %v2736, %v2735
      %v2749 = vpack.c.bf16 %v2738, %v2737
      %v2750 = vpack.c.bf16 %v2740, %v2739
      %v2751 = vld [vmem:[%s7] sm:$0x3]
      %v2752 = vld [vmem:[#allocation3 + $0x8] sm:$0xff]
      %v2753 = vld [vmem:[#allocation3 + $0x10] sm:$0xff]
      %v2754 = vld [vmem:[#allocation3 + $0x18] sm:$0xff]
      %v2755 = vld [vmem:[#allocation3 + $0x20] sm:$0xff]
      %v2756 = vld [vmem:[#allocation3 + $0x28] sm:$0xff]
      %v2757 = vld [vmem:[#allocation3 + $0x30] sm:$0xff]
      %v2758 = vld [vmem:[#allocation3 + $0x38] sm:$0xff]
      %v2759 = vld [vmem:[#allocation3 + $0x40] sm:$0xff]
      %v2760 = vld [vmem:[#allocation3 + $0x48] sm:$0xff]
      %v2761 = vld [vmem:[#allocation3 + $0x50] sm:$0xff]
      %v2762 = vld [vmem:[#allocation3 + $0x58] sm:$0xff]
      %v2763 = vld [vmem:[#allocation3 + $0x60] sm:$0xff]
      %v2764 = vld [vmem:[#allocation3 + $0x68] sm:$0xff]
      %v2765 = vld [vmem:[#allocation3 + $0x70] sm:$0xff]
      %v2766 = vld [vmem:[#allocation3 + $0x78] sm:$0xff]
      %v2767 = vld [vmem:[#allocation3 + $0x80] sm:$0xff]
      %v2768 = vld [vmem:[#allocation3 + $0x88] sm:$0xff]
      %v2769 = vld [vmem:[#allocation3 + $0x90] sm:$0xff]
      %v2770 = vld [vmem:[#allocation3 + $0x98] sm:$0xff]
      %v2771 = vld [vmem:[#allocation3 + $0xa0] sm:$0xff]
      %v2772 = vpack.c.bf16 %v2753, %v2752
      %v2773 = vpack.c.bf16 %v2755, %v2754
      %v2774 = vpack.c.bf16 %v2757, %v2756
      %v2775 = vpack.c.bf16 %v2759, %v2758
      %v2776 = vpack.c.bf16 %v2761, %v2760
      %v2777 = vpack.c.bf16 %v2763, %v2762
      %v2778 = vpack.c.bf16 %v2765, %v2764
      %v2779 = vpack.c.bf16 %v2767, %v2766
      %v2780 = vpack.c.bf16 %v2769, %v2768
      %v2781 = vpack.c.bf16 %v2771, %v2770
      %s2782 = scalar_lea.vmem %s7, 2
      %v2783 = vld [vmem:[%s2782] sm:$0x3]
      %v2785 = vsel %vm832, %v2772, 0
      %v2788 = vsel %vm832, %v2773, 0
      %v2791 = vsel %vm832, %v2774, 0
      %v2794 = vsel %vm832, %v2775, 0
      %v2797 = vsel %vm832, %v2776, 0
      %v2800 = vsel %vm832, %v2777, 0
      %v2803 = vsel %vm832, %v2778, 0
      %v2806 = vsel %vm832, %v2779, 0
      %v2809 = vsel %vm832, %v2780, 0
      %v2812 = vsel %vm832, %v2781, 0
      %v2815 = vsel %vm952, %v2783, 0
      %2817 = vmatprep.subr.bf16.mxu0 0
      %2818 = vmatpush1.bf16.msra.mxu0 0
      %2819 = vmatprep.subr.bf16.mxu0 0
      %2820 = vmatpush1.bf16.msra.mxu0 0
      %2821 = vmatprep.subr.bf16.mxu0 0
      %2822 = vmatpush1.bf16.msra.mxu0 0
      %2823 = vmatprep.subr.bf16.mxu0 0
      %2824 = vmatpush1.bf16.msra.mxu0 0
      %2825 = vmatprep.subr.bf16.mxu0 0
      %2826 = vmatpush1.bf16.msra.mxu0 0
      %2827 = vmatprep.subr.bf16.mxu0 0
      %2828 = vmatpush1.bf16.msra.mxu0 0
      %2829 = vmatprep.subr.bf16.mxu0 0
      %2830 = vmatpush1.bf16.msra.mxu0 0
      %2831 = vmatprep.subr.bf16.mxu0 0
      %2832 = vmatpush1.bf16.msra.mxu0 %v2815
      %2833 = vmatprep.subr.bf16.mxu0 0
      %2834 = vmatpush2.bf16.msra.mxu0 0
      %2835 = vmatprep.subr.bf16.mxu0 0
      %2836 = vmatpush2.bf16.msra.mxu0 0
      %2837 = vmatprep.subr.bf16.mxu0 0
      %2838 = vmatpush2.bf16.msra.mxu0 0
      %2839 = vmatprep.subr.bf16.mxu0 0
      %2840 = vmatpush2.bf16.msra.mxu0 0
      %2841 = vmatprep.subr.bf16.mxu0 0
      %2842 = vmatpush2.bf16.msra.mxu0 0
      %2843 = vmatprep.subr.bf16.mxu0 0
      %2844 = vmatpush2.bf16.msra.mxu0 0
      %2845 = vmatprep.subr.bf16.mxu0 0
      %2846 = vmatpush2.bf16.msra.mxu0 0
      %2847 = vmatprep.subr.bf16.mxu0 0
      %2848 = vmatpush2.bf16.msra.mxu0 0
      %2849 = vmatprep.mubr.bf16.mxu0 0
      %2850 = vmatmul.mubr.bf16.gmra.mxu0 %v2785
      %v2851 = vpop.f32.mrf.mxu0
      %v2852 = vadd.f32 0.0, %v2851
      %v2853 = vpop.f32.mrf.mxu0
      %v2854 = vpop.f32.mrf.mxu0
      %v2855 = vadd.f32 0.0, %v2854
      %v2856 = vpop.f32.mrf.mxu0
      %2857 = vmatprep.mubr.bf16.mxu0 0
      %2858 = vmatmul.mubr.bf16.gmra.mxu0 %v2788
      %v2859 = vpop.f32.mrf.mxu0
      %v2860 = vadd.f32 0.0, %v2859
      %v2861 = vpop.f32.mrf.mxu0
      %v2862 = vpop.f32.mrf.mxu0
      %v2863 = vadd.f32 0.0, %v2862
      %v2864 = vpop.f32.mrf.mxu0
      %2865 = vmatprep.mubr.bf16.mxu0 0
      %2866 = vmatmul.mubr.bf16.gmra.mxu0 %v2791
      %v2867 = vpop.f32.mrf.mxu0
      %v2868 = vadd.f32 0.0, %v2867
      %v2869 = vpop.f32.mrf.mxu0
      %v2870 = vpop.f32.mrf.mxu0
      %v2871 = vadd.f32 0.0, %v2870
      %v2872 = vpop.f32.mrf.mxu0
      %2873 = vmatprep.mubr.bf16.mxu0 0
      %2874 = vmatmul.mubr.bf16.gmra.mxu0 %v2794
      %v2875 = vpop.f32.mrf.mxu0
      %v2876 = vadd.f32 0.0, %v2875
      %v2877 = vpop.f32.mrf.mxu0
      %v2878 = vpop.f32.mrf.mxu0
      %v2879 = vadd.f32 0.0, %v2878
      %v2880 = vpop.f32.mrf.mxu0
      %2881 = vmatprep.mubr.bf16.mxu0 0
      %2882 = vmatmul.mubr.bf16.gmra.mxu0 %v2797
      %v2883 = vpop.f32.mrf.mxu0
      %v2884 = vadd.f32 0.0, %v2883
      %v2885 = vpop.f32.mrf.mxu0
      %v2886 = vpop.f32.mrf.mxu0
      %v2887 = vadd.f32 0.0, %v2886
      %v2888 = vpop.f32.mrf.mxu0
      %2889 = vmatprep.mubr.bf16.mxu0 0
      %2890 = vmatmul.mubr.bf16.gmra.mxu0 %v2800
      %v2891 = vpop.f32.mrf.mxu0
      %v2892 = vadd.f32 0.0, %v2891
      %v2893 = vpop.f32.mrf.mxu0
      %v2894 = vpop.f32.mrf.mxu0
      %v2895 = vadd.f32 0.0, %v2894
      %v2896 = vpop.f32.mrf.mxu0
      %2897 = vmatprep.mubr.bf16.mxu0 0
      %2898 = vmatmul.mubr.bf16.gmra.mxu0 %v2803
      %v2899 = vpop.f32.mrf.mxu0
      %v2900 = vadd.f32 0.0, %v2899
      %v2901 = vpop.f32.mrf.mxu0
      %v2902 = vpop.f32.mrf.mxu0
      %v2903 = vadd.f32 0.0, %v2902
      %v2904 = vpop.f32.mrf.mxu0
      %2905 = vmatprep.mubr.bf16.mxu0 0
      %2906 = vmatmul.mubr.bf16.gmra.mxu0 %v2806
      %v2907 = vpop.f32.mrf.mxu0
      %v2908 = vadd.f32 0.0, %v2907
      %v2909 = vpop.f32.mrf.mxu0
      %v2910 = vpop.f32.mrf.mxu0
      %v2911 = vadd.f32 0.0, %v2910
      %v2912 = vpop.f32.mrf.mxu0
      %2913 = vmatprep.mubr.bf16.mxu0 0
      %2914 = vmatmul.mubr.bf16.gmra.mxu0 %v2809
      %v2915 = vpop.f32.mrf.mxu0
      %v2916 = vadd.f32 0.0, %v2915
      %v2917 = vpop.f32.mrf.mxu0
      %v2918 = vpop.f32.mrf.mxu0
      %v2919 = vadd.f32 0.0, %v2918
      %v2920 = vpop.f32.mrf.mxu0
      %2921 = vmatprep.mubr.bf16.mxu0 0
      %2922 = vmatmul.mubr.bf16.gmra.mxu0 %v2812
      %v2923 = vpop.f32.mrf.mxu0
      %v2924 = vadd.f32 0.0, %v2923
      %v2925 = vpop.f32.mrf.mxu0
      %v2926 = vpop.f32.mrf.mxu0
      %v2927 = vadd.f32 0.0, %v2926
      %v2928 = vpop.f32.mrf.mxu0
      %2929 = vdwg.mxu0
      %v2931 = vsel %vm832, %v2741, 0
      %v2934 = vsel %vm832, %v2742, 0
      %v2937 = vsel %vm832, %v2743, 0
      %v2940 = vsel %vm832, %v2744, 0
      %v2943 = vsel %vm832, %v2745, 0
      %v2946 = vsel %vm832, %v2746, 0
      %v2949 = vsel %vm832, %v2747, 0
      %v2952 = vsel %vm832, %v2748, 0
      %v2955 = vsel %vm832, %v2749, 0
      %v2958 = vsel %vm832, %v2750, 0
      %v2961 = vsel %vm952, %v2751, 0
      %2963 = vmatprep.subr.bf16.mxu0 0
      %2964 = vmatpush1.bf16.msra.mxu0 0
      %2965 = vmatprep.subr.bf16.mxu0 0
      %2966 = vmatpush1.bf16.msra.mxu0 0
      %2967 = vmatprep.subr.bf16.mxu0 0
      %2968 = vmatpush1.bf16.msra.mxu0 0
      %2969 = vmatprep.subr.bf16.mxu0 0
      %2970 = vmatpush1.bf16.msra.mxu0 0
      %2971 = vmatprep.subr.bf16.mxu0 0
      %2972 = vmatpush1.bf16.msra.mxu0 0
      %2973 = vmatprep.subr.bf16.mxu0 0
      %2974 = vmatpush1.bf16.msra.mxu0 0
      %2975 = vmatprep.subr.bf16.mxu0 0
      %2976 = vmatpush1.bf16.msra.mxu0 0
      %2977 = vmatprep.subr.bf16.mxu0 0
      %2978 = vmatpush1.bf16.msra.mxu0 %v2961
      %2979 = vmatprep.subr.bf16.mxu0 0
      %2980 = vmatpush2.bf16.msra.mxu0 0
      %2981 = vmatprep.subr.bf16.mxu0 0
      %2982 = vmatpush2.bf16.msra.mxu0 0
      %2983 = vmatprep.subr.bf16.mxu0 0
      %2984 = vmatpush2.bf16.msra.mxu0 0
      %2985 = vmatprep.subr.bf16.mxu0 0
      %2986 = vmatpush2.bf16.msra.mxu0 0
      %2987 = vmatprep.subr.bf16.mxu0 0
      %2988 = vmatpush2.bf16.msra.mxu0 0
      %2989 = vmatprep.subr.bf16.mxu0 0
      %2990 = vmatpush2.bf16.msra.mxu0 0
      %2991 = vmatprep.subr.bf16.mxu0 0
      %2992 = vmatpush2.bf16.msra.mxu0 0
      %2993 = vmatprep.subr.bf16.mxu0 0
      %2994 = vmatpush2.bf16.msra.mxu0 0
      %2995 = vmatprep.mubr.bf16.mxu0 0
      %2996 = vmatmul.mubr.bf16.gmra.mxu0 %v2931
      %v2997 = vpop.f32.mrf.mxu0
      %v2998 = vadd.f32 %v2852, %v2997
      %v2999 = vpop.f32.mrf.mxu0
      %v3000 = vpop.f32.mrf.mxu0
      %v3001 = vadd.f32 %v2855, %v3000
      %v3002 = vpop.f32.mrf.mxu0
      %3003 = vmatprep.mubr.bf16.mxu0 0
      %3004 = vmatmul.mubr.bf16.gmra.mxu0 %v2934
      %v3005 = vpop.f32.mrf.mxu0
      %v3006 = vadd.f32 %v2860, %v3005
      %v3007 = vpop.f32.mrf.mxu0
      %v3008 = vpop.f32.mrf.mxu0
      %v3009 = vadd.f32 %v2863, %v3008
      %v3010 = vpop.f32.mrf.mxu0
      %3011 = vmatprep.mubr.bf16.mxu0 0
      %3012 = vmatmul.mubr.bf16.gmra.mxu0 %v2937
      %v3013 = vpop.f32.mrf.mxu0
      %v3014 = vadd.f32 %v2868, %v3013
      %v3015 = vpop.f32.mrf.mxu0
      %v3016 = vpop.f32.mrf.mxu0
      %v3017 = vadd.f32 %v2871, %v3016
      %v3018 = vpop.f32.mrf.mxu0
      %3019 = vmatprep.mubr.bf16.mxu0 0
      %3020 = vmatmul.mubr.bf16.gmra.mxu0 %v2940
      %v3021 = vpop.f32.mrf.mxu0
      %v3022 = vadd.f32 %v2876, %v3021
      %v3023 = vpop.f32.mrf.mxu0
      %v3024 = vpop.f32.mrf.mxu0
      %v3025 = vadd.f32 %v2879, %v3024
      %v3026 = vpop.f32.mrf.mxu0
      %3027 = vmatprep.mubr.bf16.mxu0 0
      %3028 = vmatmul.mubr.bf16.gmra.mxu0 %v2943
      %v3029 = vpop.f32.mrf.mxu0
      %v3030 = vadd.f32 %v2884, %v3029
      %v3031 = vpop.f32.mrf.mxu0
      %v3032 = vpop.f32.mrf.mxu0
      %v3033 = vadd.f32 %v2887, %v3032
      %v3034 = vpop.f32.mrf.mxu0
      %3035 = vmatprep.mubr.bf16.mxu0 0
      %3036 = vmatmul.mubr.bf16.gmra.mxu0 %v2946
      %v3037 = vpop.f32.mrf.mxu0
      %v3038 = vadd.f32 %v2892, %v3037
      %v3039 = vpop.f32.mrf.mxu0
      %v3040 = vpop.f32.mrf.mxu0
      %v3041 = vadd.f32 %v2895, %v3040
      %v3042 = vpop.f32.mrf.mxu0
      %3043 = vmatprep.mubr.bf16.mxu0 0
      %3044 = vmatmul.mubr.bf16.gmra.mxu0 %v2949
      %v3045 = vpop.f32.mrf.mxu0
      %v3046 = vadd.f32 %v2900, %v3045
      %v3047 = vpop.f32.mrf.mxu0
      %v3048 = vpop.f32.mrf.mxu0
      %v3049 = vadd.f32 %v2903, %v3048
      %v3050 = vpop.f32.mrf.mxu0
      %3051 = vmatprep.mubr.bf16.mxu0 0
      %3052 = vmatmul.mubr.bf16.gmra.mxu0 %v2952
      %v3053 = vpop.f32.mrf.mxu0
      %v3054 = vadd.f32 %v2908, %v3053
      %v3055 = vpop.f32.mrf.mxu0
      %v3056 = vpop.f32.mrf.mxu0
      %v3057 = vadd.f32 %v2911, %v3056
      %v3058 = vpop.f32.mrf.mxu0
      %3059 = vmatprep.mubr.bf16.mxu0 0
      %3060 = vmatmul.mubr.bf16.gmra.mxu0 %v2955
      %v3061 = vpop.f32.mrf.mxu0
      %v3062 = vadd.f32 %v2916, %v3061
      %v3063 = vpop.f32.mrf.mxu0
      %v3064 = vpop.f32.mrf.mxu0
      %v3065 = vadd.f32 %v2919, %v3064
      %v3066 = vpop.f32.mrf.mxu0
      %3067 = vmatprep.mubr.bf16.mxu0 0
      %3068 = vmatmul.mubr.bf16.gmra.mxu0 %v2958
      %v3069 = vpop.f32.mrf.mxu0
      %v3070 = vadd.f32 %v2924, %v3069
      %v3071 = vpop.f32.mrf.mxu0
      %v3072 = vpop.f32.mrf.mxu0
      %v3073 = vadd.f32 %v2927, %v3072
      %v3074 = vpop.f32.mrf.mxu0
      %3075 = vdwg.mxu0
      %v3076 = vld [vmem:[#allocation3 + $0x9] sm:$0xff]
      %v3077 = vld [vmem:[#allocation3 + $0x11] sm:$0xff]
      %v3078 = vld [vmem:[#allocation3 + $0x19] sm:$0xff]
      %v3079 = vld [vmem:[#allocation3 + $0x21] sm:$0xff]
      %v3080 = vld [vmem:[#allocation3 + $0x29] sm:$0xff]
      %v3081 = vld [vmem:[#allocation3 + $0x31] sm:$0xff]
      %v3082 = vld [vmem:[#allocation3 + $0x39] sm:$0xff]
      %v3083 = vld [vmem:[#allocation3 + $0x41] sm:$0xff]
      %v3084 = vld [vmem:[#allocation3 + $0x49] sm:$0xff]
      %v3085 = vld [vmem:[#allocation3 + $0x51] sm:$0xff]
      %v3086 = vld [vmem:[#allocation3 + $0x59] sm:$0xff]
      %v3087 = vld [vmem:[#allocation3 + $0x61] sm:$0xff]
      %v3088 = vld [vmem:[#allocation3 + $0x69] sm:$0xff]
      %v3089 = vld [vmem:[#allocation3 + $0x71] sm:$0xff]
      %v3090 = vld [vmem:[#allocation3 + $0x79] sm:$0xff]
      %v3091 = vld [vmem:[#allocation3 + $0x81] sm:$0xff]
      %v3092 = vld [vmem:[#allocation3 + $0x89] sm:$0xff]
      %v3093 = vld [vmem:[#allocation3 + $0x91] sm:$0xff]
      %v3094 = vld [vmem:[#allocation3 + $0x99] sm:$0xff]
      %v3095 = vld [vmem:[#allocation3 + $0xa1] sm:$0xff]
      %v3096 = vpack.c.bf16 %v3077, %v3076
      %v3097 = vpack.c.bf16 %v3079, %v3078
      %v3098 = vpack.c.bf16 %v3081, %v3080
      %v3099 = vpack.c.bf16 %v3083, %v3082
      %v3100 = vpack.c.bf16 %v3085, %v3084
      %v3101 = vpack.c.bf16 %v3087, %v3086
      %v3102 = vpack.c.bf16 %v3089, %v3088
      %v3103 = vpack.c.bf16 %v3091, %v3090
      %v3104 = vpack.c.bf16 %v3093, %v3092
      %v3105 = vpack.c.bf16 %v3095, %v3094
      %s3106 = scalar_lea.vmem %s7, 4
      %v3107 = vld [vmem:[%s3106] sm:$0x3]
      %v3109 = vsel %vm832, %v3096, 0
      %v3112 = vsel %vm832, %v3097, 0
      %v3115 = vsel %vm832, %v3098, 0
      %v3118 = vsel %vm832, %v3099, 0
      %v3121 = vsel %vm832, %v3100, 0
      %v3124 = vsel %vm832, %v3101, 0
      %v3127 = vsel %vm832, %v3102, 0
      %v3130 = vsel %vm832, %v3103, 0
      %v3133 = vsel %vm832, %v3104, 0
      %v3136 = vsel %vm832, %v3105, 0
      %v3139 = vsel %vm952, %v3107, 0
      %3141 = vmatprep.subr.bf16.mxu0 0
      %3142 = vmatpush1.bf16.msra.mxu0 0
      %3143 = vmatprep.subr.bf16.mxu0 0
      %3144 = vmatpush1.bf16.msra.mxu0 0
      %3145 = vmatprep.subr.bf16.mxu0 0
      %3146 = vmatpush1.bf16.msra.mxu0 0
      %3147 = vmatprep.subr.bf16.mxu0 0
      %3148 = vmatpush1.bf16.msra.mxu0 0
      %3149 = vmatprep.subr.bf16.mxu0 0
      %3150 = vmatpush1.bf16.msra.mxu0 0
      %3151 = vmatprep.subr.bf16.mxu0 0
      %3152 = vmatpush1.bf16.msra.mxu0 0
      %3153 = vmatprep.subr.bf16.mxu0 0
      %3154 = vmatpush1.bf16.msra.mxu0 0
      %3155 = vmatprep.subr.bf16.mxu0 0
      %3156 = vmatpush1.bf16.msra.mxu0 %v3139
      %3157 = vmatprep.subr.bf16.mxu0 0
      %3158 = vmatpush2.bf16.msra.mxu0 0
      %3159 = vmatprep.subr.bf16.mxu0 0
      %3160 = vmatpush2.bf16.msra.mxu0 0
      %3161 = vmatprep.subr.bf16.mxu0 0
      %3162 = vmatpush2.bf16.msra.mxu0 0
      %3163 = vmatprep.subr.bf16.mxu0 0
      %3164 = vmatpush2.bf16.msra.mxu0 0
      %3165 = vmatprep.subr.bf16.mxu0 0
      %3166 = vmatpush2.bf16.msra.mxu0 0
      %3167 = vmatprep.subr.bf16.mxu0 0
      %3168 = vmatpush2.bf16.msra.mxu0 0
      %3169 = vmatprep.subr.bf16.mxu0 0
      %3170 = vmatpush2.bf16.msra.mxu0 0
      %3171 = vmatprep.subr.bf16.mxu0 0
      %3172 = vmatpush2.bf16.msra.mxu0 0
      %3173 = vmatprep.mubr.bf16.mxu0 0
      %3174 = vmatmul.mubr.bf16.gmra.mxu0 %v3109
      %v3175 = vpop.f32.mrf.mxu0
      %v3176 = vadd.f32 0.0, %v3175
      %v3177 = vpop.f32.mrf.mxu0
      %v3178 = vpop.f32.mrf.mxu0
      %v3179 = vadd.f32 0.0, %v3178
      %v3180 = vpop.f32.mrf.mxu0
      %3181 = vmatprep.mubr.bf16.mxu0 0
      %3182 = vmatmul.mubr.bf16.gmra.mxu0 %v3112
      %v3183 = vpop.f32.mrf.mxu0
      %v3184 = vadd.f32 0.0, %v3183
      %v3185 = vpop.f32.mrf.mxu0
      %v3186 = vpop.f32.mrf.mxu0
      %v3187 = vadd.f32 0.0, %v3186
      %v3188 = vpop.f32.mrf.mxu0
      %3189 = vmatprep.mubr.bf16.mxu0 0
      %3190 = vmatmul.mubr.bf16.gmra.mxu0 %v3115
      %v3191 = vpop.f32.mrf.mxu0
      %v3192 = vadd.f32 0.0, %v3191
      %v3193 = vpop.f32.mrf.mxu0
      %v3194 = vpop.f32.mrf.mxu0
      %v3195 = vadd.f32 0.0, %v3194
      %v3196 = vpop.f32.mrf.mxu0
      %3197 = vmatprep.mubr.bf16.mxu0 0
      %3198 = vmatmul.mubr.bf16.gmra.mxu0 %v3118
      %v3199 = vpop.f32.mrf.mxu0
      %v3200 = vadd.f32 0.0, %v3199
      %v3201 = vpop.f32.mrf.mxu0
      %v3202 = vpop.f32.mrf.mxu0
      %v3203 = vadd.f32 0.0, %v3202
      %v3204 = vpop.f32.mrf.mxu0
      %3205 = vmatprep.mubr.bf16.mxu0 0
      %3206 = vmatmul.mubr.bf16.gmra.mxu0 %v3121
      %v3207 = vpop.f32.mrf.mxu0
      %v3208 = vadd.f32 0.0, %v3207
      %v3209 = vpop.f32.mrf.mxu0
      %v3210 = vpop.f32.mrf.mxu0
      %v3211 = vadd.f32 0.0, %v3210
      %v3212 = vpop.f32.mrf.mxu0
      %3213 = vmatprep.mubr.bf16.mxu0 0
      %3214 = vmatmul.mubr.bf16.gmra.mxu0 %v3124
      %v3215 = vpop.f32.mrf.mxu0
      %v3216 = vadd.f32 0.0, %v3215
      %v3217 = vpop.f32.mrf.mxu0
      %v3218 = vpop.f32.mrf.mxu0
      %v3219 = vadd.f32 0.0, %v3218
      %v3220 = vpop.f32.mrf.mxu0
      %3221 = vmatprep.mubr.bf16.mxu0 0
      %3222 = vmatmul.mubr.bf16.gmra.mxu0 %v3127
      %v3223 = vpop.f32.mrf.mxu0
      %v3224 = vadd.f32 0.0, %v3223
      %v3225 = vpop.f32.mrf.mxu0
      %v3226 = vpop.f32.mrf.mxu0
      %v3227 = vadd.f32 0.0, %v3226
      %v3228 = vpop.f32.mrf.mxu0
      %3229 = vmatprep.mubr.bf16.mxu0 0
      %3230 = vmatmul.mubr.bf16.gmra.mxu0 %v3130
      %v3231 = vpop.f32.mrf.mxu0
      %v3232 = vadd.f32 0.0, %v3231
      %v3233 = vpop.f32.mrf.mxu0
      %v3234 = vpop.f32.mrf.mxu0
      %v3235 = vadd.f32 0.0, %v3234
      %v3236 = vpop.f32.mrf.mxu0
      %3237 = vmatprep.mubr.bf16.mxu0 0
      %3238 = vmatmul.mubr.bf16.gmra.mxu0 %v3133
      %v3239 = vpop.f32.mrf.mxu0
      %v3240 = vadd.f32 0.0, %v3239
      %v3241 = vpop.f32.mrf.mxu0
      %v3242 = vpop.f32.mrf.mxu0
      %v3243 = vadd.f32 0.0, %v3242
      %v3244 = vpop.f32.mrf.mxu0
      %3245 = vmatprep.mubr.bf16.mxu0 0
      %3246 = vmatmul.mubr.bf16.gmra.mxu0 %v3136
      %v3247 = vpop.f32.mrf.mxu0
      %v3248 = vadd.f32 0.0, %v3247
      %v3249 = vpop.f32.mrf.mxu0
      %v3250 = vpop.f32.mrf.mxu0
      %v3251 = vadd.f32 0.0, %v3250
      %v3252 = vpop.f32.mrf.mxu0
      %3253 = vdwg.mxu0
      %v3254 = vadd.f32 %v2998, %v3176
      %v3255 = vadd.f32 %v3001, %v3179
      %v3256 = vadd.f32 %v3006, %v3184
      %v3257 = vadd.f32 %v3009, %v3187
      %v3258 = vadd.f32 %v3014, %v3192
      %v3259 = vadd.f32 %v3017, %v3195
      %v3260 = vadd.f32 %v3022, %v3200
      %v3261 = vadd.f32 %v3025, %v3203
      %v3262 = vadd.f32 %v3030, %v3208
      %v3263 = vadd.f32 %v3033, %v3211
      %v3264 = vadd.f32 %v3038, %v3216
      %v3265 = vadd.f32 %v3041, %v3219
      %v3266 = vadd.f32 %v3046, %v3224
      %v3267 = vadd.f32 %v3049, %v3227
      %v3268 = vadd.f32 %v3054, %v3232
      %v3269 = vadd.f32 %v3057, %v3235
      %v3270 = vadd.f32 %v3062, %v3240
      %v3271 = vadd.f32 %v3065, %v3243
      %v3272 = vadd.f32 %v3070, %v3248
      %v3273 = vadd.f32 %v3073, %v3251
      %v3274 = vld [vmem:[#allocation3 + $0x17] sm:$0xff]
      %v3275 = vld [vmem:[#allocation3 + $0x1f] sm:$0xff]
      %v3276 = vld [vmem:[#allocation3 + $0x27] sm:$0xff]
      %v3277 = vld [vmem:[#allocation3 + $0x2f] sm:$0xff]
      %v3278 = vld [vmem:[#allocation3 + $0x37] sm:$0xff]
      %v3279 = vld [vmem:[#allocation3 + $0x3f] sm:$0xff]
      %v3280 = vld [vmem:[#allocation3 + $0x47] sm:$0xff]
      %v3281 = vld [vmem:[#allocation3 + $0x4f] sm:$0xff]
      %v3282 = vld [vmem:[#allocation3 + $0x57] sm:$0xff]
      %v3283 = vld [vmem:[#allocation3 + $0x5f] sm:$0xff]
      %v3284 = vld [vmem:[#allocation3 + $0x67] sm:$0xff]
      %v3285 = vld [vmem:[#allocation3 + $0x6f] sm:$0xff]
      %v3286 = vld [vmem:[#allocation3 + $0x77] sm:$0xff]
      %v3287 = vld [vmem:[#allocation3 + $0x7f] sm:$0xff]
      %v3288 = vld [vmem:[#allocation3 + $0x87] sm:$0xff]
      %v3289 = vld [vmem:[#allocation3 + $0x8f] sm:$0xff]
      %v3290 = vld [vmem:[#allocation3 + $0x97] sm:$0xff]
      %v3291 = vld [vmem:[#allocation3 + $0x9f] sm:$0xff]
      %v3292 = vld [vmem:[#allocation3 + $0xa7] sm:$0xff]
      %v3293 = vld [vmem:[#allocation3 + $0xaf] sm:$0xff]
      %v3294 = vpack.c.bf16 %v3275, %v3274
      %v3295 = vpack.c.bf16 %v3277, %v3276
      %v3296 = vpack.c.bf16 %v3279, %v3278
      %v3297 = vpack.c.bf16 %v3281, %v3280
      %v3298 = vpack.c.bf16 %v3283, %v3282
      %v3299 = vpack.c.bf16 %v3285, %v3284
      %v3300 = vpack.c.bf16 %v3287, %v3286
      %v3301 = vpack.c.bf16 %v3289, %v3288
      %v3302 = vpack.c.bf16 %v3291, %v3290
      %v3303 = vpack.c.bf16 %v3293, %v3292
      %s3304 = scalar_lea.vmem %s7, 6
      %v3305 = vld [vmem:[%s3304] sm:$0x3]
      %v3307 = vsel %vm832, %v3294, 0
      %v3310 = vsel %vm832, %v3295, 0
      %v3313 = vsel %vm832, %v3296, 0
      %v3316 = vsel %vm832, %v3297, 0
      %v3319 = vsel %vm832, %v3298, 0
      %v3322 = vsel %vm832, %v3299, 0
      %v3325 = vsel %vm832, %v3300, 0
      %v3328 = vsel %vm832, %v3301, 0
      %v3331 = vsel %vm832, %v3302, 0
      %v3334 = vsel %vm832, %v3303, 0
      %v3337 = vsel %vm952, %v3305, 0
      %3339 = vmatprep.subr.bf16.mxu0 0
      %3340 = vmatpush1.bf16.msra.mxu0 0
      %3341 = vmatprep.subr.bf16.mxu0 0
      %3342 = vmatpush1.bf16.msra.mxu0 0
      %3343 = vmatprep.subr.bf16.mxu0 0
      %3344 = vmatpush1.bf16.msra.mxu0 0
      %3345 = vmatprep.subr.bf16.mxu0 0
      %3346 = vmatpush1.bf16.msra.mxu0 0
      %3347 = vmatprep.subr.bf16.mxu0 0
      %3348 = vmatpush1.bf16.msra.mxu0 0
      %3349 = vmatprep.subr.bf16.mxu0 0
      %3350 = vmatpush1.bf16.msra.mxu0 0
      %3351 = vmatprep.subr.bf16.mxu0 0
      %3352 = vmatpush1.bf16.msra.mxu0 0
      %3353 = vmatprep.subr.bf16.mxu0 0
      %3354 = vmatpush1.bf16.msra.mxu0 %v3337
      %3355 = vmatprep.subr.bf16.mxu0 0
      %3356 = vmatpush2.bf16.msra.mxu0 0
      %3357 = vmatprep.subr.bf16.mxu0 0
      %3358 = vmatpush2.bf16.msra.mxu0 0
      %3359 = vmatprep.subr.bf16.mxu0 0
      %3360 = vmatpush2.bf16.msra.mxu0 0
      %3361 = vmatprep.subr.bf16.mxu0 0
      %3362 = vmatpush2.bf16.msra.mxu0 0
      %3363 = vmatprep.subr.bf16.mxu0 0
      %3364 = vmatpush2.bf16.msra.mxu0 0
      %3365 = vmatprep.subr.bf16.mxu0 0
      %3366 = vmatpush2.bf16.msra.mxu0 0
      %3367 = vmatprep.subr.bf16.mxu0 0
      %3368 = vmatpush2.bf16.msra.mxu0 0
      %3369 = vmatprep.subr.bf16.mxu0 0
      %3370 = vmatpush2.bf16.msra.mxu0 0
      %3371 = vmatprep.mubr.bf16.mxu0 0
      %3372 = vmatmul.mubr.bf16.gmra.mxu0 %v3307
      %v3373 = vpop.f32.mrf.mxu0
      %v3374 = vadd.f32 0.0, %v3373
      %v3375 = vpop.f32.mrf.mxu0
      %v3376 = vpop.f32.mrf.mxu0
      %v3377 = vadd.f32 0.0, %v3376
      %v3378 = vpop.f32.mrf.mxu0
      %3379 = vmatprep.mubr.bf16.mxu0 0
      %3380 = vmatmul.mubr.bf16.gmra.mxu0 %v3310
      %v3381 = vpop.f32.mrf.mxu0
      %v3382 = vadd.f32 0.0, %v3381
      %v3383 = vpop.f32.mrf.mxu0
      %v3384 = vpop.f32.mrf.mxu0
      %v3385 = vadd.f32 0.0, %v3384
      %v3386 = vpop.f32.mrf.mxu0
      %3387 = vmatprep.mubr.bf16.mxu0 0
      %3388 = vmatmul.mubr.bf16.gmra.mxu0 %v3313
      %v3389 = vpop.f32.mrf.mxu0
      %v3390 = vadd.f32 0.0, %v3389
      %v3391 = vpop.f32.mrf.mxu0
      %v3392 = vpop.f32.mrf.mxu0
      %v3393 = vadd.f32 0.0, %v3392
      %v3394 = vpop.f32.mrf.mxu0
      %3395 = vmatprep.mubr.bf16.mxu0 0
      %3396 = vmatmul.mubr.bf16.gmra.mxu0 %v3316
      %v3397 = vpop.f32.mrf.mxu0
      %v3398 = vadd.f32 0.0, %v3397
      %v3399 = vpop.f32.mrf.mxu0
      %v3400 = vpop.f32.mrf.mxu0
      %v3401 = vadd.f32 0.0, %v3400
      %v3402 = vpop.f32.mrf.mxu0
      %3403 = vmatprep.mubr.bf16.mxu0 0
      %3404 = vmatmul.mubr.bf16.gmra.mxu0 %v3319
      %v3405 = vpop.f32.mrf.mxu0
      %v3406 = vadd.f32 0.0, %v3405
      %v3407 = vpop.f32.mrf.mxu0
      %v3408 = vpop.f32.mrf.mxu0
      %v3409 = vadd.f32 0.0, %v3408
      %v3410 = vpop.f32.mrf.mxu0
      %3411 = vmatprep.mubr.bf16.mxu0 0
      %3412 = vmatmul.mubr.bf16.gmra.mxu0 %v3322
      %v3413 = vpop.f32.mrf.mxu0
      %v3414 = vadd.f32 0.0, %v3413
      %v3415 = vpop.f32.mrf.mxu0
      %v3416 = vpop.f32.mrf.mxu0
      %v3417 = vadd.f32 0.0, %v3416
      %v3418 = vpop.f32.mrf.mxu0
      %3419 = vmatprep.mubr.bf16.mxu0 0
      %3420 = vmatmul.mubr.bf16.gmra.mxu0 %v3325
      %v3421 = vpop.f32.mrf.mxu0
      %v3422 = vadd.f32 0.0, %v3421
      %v3423 = vpop.f32.mrf.mxu0
      %v3424 = vpop.f32.mrf.mxu0
      %v3425 = vadd.f32 0.0, %v3424
      %v3426 = vpop.f32.mrf.mxu0
      %3427 = vmatprep.mubr.bf16.mxu0 0
      %3428 = vmatmul.mubr.bf16.gmra.mxu0 %v3328
      %v3429 = vpop.f32.mrf.mxu0
      %v3430 = vadd.f32 0.0, %v3429
      %v3431 = vpop.f32.mrf.mxu0
      %v3432 = vpop.f32.mrf.mxu0
      %v3433 = vadd.f32 0.0, %v3432
      %v3434 = vpop.f32.mrf.mxu0
      %3435 = vmatprep.mubr.bf16.mxu0 0
      %3436 = vmatmul.mubr.bf16.gmra.mxu0 %v3331
      %v3437 = vpop.f32.mrf.mxu0
      %v3438 = vadd.f32 0.0, %v3437
      %v3439 = vpop.f32.mrf.mxu0
      %v3440 = vpop.f32.mrf.mxu0
      %v3441 = vadd.f32 0.0, %v3440
      %v3442 = vpop.f32.mrf.mxu0
      %3443 = vmatprep.mubr.bf16.mxu0 0
      %3444 = vmatmul.mubr.bf16.gmra.mxu0 %v3334
      %v3445 = vpop.f32.mrf.mxu0
      %v3446 = vadd.f32 0.0, %v3445
      %v3447 = vpop.f32.mrf.mxu0
      %v3448 = vpop.f32.mrf.mxu0
      %v3449 = vadd.f32 0.0, %v3448
      %v3450 = vpop.f32.mrf.mxu0
      %3451 = vdwg.mxu0
      %v3452 = vadd.f32 %v3254, %v3374
      %v3453 = vadd.f32 %v3255, %v3377
      %v3454 = vadd.f32 %v3256, %v3382
      %v3455 = vadd.f32 %v3257, %v3385
      %v3456 = vadd.f32 %v3258, %v3390
      %v3457 = vadd.f32 %v3259, %v3393
      %v3458 = vadd.f32 %v3260, %v3398
      %v3459 = vadd.f32 %v3261, %v3401
      %v3460 = vadd.f32 %v3262, %v3406
      %v3461 = vadd.f32 %v3263, %v3409
      %v3462 = vadd.f32 %v3264, %v3414
      %v3463 = vadd.f32 %v3265, %v3417
      %v3464 = vadd.f32 %v3266, %v3422
      %v3465 = vadd.f32 %v3267, %v3425
      %v3466 = vadd.f32 %v3268, %v3430
      %v3467 = vadd.f32 %v3269, %v3433
      %v3468 = vadd.f32 %v3270, %v3438
      %v3469 = vadd.f32 %v3271, %v3441
      %v3470 = vadd.f32 %v3272, %v3446
      %v3471 = vadd.f32 %v3273, %v3449
      %v3472 = vld [vmem:[#allocation3 + $0x18] sm:$0xff]
      %v3473 = vld [vmem:[#allocation3 + $0x20] sm:$0xff]
      %v3474 = vld [vmem:[#allocation3 + $0x28] sm:$0xff]
      %v3475 = vld [vmem:[#allocation3 + $0x30] sm:$0xff]
      %v3476 = vld [vmem:[#allocation3 + $0x38] sm:$0xff]
      %v3477 = vld [vmem:[#allocation3 + $0x40] sm:$0xff]
      %v3478 = vld [vmem:[#allocation3 + $0x48] sm:$0xff]
      %v3479 = vld [vmem:[#allocation3 + $0x50] sm:$0xff]
      %v3480 = vld [vmem:[#allocation3 + $0x58] sm:$0xff]
      %v3481 = vld [vmem:[#allocation3 + $0x60] sm:$0xff]
      %v3482 = vld [vmem:[#allocation3 + $0x68] sm:$0xff]
      %v3483 = vld [vmem:[#allocation3 + $0x70] sm:$0xff]
      %v3484 = vld [vmem:[#allocation3 + $0x78] sm:$0xff]
      %v3485 = vld [vmem:[#allocation3 + $0x80] sm:$0xff]
      %v3486 = vld [vmem:[#allocation3 + $0x88] sm:$0xff]
      %v3487 = vld [vmem:[#allocation3 + $0x90] sm:$0xff]
      %v3488 = vld [vmem:[#allocation3 + $0x98] sm:$0xff]
      %v3489 = vld [vmem:[#allocation3 + $0xa0] sm:$0xff]
      %v3490 = vld [vmem:[#allocation3 + $0xa8] sm:$0xff]
      %v3491 = vld [vmem:[#allocation3 + $0xb0] sm:$0xff]
      %v3492 = vpack.c.bf16 %v3473, %v3472
      %v3493 = vpack.c.bf16 %v3475, %v3474
      %v3494 = vpack.c.bf16 %v3477, %v3476
      %v3495 = vpack.c.bf16 %v3479, %v3478
      %v3496 = vpack.c.bf16 %v3481, %v3480
      %v3497 = vpack.c.bf16 %v3483, %v3482
      %v3498 = vpack.c.bf16 %v3485, %v3484
      %v3499 = vpack.c.bf16 %v3487, %v3486
      %v3500 = vpack.c.bf16 %v3489, %v3488
      %v3501 = vpack.c.bf16 %v3491, %v3490
      %s3502 = scalar_lea.vmem %s7, 8
      %v3503 = vld [vmem:[%s3502] sm:$0x3]
      %v3505 = vsel %vm832, %v3492, 0
      %v3508 = vsel %vm832, %v3493, 0
      %v3511 = vsel %vm832, %v3494, 0
      %v3514 = vsel %vm832, %v3495, 0
      %v3517 = vsel %vm832, %v3496, 0
      %v3520 = vsel %vm832, %v3497, 0
      %v3523 = vsel %vm832, %v3498, 0
      %v3526 = vsel %vm832, %v3499, 0
      %v3529 = vsel %vm832, %v3500, 0
      %v3532 = vsel %vm832, %v3501, 0
      %v3535 = vsel %vm952, %v3503, 0
      %3537 = vmatprep.subr.bf16.mxu0 0
      %3538 = vmatpush1.bf16.msra.mxu0 0
      %3539 = vmatprep.subr.bf16.mxu0 0
      %3540 = vmatpush1.bf16.msra.mxu0 0
      %3541 = vmatprep.subr.bf16.mxu0 0
      %3542 = vmatpush1.bf16.msra.mxu0 0
      %3543 = vmatprep.subr.bf16.mxu0 0
      %3544 = vmatpush1.bf16.msra.mxu0 0
      %3545 = vmatprep.subr.bf16.mxu0 0
      %3546 = vmatpush1.bf16.msra.mxu0 0
      %3547 = vmatprep.subr.bf16.mxu0 0
      %3548 = vmatpush1.bf16.msra.mxu0 0
      %3549 = vmatprep.subr.bf16.mxu0 0
      %3550 = vmatpush1.bf16.msra.mxu0 0
      %3551 = vmatprep.subr.bf16.mxu0 0
      %3552 = vmatpush1.bf16.msra.mxu0 %v3535
      %3553 = vmatprep.subr.bf16.mxu0 0
      %3554 = vmatpush2.bf16.msra.mxu0 0
      %3555 = vmatprep.subr.bf16.mxu0 0
      %3556 = vmatpush2.bf16.msra.mxu0 0
      %3557 = vmatprep.subr.bf16.mxu0 0
      %3558 = vmatpush2.bf16.msra.mxu0 0
      %3559 = vmatprep.subr.bf16.mxu0 0
      %3560 = vmatpush2.bf16.msra.mxu0 0
      %3561 = vmatprep.subr.bf16.mxu0 0
      %3562 = vmatpush2.bf16.msra.mxu0 0
      %3563 = vmatprep.subr.bf16.mxu0 0
      %3564 = vmatpush2.bf16.msra.mxu0 0
      %3565 = vmatprep.subr.bf16.mxu0 0
      %3566 = vmatpush2.bf16.msra.mxu0 0
      %3567 = vmatprep.subr.bf16.mxu0 0
      %3568 = vmatpush2.bf16.msra.mxu0 0
      %3569 = vmatprep.mubr.bf16.mxu0 0
      %3570 = vmatmul.mubr.bf16.gmra.mxu0 %v3505
      %v3571 = vpop.f32.mrf.mxu0
      %v3572 = vadd.f32 0.0, %v3571
      %v3573 = vpop.f32.mrf.mxu0
      %v3574 = vpop.f32.mrf.mxu0
      %v3575 = vadd.f32 0.0, %v3574
      %v3576 = vpop.f32.mrf.mxu0
      %3577 = vmatprep.mubr.bf16.mxu0 0
      %3578 = vmatmul.mubr.bf16.gmra.mxu0 %v3508
      %v3579 = vpop.f32.mrf.mxu0
      %v3580 = vadd.f32 0.0, %v3579
      %v3581 = vpop.f32.mrf.mxu0
      %v3582 = vpop.f32.mrf.mxu0
      %v3583 = vadd.f32 0.0, %v3582
      %v3584 = vpop.f32.mrf.mxu0
      %3585 = vmatprep.mubr.bf16.mxu0 0
      %3586 = vmatmul.mubr.bf16.gmra.mxu0 %v3511
      %v3587 = vpop.f32.mrf.mxu0
      %v3588 = vadd.f32 0.0, %v3587
      %v3589 = vpop.f32.mrf.mxu0
      %v3590 = vpop.f32.mrf.mxu0
      %v3591 = vadd.f32 0.0, %v3590
      %v3592 = vpop.f32.mrf.mxu0
      %3593 = vmatprep.mubr.bf16.mxu0 0
      %3594 = vmatmul.mubr.bf16.gmra.mxu0 %v3514
      %v3595 = vpop.f32.mrf.mxu0
      %v3596 = vadd.f32 0.0, %v3595
      %v3597 = vpop.f32.mrf.mxu0
      %v3598 = vpop.f32.mrf.mxu0
      %v3599 = vadd.f32 0.0, %v3598
      %v3600 = vpop.f32.mrf.mxu0
      %3601 = vmatprep.mubr.bf16.mxu0 0
      %3602 = vmatmul.mubr.bf16.gmra.mxu0 %v3517
      %v3603 = vpop.f32.mrf.mxu0
      %v3604 = vadd.f32 0.0, %v3603
      %v3605 = vpop.f32.mrf.mxu0
      %v3606 = vpop.f32.mrf.mxu0
      %v3607 = vadd.f32 0.0, %v3606
      %v3608 = vpop.f32.mrf.mxu0
      %3609 = vmatprep.mubr.bf16.mxu0 0
      %3610 = vmatmul.mubr.bf16.gmra.mxu0 %v3520
      %v3611 = vpop.f32.mrf.mxu0
      %v3612 = vadd.f32 0.0, %v3611
      %v3613 = vpop.f32.mrf.mxu0
      %v3614 = vpop.f32.mrf.mxu0
      %v3615 = vadd.f32 0.0, %v3614
      %v3616 = vpop.f32.mrf.mxu0
      %3617 = vmatprep.mubr.bf16.mxu0 0
      %3618 = vmatmul.mubr.bf16.gmra.mxu0 %v3523
      %v3619 = vpop.f32.mrf.mxu0
      %v3620 = vadd.f32 0.0, %v3619
      %v3621 = vpop.f32.mrf.mxu0
      %v3622 = vpop.f32.mrf.mxu0
      %v3623 = vadd.f32 0.0, %v3622
      %v3624 = vpop.f32.mrf.mxu0
      %3625 = vmatprep.mubr.bf16.mxu0 0
      %3626 = vmatmul.mubr.bf16.gmra.mxu0 %v3526
      %v3627 = vpop.f32.mrf.mxu0
      %v3628 = vadd.f32 0.0, %v3627
      %v3629 = vpop.f32.mrf.mxu0
      %v3630 = vpop.f32.mrf.mxu0
      %v3631 = vadd.f32 0.0, %v3630
      %v3632 = vpop.f32.mrf.mxu0
      %3633 = vmatprep.mubr.bf16.mxu0 0
      %3634 = vmatmul.mubr.bf16.gmra.mxu0 %v3529
      %v3635 = vpop.f32.mrf.mxu0
      %v3636 = vadd.f32 0.0, %v3635
      %v3637 = vpop.f32.mrf.mxu0
      %v3638 = vpop.f32.mrf.mxu0
      %v3639 = vadd.f32 0.0, %v3638
      %v3640 = vpop.f32.mrf.mxu0
      %3641 = vmatprep.mubr.bf16.mxu0 0
      %3642 = vmatmul.mubr.bf16.gmra.mxu0 %v3532
      %v3643 = vpop.f32.mrf.mxu0
      %v3644 = vadd.f32 0.0, %v3643
      %v3645 = vpop.f32.mrf.mxu0
      %v3646 = vpop.f32.mrf.mxu0
      %v3647 = vadd.f32 0.0, %v3646
      %v3648 = vpop.f32.mrf.mxu0
      %3649 = vdwg.mxu0
      %v3650 = vadd.f32 %v3452, %v3572
      %v3651 = vadd.f32 %v3453, %v3575
      %v3652 = vadd.f32 %v3454, %v3580
      %v3653 = vadd.f32 %v3455, %v3583
      %v3654 = vadd.f32 %v3456, %v3588
      %v3655 = vadd.f32 %v3457, %v3591
      %v3656 = vadd.f32 %v3458, %v3596
      %v3657 = vadd.f32 %v3459, %v3599
      %v3658 = vadd.f32 %v3460, %v3604
      %v3659 = vadd.f32 %v3461, %v3607
      %v3660 = vadd.f32 %v3462, %v3612
      %v3661 = vadd.f32 %v3463, %v3615
      %v3662 = vadd.f32 %v3464, %v3620
      %v3663 = vadd.f32 %v3465, %v3623
      %v3664 = vadd.f32 %v3466, %v3628
      %v3665 = vadd.f32 %v3467, %v3631
      %v3666 = vadd.f32 %v3468, %v3636
      %v3667 = vadd.f32 %v3469, %v3639
      %v3668 = vadd.f32 %v3470, %v3644
      %v3669 = vadd.f32 %v3471, %v3647
      %v3670 = vld [vmem:[#allocation3 + $0x19] sm:$0xff]
      %v3671 = vld [vmem:[#allocation3 + $0x21] sm:$0xff]
      %v3672 = vld [vmem:[#allocation3 + $0x29] sm:$0xff]
      %v3673 = vld [vmem:[#allocation3 + $0x31] sm:$0xff]
      %v3674 = vld [vmem:[#allocation3 + $0x39] sm:$0xff]
      %v3675 = vld [vmem:[#allocation3 + $0x41] sm:$0xff]
      %v3676 = vld [vmem:[#allocation3 + $0x49] sm:$0xff]
      %v3677 = vld [vmem:[#allocation3 + $0x51] sm:$0xff]
      %v3678 = vld [vmem:[#allocation3 + $0x59] sm:$0xff]
      %v3679 = vld [vmem:[#allocation3 + $0x61] sm:$0xff]
      %v3680 = vld [vmem:[#allocation3 + $0x69] sm:$0xff]
      %v3681 = vld [vmem:[#allocation3 + $0x71] sm:$0xff]
      %v3682 = vld [vmem:[#allocation3 + $0x79] sm:$0xff]
      %v3683 = vld [vmem:[#allocation3 + $0x81] sm:$0xff]
      %v3684 = vld [vmem:[#allocation3 + $0x89] sm:$0xff]
      %v3685 = vld [vmem:[#allocation3 + $0x91] sm:$0xff]
      %v3686 = vld [vmem:[#allocation3 + $0x99] sm:$0xff]
      %v3687 = vld [vmem:[#allocation3 + $0xa1] sm:$0xff]
      %v3688 = vld [vmem:[#allocation3 + $0xa9] sm:$0xff]
      %v3689 = vld [vmem:[#allocation3 + $0xb1] sm:$0xff]
      %v3690 = vpack.c.bf16 %v3671, %v3670
      %v3691 = vpack.c.bf16 %v3673, %v3672
      %v3692 = vpack.c.bf16 %v3675, %v3674
      %v3693 = vpack.c.bf16 %v3677, %v3676
      %v3694 = vpack.c.bf16 %v3679, %v3678
      %v3695 = vpack.c.bf16 %v3681, %v3680
      %v3696 = vpack.c.bf16 %v3683, %v3682
      %v3697 = vpack.c.bf16 %v3685, %v3684
      %v3698 = vpack.c.bf16 %v3687, %v3686
      %v3699 = vpack.c.bf16 %v3689, %v3688
      %s3700 = scalar_lea.vmem %s7, 10
      %v3701 = vld [vmem:[%s3700] sm:$0x3]
      %v3703 = vsel %vm832, %v3690, 0
      %v3706 = vsel %vm832, %v3691, 0
      %v3709 = vsel %vm832, %v3692, 0
      %v3712 = vsel %vm832, %v3693, 0
      %v3715 = vsel %vm832, %v3694, 0
      %v3718 = vsel %vm832, %v3695, 0
      %v3721 = vsel %vm832, %v3696, 0
      %v3724 = vsel %vm832, %v3697, 0
      %v3727 = vsel %vm832, %v3698, 0
      %v3730 = vsel %vm832, %v3699, 0
      %v3733 = vsel %vm952, %v3701, 0
      %3735 = vmatprep.subr.bf16.mxu0 0
      %3736 = vmatpush1.bf16.msra.mxu0 0
      %3737 = vmatprep.subr.bf16.mxu0 0
      %3738 = vmatpush1.bf16.msra.mxu0 0
      %3739 = vmatprep.subr.bf16.mxu0 0
      %3740 = vmatpush1.bf16.msra.mxu0 0
      %3741 = vmatprep.subr.bf16.mxu0 0
      %3742 = vmatpush1.bf16.msra.mxu0 0
      %3743 = vmatprep.subr.bf16.mxu0 0
      %3744 = vmatpush1.bf16.msra.mxu0 0
      %3745 = vmatprep.subr.bf16.mxu0 0
      %3746 = vmatpush1.bf16.msra.mxu0 0
      %3747 = vmatprep.subr.bf16.mxu0 0
      %3748 = vmatpush1.bf16.msra.mxu0 0
      %3749 = vmatprep.subr.bf16.mxu0 0
      %3750 = vmatpush1.bf16.msra.mxu0 %v3733
      %3751 = vmatprep.subr.bf16.mxu0 0
      %3752 = vmatpush2.bf16.msra.mxu0 0
      %3753 = vmatprep.subr.bf16.mxu0 0
      %3754 = vmatpush2.bf16.msra.mxu0 0
      %3755 = vmatprep.subr.bf16.mxu0 0
      %3756 = vmatpush2.bf16.msra.mxu0 0
      %3757 = vmatprep.subr.bf16.mxu0 0
      %3758 = vmatpush2.bf16.msra.mxu0 0
      %3759 = vmatprep.subr.bf16.mxu0 0
      %3760 = vmatpush2.bf16.msra.mxu0 0
      %3761 = vmatprep.subr.bf16.mxu0 0
      %3762 = vmatpush2.bf16.msra.mxu0 0
      %3763 = vmatprep.subr.bf16.mxu0 0
      %3764 = vmatpush2.bf16.msra.mxu0 0
      %3765 = vmatprep.subr.bf16.mxu0 0
      %3766 = vmatpush2.bf16.msra.mxu0 0
      %3767 = vmatprep.mubr.bf16.mxu0 0
      %3768 = vmatmul.mubr.bf16.gmra.mxu0 %v3703
      %v3769 = vpop.f32.mrf.mxu0
      %v3770 = vadd.f32 0.0, %v3769
      %v3771 = vpop.f32.mrf.mxu0
      %v3772 = vpop.f32.mrf.mxu0
      %v3773 = vadd.f32 0.0, %v3772
      %v3774 = vpop.f32.mrf.mxu0
      %3775 = vmatprep.mubr.bf16.mxu0 0
      %3776 = vmatmul.mubr.bf16.gmra.mxu0 %v3706
      %v3777 = vpop.f32.mrf.mxu0
      %v3778 = vadd.f32 0.0, %v3777
      %v3779 = vpop.f32.mrf.mxu0
      %v3780 = vpop.f32.mrf.mxu0
      %v3781 = vadd.f32 0.0, %v3780
      %v3782 = vpop.f32.mrf.mxu0
      %3783 = vmatprep.mubr.bf16.mxu0 0
      %3784 = vmatmul.mubr.bf16.gmra.mxu0 %v3709
      %v3785 = vpop.f32.mrf.mxu0
      %v3786 = vadd.f32 0.0, %v3785
      %v3787 = vpop.f32.mrf.mxu0
      %v3788 = vpop.f32.mrf.mxu0
      %v3789 = vadd.f32 0.0, %v3788
      %v3790 = vpop.f32.mrf.mxu0
      %3791 = vmatprep.mubr.bf16.mxu0 0
      %3792 = vmatmul.mubr.bf16.gmra.mxu0 %v3712
      %v3793 = vpop.f32.mrf.mxu0
      %v3794 = vadd.f32 0.0, %v3793
      %v3795 = vpop.f32.mrf.mxu0
      %v3796 = vpop.f32.mrf.mxu0
      %v3797 = vadd.f32 0.0, %v3796
      %v3798 = vpop.f32.mrf.mxu0
      %3799 = vmatprep.mubr.bf16.mxu0 0
      %3800 = vmatmul.mubr.bf16.gmra.mxu0 %v3715
      %v3801 = vpop.f32.mrf.mxu0
      %v3802 = vadd.f32 0.0, %v3801
      %v3803 = vpop.f32.mrf.mxu0
      %v3804 = vpop.f32.mrf.mxu0
      %v3805 = vadd.f32 0.0, %v3804
      %v3806 = vpop.f32.mrf.mxu0
      %3807 = vmatprep.mubr.bf16.mxu0 0
      %3808 = vmatmul.mubr.bf16.gmra.mxu0 %v3718
      %v3809 = vpop.f32.mrf.mxu0
      %v3810 = vadd.f32 0.0, %v3809
      %v3811 = vpop.f32.mrf.mxu0
      %v3812 = vpop.f32.mrf.mxu0
      %v3813 = vadd.f32 0.0, %v3812
      %v3814 = vpop.f32.mrf.mxu0
      %3815 = vmatprep.mubr.bf16.mxu0 0
      %3816 = vmatmul.mubr.bf16.gmra.mxu0 %v3721
      %v3817 = vpop.f32.mrf.mxu0
      %v3818 = vadd.f32 0.0, %v3817
      %v3819 = vpop.f32.mrf.mxu0
      %v3820 = vpop.f32.mrf.mxu0
      %v3821 = vadd.f32 0.0, %v3820
      %v3822 = vpop.f32.mrf.mxu0
      %3823 = vmatprep.mubr.bf16.mxu0 0
      %3824 = vmatmul.mubr.bf16.gmra.mxu0 %v3724
      %v3825 = vpop.f32.mrf.mxu0
      %v3826 = vadd.f32 0.0, %v3825
      %v3827 = vpop.f32.mrf.mxu0
      %v3828 = vpop.f32.mrf.mxu0
      %v3829 = vadd.f32 0.0, %v3828
      %v3830 = vpop.f32.mrf.mxu0
      %3831 = vmatprep.mubr.bf16.mxu0 0
      %3832 = vmatmul.mubr.bf16.gmra.mxu0 %v3727
      %v3833 = vpop.f32.mrf.mxu0
      %v3834 = vadd.f32 0.0, %v3833
      %v3835 = vpop.f32.mrf.mxu0
      %v3836 = vpop.f32.mrf.mxu0
      %v3837 = vadd.f32 0.0, %v3836
      %v3838 = vpop.f32.mrf.mxu0
      %3839 = vmatprep.mubr.bf16.mxu0 0
      %3840 = vmatmul.mubr.bf16.gmra.mxu0 %v3730
      %v3841 = vpop.f32.mrf.mxu0
      %v3842 = vadd.f32 0.0, %v3841
      %v3843 = vpop.f32.mrf.mxu0
      %v3844 = vpop.f32.mrf.mxu0
      %v3845 = vadd.f32 0.0, %v3844
      %v3846 = vpop.f32.mrf.mxu0
      %3847 = vdwg.mxu0
      %v3848 = vadd.f32 %v3650, %v3770
      %v3849 = vadd.f32 %v3651, %v3773
      %v3850 = vadd.f32 %v3652, %v3778
      %v3851 = vadd.f32 %v3653, %v3781
      %v3852 = vadd.f32 %v3654, %v3786
      %v3853 = vadd.f32 %v3655, %v3789
      %v3854 = vadd.f32 %v3656, %v3794
      %v3855 = vadd.f32 %v3657, %v3797
      %v3856 = vadd.f32 %v3658, %v3802
      %v3857 = vadd.f32 %v3659, %v3805
      %v3858 = vadd.f32 %v3660, %v3810
      %v3859 = vadd.f32 %v3661, %v3813
      %v3860 = vadd.f32 %v3662, %v3818
      %v3861 = vadd.f32 %v3663, %v3821
      %v3862 = vadd.f32 %v3664, %v3826
      %v3863 = vadd.f32 %v3665, %v3829
      %v3864 = vadd.f32 %v3666, %v3834
      %v3865 = vadd.f32 %v3667, %v3837
      %v3866 = vadd.f32 %v3668, %v3842
      %v3867 = vadd.f32 %v3669, %v3845
      %v3868 = vld [vmem:[#allocation3 + $0x27] sm:$0xff]
      %v3869 = vld [vmem:[#allocation3 + $0x2f] sm:$0xff]
      %v3870 = vld [vmem:[#allocation3 + $0x37] sm:$0xff]
      %v3871 = vld [vmem:[#allocation3 + $0x3f] sm:$0xff]
      %v3872 = vld [vmem:[#allocation3 + $0x47] sm:$0xff]
      %v3873 = vld [vmem:[#allocation3 + $0x4f] sm:$0xff]
      %v3874 = vld [vmem:[#allocation3 + $0x57] sm:$0xff]
      %v3875 = vld [vmem:[#allocation3 + $0x5f] sm:$0xff]
      %v3876 = vld [vmem:[#allocation3 + $0x67] sm:$0xff]
      %v3877 = vld [vmem:[#allocation3 + $0x6f] sm:$0xff]
      %v3878 = vld [vmem:[#allocation3 + $0x77] sm:$0xff]
      %v3879 = vld [vmem:[#allocation3 + $0x7f] sm:$0xff]
      %v3880 = vld [vmem:[#allocation3 + $0x87] sm:$0xff]
      %v3881 = vld [vmem:[#allocation3 + $0x8f] sm:$0xff]
      %v3882 = vld [vmem:[#allocation3 + $0x97] sm:$0xff]
      %v3883 = vld [vmem:[#allocation3 + $0x9f] sm:$0xff]
      %v3884 = vld [vmem:[#allocation3 + $0xa7] sm:$0xff]
      %v3885 = vld [vmem:[#allocation3 + $0xaf] sm:$0xff]
      %v3886 = vld [vmem:[#allocation3 + $0xb7] sm:$0xff]
      %v3887 = vld [vmem:[#allocation3 + $0xbf] sm:$0xff]
      %v3888 = vpack.c.bf16 %v3869, %v3868
      %v3889 = vpack.c.bf16 %v3871, %v3870
      %v3890 = vpack.c.bf16 %v3873, %v3872
      %v3891 = vpack.c.bf16 %v3875, %v3874
      %v3892 = vpack.c.bf16 %v3877, %v3876
      %v3893 = vpack.c.bf16 %v3879, %v3878
      %v3894 = vpack.c.bf16 %v3881, %v3880
      %v3895 = vpack.c.bf16 %v3883, %v3882
      %v3896 = vpack.c.bf16 %v3885, %v3884
      %v3897 = vpack.c.bf16 %v3887, %v3886
      %s3898 = scalar_lea.vmem %s7, 12
      %v3899 = vld [vmem:[%s3898] sm:$0x3]
      %v3901 = vsel %vm832, %v3888, 0
      %v3904 = vsel %vm832, %v3889, 0
      %v3907 = vsel %vm832, %v3890, 0
      %v3910 = vsel %vm832, %v3891, 0
      %v3913 = vsel %vm832, %v3892, 0
      %v3916 = vsel %vm832, %v3893, 0
      %v3919 = vsel %vm832, %v3894, 0
      %v3922 = vsel %vm832, %v3895, 0
      %v3925 = vsel %vm832, %v3896, 0
      %v3928 = vsel %vm832, %v3897, 0
      %v3931 = vsel %vm952, %v3899, 0
      %3933 = vmatprep.subr.bf16.mxu0 0
      %3934 = vmatpush1.bf16.msra.mxu0 0
      %3935 = vmatprep.subr.bf16.mxu0 0
      %3936 = vmatpush1.bf16.msra.mxu0 0
      %3937 = vmatprep.subr.bf16.mxu0 0
      %3938 = vmatpush1.bf16.msra.mxu0 0
      %3939 = vmatprep.subr.bf16.mxu0 0
      %3940 = vmatpush1.bf16.msra.mxu0 0
      %3941 = vmatprep.subr.bf16.mxu0 0
      %3942 = vmatpush1.bf16.msra.mxu0 0
      %3943 = vmatprep.subr.bf16.mxu0 0
      %3944 = vmatpush1.bf16.msra.mxu0 0
      %3945 = vmatprep.subr.bf16.mxu0 0
      %3946 = vmatpush1.bf16.msra.mxu0 0
      %3947 = vmatprep.subr.bf16.mxu0 0
      %3948 = vmatpush1.bf16.msra.mxu0 %v3931
      %3949 = vmatprep.subr.bf16.mxu0 0
      %3950 = vmatpush2.bf16.msra.mxu0 0
      %3951 = vmatprep.subr.bf16.mxu0 0
      %3952 = vmatpush2.bf16.msra.mxu0 0
      %3953 = vmatprep.subr.bf16.mxu0 0
      %3954 = vmatpush2.bf16.msra.mxu0 0
      %3955 = vmatprep.subr.bf16.mxu0 0
      %3956 = vmatpush2.bf16.msra.mxu0 0
      %3957 = vmatprep.subr.bf16.mxu0 0
      %3958 = vmatpush2.bf16.msra.mxu0 0
      %3959 = vmatprep.subr.bf16.mxu0 0
      %3960 = vmatpush2.bf16.msra.mxu0 0
      %3961 = vmatprep.subr.bf16.mxu0 0
      %3962 = vmatpush2.bf16.msra.mxu0 0
      %3963 = vmatprep.subr.bf16.mxu0 0
      %3964 = vmatpush2.bf16.msra.mxu0 0
      %3965 = vmatprep.mubr.bf16.mxu0 0
      %3966 = vmatmul.mubr.bf16.gmra.mxu0 %v3901
      %v3967 = vpop.f32.mrf.mxu0
      %v3968 = vadd.f32 0.0, %v3967
      %v3969 = vpop.f32.mrf.mxu0
      %v3970 = vpop.f32.mrf.mxu0
      %v3971 = vadd.f32 0.0, %v3970
      %v3972 = vpop.f32.mrf.mxu0
      %3973 = vmatprep.mubr.bf16.mxu0 0
      %3974 = vmatmul.mubr.bf16.gmra.mxu0 %v3904
      %v3975 = vpop.f32.mrf.mxu0
      %v3976 = vadd.f32 0.0, %v3975
      %v3977 = vpop.f32.mrf.mxu0
      %v3978 = vpop.f32.mrf.mxu0
      %v3979 = vadd.f32 0.0, %v3978
      %v3980 = vpop.f32.mrf.mxu0
      %3981 = vmatprep.mubr.bf16.mxu0 0
      %3982 = vmatmul.mubr.bf16.gmra.mxu0 %v3907
      %v3983 = vpop.f32.mrf.mxu0
      %v3984 = vadd.f32 0.0, %v3983
      %v3985 = vpop.f32.mrf.mxu0
      %v3986 = vpop.f32.mrf.mxu0
      %v3987 = vadd.f32 0.0, %v3986
      %v3988 = vpop.f32.mrf.mxu0
      %3989 = vmatprep.mubr.bf16.mxu0 0
      %3990 = vmatmul.mubr.bf16.gmra.mxu0 %v3910
      %v3991 = vpop.f32.mrf.mxu0
      %v3992 = vadd.f32 0.0, %v3991
      %v3993 = vpop.f32.mrf.mxu0
      %v3994 = vpop.f32.mrf.mxu0
      %v3995 = vadd.f32 0.0, %v3994
      %v3996 = vpop.f32.mrf.mxu0
      %3997 = vmatprep.mubr.bf16.mxu0 0
      %3998 = vmatmul.mubr.bf16.gmra.mxu0 %v3913
      %v3999 = vpop.f32.mrf.mxu0
      %v4000 = vadd.f32 0.0, %v3999
      %v4001 = vpop.f32.mrf.mxu0
      %v4002 = vpop.f32.mrf.mxu0
      %v4003 = vadd.f32 0.0, %v4002
      %v4004 = vpop.f32.mrf.mxu0
      %4005 = vmatprep.mubr.bf16.mxu0 0
      %4006 = vmatmul.mubr.bf16.gmra.mxu0 %v3916
      %v4007 = vpop.f32.mrf.mxu0
      %v4008 = vadd.f32 0.0, %v4007
      %v4009 = vpop.f32.mrf.mxu0
      %v4010 = vpop.f32.mrf.mxu0
      %v4011 = vadd.f32 0.0, %v4010
      %v4012 = vpop.f32.mrf.mxu0
      %4013 = vmatprep.mubr.bf16.mxu0 0
      %4014 = vmatmul.mubr.bf16.gmra.mxu0 %v3919
      %v4015 = vpop.f32.mrf.mxu0
      %v4016 = vadd.f32 0.0, %v4015
      %v4017 = vpop.f32.mrf.mxu0
      %v4018 = vpop.f32.mrf.mxu0
      %v4019 = vadd.f32 0.0, %v4018
      %v4020 = vpop.f32.mrf.mxu0
      %4021 = vmatprep.mubr.bf16.mxu0 0
      %4022 = vmatmul.mubr.bf16.gmra.mxu0 %v3922
      %v4023 = vpop.f32.mrf.mxu0
      %v4024 = vadd.f32 0.0, %v4023
      %v4025 = vpop.f32.mrf.mxu0
      %v4026 = vpop.f32.mrf.mxu0
      %v4027 = vadd.f32 0.0, %v4026
      %v4028 = vpop.f32.mrf.mxu0
      %4029 = vmatprep.mubr.bf16.mxu0 0
      %4030 = vmatmul.mubr.bf16.gmra.mxu0 %v3925
      %v4031 = vpop.f32.mrf.mxu0
      %v4032 = vadd.f32 0.0, %v4031
      %v4033 = vpop.f32.mrf.mxu0
      %v4034 = vpop.f32.mrf.mxu0
      %v4035 = vadd.f32 0.0, %v4034
      %v4036 = vpop.f32.mrf.mxu0
      %4037 = vmatprep.mubr.bf16.mxu0 0
      %4038 = vmatmul.mubr.bf16.gmra.mxu0 %v3928
      %v4039 = vpop.f32.mrf.mxu0
      %v4040 = vadd.f32 0.0, %v4039
      %v4041 = vpop.f32.mrf.mxu0
      %v4042 = vpop.f32.mrf.mxu0
      %v4043 = vadd.f32 0.0, %v4042
      %v4044 = vpop.f32.mrf.mxu0
      %4045 = vdwg.mxu0
      %v4046 = vadd.f32 %v3848, %v3968
      %v4047 = vadd.f32 %v3849, %v3971
      %v4048 = vadd.f32 %v3850, %v3976
      %v4049 = vadd.f32 %v3851, %v3979
      %v4050 = vadd.f32 %v3852, %v3984
      %v4051 = vadd.f32 %v3853, %v3987
      %v4052 = vadd.f32 %v3854, %v3992
      %v4053 = vadd.f32 %v3855, %v3995
      %v4054 = vadd.f32 %v3856, %v4000
      %v4055 = vadd.f32 %v3857, %v4003
      %v4056 = vadd.f32 %v3858, %v4008
      %v4057 = vadd.f32 %v3859, %v4011
      %v4058 = vadd.f32 %v3860, %v4016
      %v4059 = vadd.f32 %v3861, %v4019
      %v4060 = vadd.f32 %v3862, %v4024
      %v4061 = vadd.f32 %v3863, %v4027
      %v4062 = vadd.f32 %v3864, %v4032
      %v4063 = vadd.f32 %v3865, %v4035
      %v4064 = vadd.f32 %v3866, %v4040
      %v4065 = vadd.f32 %v3867, %v4043
      %v4066 = vld [vmem:[#allocation3 + $0x28] sm:$0xff]
      %v4067 = vld [vmem:[#allocation3 + $0x30] sm:$0xff]
      %v4068 = vld [vmem:[#allocation3 + $0x38] sm:$0xff]
      %v4069 = vld [vmem:[#allocation3 + $0x40] sm:$0xff]
      %v4070 = vld [vmem:[#allocation3 + $0x48] sm:$0xff]
      %v4071 = vld [vmem:[#allocation3 + $0x50] sm:$0xff]
      %v4072 = vld [vmem:[#allocation3 + $0x58] sm:$0xff]
      %v4073 = vld [vmem:[#allocation3 + $0x60] sm:$0xff]
      %v4074 = vld [vmem:[#allocation3 + $0x68] sm:$0xff]
      %v4075 = vld [vmem:[#allocation3 + $0x70] sm:$0xff]
      %v4076 = vld [vmem:[#allocation3 + $0x78] sm:$0xff]
      %v4077 = vld [vmem:[#allocation3 + $0x80] sm:$0xff]
      %v4078 = vld [vmem:[#allocation3 + $0x88] sm:$0xff]
      %v4079 = vld [vmem:[#allocation3 + $0x90] sm:$0xff]
      %v4080 = vld [vmem:[#allocation3 + $0x98] sm:$0xff]
      %v4081 = vld [vmem:[#allocation3 + $0xa0] sm:$0xff]
      %v4082 = vld [vmem:[#allocation3 + $0xa8] sm:$0xff]
      %v4083 = vld [vmem:[#allocation3 + $0xb0] sm:$0xff]
      %v4084 = vld [vmem:[#allocation3 + $0xb8] sm:$0xff]
      %v4085 = vld [vmem:[#allocation3 + $0xc0] sm:$0xff]
      %v4086 = vpack.c.bf16 %v4067, %v4066
      %v4087 = vpack.c.bf16 %v4069, %v4068
      %v4088 = vpack.c.bf16 %v4071, %v4070
      %v4089 = vpack.c.bf16 %v4073, %v4072
      %v4090 = vpack.c.bf16 %v4075, %v4074
      %v4091 = vpack.c.bf16 %v4077, %v4076
      %v4092 = vpack.c.bf16 %v4079, %v4078
      %v4093 = vpack.c.bf16 %v4081, %v4080
      %v4094 = vpack.c.bf16 %v4083, %v4082
      %v4095 = vpack.c.bf16 %v4085, %v4084
      %s4096 = scalar_lea.vmem %s7, 14
      %v4097 = vld [vmem:[%s4096] sm:$0x3]
      %v4099 = vsel %vm832, %v4086, 0
      %v4102 = vsel %vm832, %v4087, 0
      %v4105 = vsel %vm832, %v4088, 0
      %v4108 = vsel %vm832, %v4089, 0
      %v4111 = vsel %vm832, %v4090, 0
      %v4114 = vsel %vm832, %v4091, 0
      %v4117 = vsel %vm832, %v4092, 0
      %v4120 = vsel %vm832, %v4093, 0
      %v4123 = vsel %vm832, %v4094, 0
      %v4126 = vsel %vm832, %v4095, 0
      %v4129 = vsel %vm952, %v4097, 0
      %4131 = vmatprep.subr.bf16.mxu0 0
      %4132 = vmatpush1.bf16.msra.mxu0 0
      %4133 = vmatprep.subr.bf16.mxu0 0
      %4134 = vmatpush1.bf16.msra.mxu0 0
      %4135 = vmatprep.subr.bf16.mxu0 0
      %4136 = vmatpush1.bf16.msra.mxu0 0
      %4137 = vmatprep.subr.bf16.mxu0 0
      %4138 = vmatpush1.bf16.msra.mxu0 0
      %4139 = vmatprep.subr.bf16.mxu0 0
      %4140 = vmatpush1.bf16.msra.mxu0 0
      %4141 = vmatprep.subr.bf16.mxu0 0
      %4142 = vmatpush1.bf16.msra.mxu0 0
      %4143 = vmatprep.subr.bf16.mxu0 0
      %4144 = vmatpush1.bf16.msra.mxu0 0
      %4145 = vmatprep.subr.bf16.mxu0 0
      %4146 = vmatpush1.bf16.msra.mxu0 %v4129
      %4147 = vmatprep.subr.bf16.mxu0 0
      %4148 = vmatpush2.bf16.msra.mxu0 0
      %4149 = vmatprep.subr.bf16.mxu0 0
      %4150 = vmatpush2.bf16.msra.mxu0 0
      %4151 = vmatprep.subr.bf16.mxu0 0
      %4152 = vmatpush2.bf16.msra.mxu0 0
      %4153 = vmatprep.subr.bf16.mxu0 0
      %4154 = vmatpush2.bf16.msra.mxu0 0
      %4155 = vmatprep.subr.bf16.mxu0 0
      %4156 = vmatpush2.bf16.msra.mxu0 0
      %4157 = vmatprep.subr.bf16.mxu0 0
      %4158 = vmatpush2.bf16.msra.mxu0 0
      %4159 = vmatprep.subr.bf16.mxu0 0
      %4160 = vmatpush2.bf16.msra.mxu0 0
      %4161 = vmatprep.subr.bf16.mxu0 0
      %4162 = vmatpush2.bf16.msra.mxu0 0
      %4163 = vmatprep.mubr.bf16.mxu0 0
      %4164 = vmatmul.mubr.bf16.gmra.mxu0 %v4099
      %v4165 = vpop.f32.mrf.mxu0
      %v4166 = vadd.f32 0.0, %v4165
      %v4167 = vpop.f32.mrf.mxu0
      %v4168 = vpop.f32.mrf.mxu0
      %v4169 = vadd.f32 0.0, %v4168
      %v4170 = vpop.f32.mrf.mxu0
      %4171 = vmatprep.mubr.bf16.mxu0 0
      %4172 = vmatmul.mubr.bf16.gmra.mxu0 %v4102
      %v4173 = vpop.f32.mrf.mxu0
      %v4174 = vadd.f32 0.0, %v4173
      %v4175 = vpop.f32.mrf.mxu0
      %v4176 = vpop.f32.mrf.mxu0
      %v4177 = vadd.f32 0.0, %v4176
      %v4178 = vpop.f32.mrf.mxu0
      %4179 = vmatprep.mubr.bf16.mxu0 0
      %4180 = vmatmul.mubr.bf16.gmra.mxu0 %v4105
      %v4181 = vpop.f32.mrf.mxu0
      %v4182 = vadd.f32 0.0, %v4181
      %v4183 = vpop.f32.mrf.mxu0
      %v4184 = vpop.f32.mrf.mxu0
      %v4185 = vadd.f32 0.0, %v4184
      %v4186 = vpop.f32.mrf.mxu0
      %4187 = vmatprep.mubr.bf16.mxu0 0
      %4188 = vmatmul.mubr.bf16.gmra.mxu0 %v4108
      %v4189 = vpop.f32.mrf.mxu0
      %v4190 = vadd.f32 0.0, %v4189
      %v4191 = vpop.f32.mrf.mxu0
      %v4192 = vpop.f32.mrf.mxu0
      %v4193 = vadd.f32 0.0, %v4192
      %v4194 = vpop.f32.mrf.mxu0
      %4195 = vmatprep.mubr.bf16.mxu0 0
      %4196 = vmatmul.mubr.bf16.gmra.mxu0 %v4111
      %v4197 = vpop.f32.mrf.mxu0
      %v4198 = vadd.f32 0.0, %v4197
      %v4199 = vpop.f32.mrf.mxu0
      %v4200 = vpop.f32.mrf.mxu0
      %v4201 = vadd.f32 0.0, %v4200
      %v4202 = vpop.f32.mrf.mxu0
      %4203 = vmatprep.mubr.bf16.mxu0 0
      %4204 = vmatmul.mubr.bf16.gmra.mxu0 %v4114
      %v4205 = vpop.f32.mrf.mxu0
      %v4206 = vadd.f32 0.0, %v4205
      %v4207 = vpop.f32.mrf.mxu0
      %v4208 = vpop.f32.mrf.mxu0
      %v4209 = vadd.f32 0.0, %v4208
      %v4210 = vpop.f32.mrf.mxu0
      %4211 = vmatprep.mubr.bf16.mxu0 0
      %4212 = vmatmul.mubr.bf16.gmra.mxu0 %v4117
      %v4213 = vpop.f32.mrf.mxu0
      %v4214 = vadd.f32 0.0, %v4213
      %v4215 = vpop.f32.mrf.mxu0
      %v4216 = vpop.f32.mrf.mxu0
      %v4217 = vadd.f32 0.0, %v4216
      %v4218 = vpop.f32.mrf.mxu0
      %4219 = vmatprep.mubr.bf16.mxu0 0
      %4220 = vmatmul.mubr.bf16.gmra.mxu0 %v4120
      %v4221 = vpop.f32.mrf.mxu0
      %v4222 = vadd.f32 0.0, %v4221
      %v4223 = vpop.f32.mrf.mxu0
      %v4224 = vpop.f32.mrf.mxu0
      %v4225 = vadd.f32 0.0, %v4224
      %v4226 = vpop.f32.mrf.mxu0
      %4227 = vmatprep.mubr.bf16.mxu0 0
      %4228 = vmatmul.mubr.bf16.gmra.mxu0 %v4123
      %v4229 = vpop.f32.mrf.mxu0
      %v4230 = vadd.f32 0.0, %v4229
      %v4231 = vpop.f32.mrf.mxu0
      %v4232 = vpop.f32.mrf.mxu0
      %v4233 = vadd.f32 0.0, %v4232
      %v4234 = vpop.f32.mrf.mxu0
      %4235 = vmatprep.mubr.bf16.mxu0 0
      %4236 = vmatmul.mubr.bf16.gmra.mxu0 %v4126
      %v4237 = vpop.f32.mrf.mxu0
      %v4238 = vadd.f32 0.0, %v4237
      %v4239 = vpop.f32.mrf.mxu0
      %v4240 = vpop.f32.mrf.mxu0
      %v4241 = vadd.f32 0.0, %v4240
      %v4242 = vpop.f32.mrf.mxu0
      %4243 = vdwg.mxu0
      %v4244 = vadd.f32 %v4046, %v4166
      %v4245 = vadd.f32 %v4047, %v4169
      %v4246 = vadd.f32 %v4048, %v4174
      %v4247 = vadd.f32 %v4049, %v4177
      %v4248 = vadd.f32 %v4050, %v4182
      %v4249 = vadd.f32 %v4051, %v4185
      %v4250 = vadd.f32 %v4052, %v4190
      %v4251 = vadd.f32 %v4053, %v4193
      %v4252 = vadd.f32 %v4054, %v4198
      %v4253 = vadd.f32 %v4055, %v4201
      %v4254 = vadd.f32 %v4056, %v4206
      %v4255 = vadd.f32 %v4057, %v4209
      %v4256 = vadd.f32 %v4058, %v4214
      %v4257 = vadd.f32 %v4059, %v4217
      %v4258 = vadd.f32 %v4060, %v4222
      %v4259 = vadd.f32 %v4061, %v4225
      %v4260 = vadd.f32 %v4062, %v4230
      %v4261 = vadd.f32 %v4063, %v4233
      %v4262 = vadd.f32 %v4064, %v4238
      %v4263 = vadd.f32 %v4065, %v4241
      %v4264 = vld [vmem:[#allocation3 + $0x29] sm:$0xff]
      %v4265 = vld [vmem:[#allocation3 + $0x31] sm:$0xff]
      %v4266 = vld [vmem:[#allocation3 + $0x39] sm:$0xff]
      %v4267 = vld [vmem:[#allocation3 + $0x41] sm:$0xff]
      %v4268 = vld [vmem:[#allocation3 + $0x49] sm:$0xff]
      %v4269 = vld [vmem:[#allocation3 + $0x51] sm:$0xff]
      %v4270 = vld [vmem:[#allocation3 + $0x59] sm:$0xff]
      %v4271 = vld [vmem:[#allocation3 + $0x61] sm:$0xff]
      %v4272 = vld [vmem:[#allocation3 + $0x69] sm:$0xff]
      %v4273 = vld [vmem:[#allocation3 + $0x71] sm:$0xff]
      %v4274 = vld [vmem:[#allocation3 + $0x79] sm:$0xff]
      %v4275 = vld [vmem:[#allocation3 + $0x81] sm:$0xff]
      %v4276 = vld [vmem:[#allocation3 + $0x89] sm:$0xff]
      %v4277 = vld [vmem:[#allocation3 + $0x91] sm:$0xff]
      %v4278 = vld [vmem:[#allocation3 + $0x99] sm:$0xff]
      %v4279 = vld [vmem:[#allocation3 + $0xa1] sm:$0xff]
      %v4280 = vld [vmem:[#allocation3 + $0xa9] sm:$0xff]
      %v4281 = vld [vmem:[#allocation3 + $0xb1] sm:$0xff]
      %v4282 = vld [vmem:[#allocation3 + $0xb9] sm:$0xff]
      %v4283 = vld [vmem:[#allocation3 + $0xc1] sm:$0xff]
      %v4284 = vpack.c.bf16 %v4265, %v4264
      %v4285 = vpack.c.bf16 %v4267, %v4266
      %v4286 = vpack.c.bf16 %v4269, %v4268
      %v4287 = vpack.c.bf16 %v4271, %v4270
      %v4288 = vpack.c.bf16 %v4273, %v4272
      %v4289 = vpack.c.bf16 %v4275, %v4274
      %v4290 = vpack.c.bf16 %v4277, %v4276
      %v4291 = vpack.c.bf16 %v4279, %v4278
      %v4292 = vpack.c.bf16 %v4281, %v4280
      %v4293 = vpack.c.bf16 %v4283, %v4282
      %s4294 = scalar_lea.vmem %s7, 16
      %v4295 = vld [vmem:[%s4294] sm:$0x3]
      %v4297 = vsel %vm832, %v4284, 0
      %v4300 = vsel %vm832, %v4285, 0
      %v4303 = vsel %vm832, %v4286, 0
      %v4306 = vsel %vm832, %v4287, 0
      %v4309 = vsel %vm832, %v4288, 0
      %v4312 = vsel %vm832, %v4289, 0
      %v4315 = vsel %vm832, %v4290, 0
      %v4318 = vsel %vm832, %v4291, 0
      %v4321 = vsel %vm832, %v4292, 0
      %v4324 = vsel %vm832, %v4293, 0
      %v4327 = vsel %vm952, %v4295, 0
      %4329 = vmatprep.subr.bf16.mxu0 0
      %4330 = vmatpush1.bf16.msra.mxu0 0
      %4331 = vmatprep.subr.bf16.mxu0 0
      %4332 = vmatpush1.bf16.msra.mxu0 0
      %4333 = vmatprep.subr.bf16.mxu0 0
      %4334 = vmatpush1.bf16.msra.mxu0 0
      %4335 = vmatprep.subr.bf16.mxu0 0
      %4336 = vmatpush1.bf16.msra.mxu0 0
      %4337 = vmatprep.subr.bf16.mxu0 0
      %4338 = vmatpush1.bf16.msra.mxu0 0
      %4339 = vmatprep.subr.bf16.mxu0 0
      %4340 = vmatpush1.bf16.msra.mxu0 0
      %4341 = vmatprep.subr.bf16.mxu0 0
      %4342 = vmatpush1.bf16.msra.mxu0 0
      %4343 = vmatprep.subr.bf16.mxu0 0
      %4344 = vmatpush1.bf16.msra.mxu0 %v4327
      %4345 = vmatprep.subr.bf16.mxu0 0
      %4346 = vmatpush2.bf16.msra.mxu0 0
      %4347 = vmatprep.subr.bf16.mxu0 0
      %4348 = vmatpush2.bf16.msra.mxu0 0
      %4349 = vmatprep.subr.bf16.mxu0 0
      %4350 = vmatpush2.bf16.msra.mxu0 0
      %4351 = vmatprep.subr.bf16.mxu0 0
      %4352 = vmatpush2.bf16.msra.mxu0 0
      %4353 = vmatprep.subr.bf16.mxu0 0
      %4354 = vmatpush2.bf16.msra.mxu0 0
      %4355 = vmatprep.subr.bf16.mxu0 0
      %4356 = vmatpush2.bf16.msra.mxu0 0
      %4357 = vmatprep.subr.bf16.mxu0 0
      %4358 = vmatpush2.bf16.msra.mxu0 0
      %4359 = vmatprep.subr.bf16.mxu0 0
      %4360 = vmatpush2.bf16.msra.mxu0 0
      %4361 = vmatprep.mubr.bf16.mxu0 0
      %4362 = vmatmul.mubr.bf16.gmra.mxu0 %v4297
      %v4363 = vpop.f32.mrf.mxu0
      %v4364 = vadd.f32 0.0, %v4363
      %v4365 = vpop.f32.mrf.mxu0
      %v4366 = vpop.f32.mrf.mxu0
      %v4367 = vadd.f32 0.0, %v4366
      %v4368 = vpop.f32.mrf.mxu0
      %4369 = vmatprep.mubr.bf16.mxu0 0
      %4370 = vmatmul.mubr.bf16.gmra.mxu0 %v4300
      %v4371 = vpop.f32.mrf.mxu0
      %v4372 = vadd.f32 0.0, %v4371
      %v4373 = vpop.f32.mrf.mxu0
      %v4374 = vpop.f32.mrf.mxu0
      %v4375 = vadd.f32 0.0, %v4374
      %v4376 = vpop.f32.mrf.mxu0
      %4377 = vmatprep.mubr.bf16.mxu0 0
      %4378 = vmatmul.mubr.bf16.gmra.mxu0 %v4303
      %v4379 = vpop.f32.mrf.mxu0
      %v4380 = vadd.f32 0.0, %v4379
      %v4381 = vpop.f32.mrf.mxu0
      %v4382 = vpop.f32.mrf.mxu0
      %v4383 = vadd.f32 0.0, %v4382
      %v4384 = vpop.f32.mrf.mxu0
      %4385 = vmatprep.mubr.bf16.mxu0 0
      %4386 = vmatmul.mubr.bf16.gmra.mxu0 %v4306
      %v4387 = vpop.f32.mrf.mxu0
      %v4388 = vadd.f32 0.0, %v4387
      %v4389 = vpop.f32.mrf.mxu0
      %v4390 = vpop.f32.mrf.mxu0
      %v4391 = vadd.f32 0.0, %v4390
      %v4392 = vpop.f32.mrf.mxu0
      %4393 = vmatprep.mubr.bf16.mxu0 0
      %4394 = vmatmul.mubr.bf16.gmra.mxu0 %v4309
      %v4395 = vpop.f32.mrf.mxu0
      %v4396 = vadd.f32 0.0, %v4395
      %v4397 = vpop.f32.mrf.mxu0
      %v4398 = vpop.f32.mrf.mxu0
      %v4399 = vadd.f32 0.0, %v4398
      %v4400 = vpop.f32.mrf.mxu0
      %4401 = vmatprep.mubr.bf16.mxu0 0
      %4402 = vmatmul.mubr.bf16.gmra.mxu0 %v4312
      %v4403 = vpop.f32.mrf.mxu0
      %v4404 = vadd.f32 0.0, %v4403
      %v4405 = vpop.f32.mrf.mxu0
      %v4406 = vpop.f32.mrf.mxu0
      %v4407 = vadd.f32 0.0, %v4406
      %v4408 = vpop.f32.mrf.mxu0
      %4409 = vmatprep.mubr.bf16.mxu0 0
      %4410 = vmatmul.mubr.bf16.gmra.mxu0 %v4315
      %v4411 = vpop.f32.mrf.mxu0
      %v4412 = vadd.f32 0.0, %v4411
      %v4413 = vpop.f32.mrf.mxu0
      %v4414 = vpop.f32.mrf.mxu0
      %v4415 = vadd.f32 0.0, %v4414
      %v4416 = vpop.f32.mrf.mxu0
      %4417 = vmatprep.mubr.bf16.mxu0 0
      %4418 = vmatmul.mubr.bf16.gmra.mxu0 %v4318
      %v4419 = vpop.f32.mrf.mxu0
      %v4420 = vadd.f32 0.0, %v4419
      %v4421 = vpop.f32.mrf.mxu0
      %v4422 = vpop.f32.mrf.mxu0
      %v4423 = vadd.f32 0.0, %v4422
      %v4424 = vpop.f32.mrf.mxu0
      %4425 = vmatprep.mubr.bf16.mxu0 0
      %4426 = vmatmul.mubr.bf16.gmra.mxu0 %v4321
      %v4427 = vpop.f32.mrf.mxu0
      %v4428 = vadd.f32 0.0, %v4427
      %v4429 = vpop.f32.mrf.mxu0
      %v4430 = vpop.f32.mrf.mxu0
      %v4431 = vadd.f32 0.0, %v4430
      %v4432 = vpop.f32.mrf.mxu0
      %4433 = vmatprep.mubr.bf16.mxu0 0
      %4434 = vmatmul.mubr.bf16.gmra.mxu0 %v4324
      %v4435 = vpop.f32.mrf.mxu0
      %v4436 = vadd.f32 0.0, %v4435
      %v4437 = vpop.f32.mrf.mxu0
      %v4438 = vpop.f32.mrf.mxu0
      %v4439 = vadd.f32 0.0, %v4438
      %v4440 = vpop.f32.mrf.mxu0
      %4441 = vdwg.mxu0
      %v4442 = vadd.f32 %v4244, %v4364
      %v4443 = vadd.f32 %v4245, %v4367
      %v4444 = vadd.f32 %v4246, %v4372
      %v4445 = vadd.f32 %v4247, %v4375
      %v4446 = vadd.f32 %v4248, %v4380
      %v4447 = vadd.f32 %v4249, %v4383
      %v4448 = vadd.f32 %v4250, %v4388
      %v4449 = vadd.f32 %v4251, %v4391
      %v4450 = vadd.f32 %v4252, %v4396
      %v4451 = vadd.f32 %v4253, %v4399
      %v4452 = vadd.f32 %v4254, %v4404
      %v4453 = vadd.f32 %v4255, %v4407
      %v4454 = vadd.f32 %v4256, %v4412
      %v4455 = vadd.f32 %v4257, %v4415
      %v4456 = vadd.f32 %v4258, %v4420
      %v4457 = vadd.f32 %v4259, %v4423
      %v4458 = vadd.f32 %v4260, %v4428
      %v4459 = vadd.f32 %v4261, %v4431
      %v4460 = vadd.f32 %v4262, %v4436
      %v4461 = vadd.f32 %v4263, %v4439
      %v4462 = vld [vmem:[%s8] sm:$0x1]
      %v4464 = vlaneseq
      %v4465 = vshrl.u32 %v4464, 7
      %v4466 = vsub.s32 0, %v4465
      %v4467 = vrot.slane %v4462, %v4466
      %v4469 = vmul.f32 %v4442, %v4467
      %v4470 = vmul.f32 %v4443, %v4467
      %v4471 = vmul.f32 %v4444, %v4467
      %v4472 = vmul.f32 %v4445, %v4467
      %v4473 = vmul.f32 %v4446, %v4467
      %v4474 = vmul.f32 %v4447, %v4467
      %v4475 = vmul.f32 %v4448, %v4467
      %v4476 = vmul.f32 %v4449, %v4467
      %v4477 = vmul.f32 %v4450, %v4467
      %v4478 = vmul.f32 %v4451, %v4467
      %v4479 = vmul.f32 %v4452, %v4467
      %v4480 = vmul.f32 %v4453, %v4467
      %v4481 = vmul.f32 %v4454, %v4467
      %v4482 = vmul.f32 %v4455, %v4467
      %v4483 = vmul.f32 %v4456, %v4467
      %v4484 = vmul.f32 %v4457, %v4467
      %v4485 = vmul.f32 %v4458, %v4467
      %v4486 = vmul.f32 %v4459, %v4467
      %v4487 = vmul.f32 %v4460, %v4467
      %v4488 = vmul.f32 %v4461, %v4467
      %v4489 = vld [vmem:[%s9] sm:$0x1]
      %v4491 = vlaneseq
      %v4492 = vshrl.u32 %v4491, 7
      %v4493 = vsub.s32 0, %v4492
      %v4494 = vrot.slane %v4489, %v4493
      %v4496 = vadd.f32 %v4469, %v4494
      %v4497 = vadd.f32 %v4470, %v4494
      %v4498 = vadd.f32 %v4471, %v4494
      %v4499 = vadd.f32 %v4472, %v4494
      %v4500 = vadd.f32 %v4473, %v4494
      %v4501 = vadd.f32 %v4474, %v4494
      %v4502 = vadd.f32 %v4475, %v4494
      %v4503 = vadd.f32 %v4476, %v4494
      %v4504 = vadd.f32 %v4477, %v4494
      %v4505 = vadd.f32 %v4478, %v4494
      %v4506 = vadd.f32 %v4479, %v4494
      %v4507 = vadd.f32 %v4480, %v4494
      %v4508 = vadd.f32 %v4481, %v4494
      %v4509 = vadd.f32 %v4482, %v4494
      %v4510 = vadd.f32 %v4483, %v4494
      %v4511 = vadd.f32 %v4484, %v4494
      %v4512 = vadd.f32 %v4485, %v4494
      %v4513 = vadd.f32 %v4486, %v4494
      %v4514 = vadd.f32 %v4487, %v4494
      %v4515 = vadd.f32 %v4488, %v4494
      %v4516 = vmax.f32 %v4496, 0.0
      %v4517 = vmax.f32 %v4497, 0.0
      %v4518 = vmax.f32 %v4498, 0.0
      %v4519 = vmax.f32 %v4499, 0.0
      %v4520 = vmax.f32 %v4500, 0.0
      %v4521 = vmax.f32 %v4501, 0.0
      %v4522 = vmax.f32 %v4502, 0.0
      %v4523 = vmax.f32 %v4503, 0.0
      %v4524 = vmax.f32 %v4504, 0.0
      %v4525 = vmax.f32 %v4505, 0.0
      %v4526 = vmax.f32 %v4506, 0.0
      %v4527 = vmax.f32 %v4507, 0.0
      %v4528 = vmax.f32 %v4508, 0.0
      %v4529 = vmax.f32 %v4509, 0.0
      %v4530 = vmax.f32 %v4510, 0.0
      %v4531 = vmax.f32 %v4511, 0.0
      %v4532 = vmax.f32 %v4512, 0.0
      %v4533 = vmax.f32 %v4513, 0.0
      %v4534 = vmax.f32 %v4514, 0.0
      %v4535 = vmax.f32 %v4515, 0.0
      %vm4536 = vcmask 64512
      %4537 = vst.msk [vmem:[#allocation4] sm:$0xff] %vm4536, %v4516
      %4538 = vst.msk [vmem:[#allocation4 + $0x8] sm:$0xff] %vm4536, %v4517
      %4539 = vst.msk [vmem:[#allocation4 + $0x10] sm:$0xff] %vm4536, %v4518
      %4540 = vst.msk [vmem:[#allocation4 + $0x18] sm:$0xff] %vm4536, %v4519
      %4541 = vst.msk [vmem:[#allocation4 + $0x20] sm:$0xff] %vm4536, %v4520
      %4542 = vst.msk [vmem:[#allocation4 + $0x28] sm:$0xff] %vm4536, %v4521
      %4543 = vst.msk [vmem:[#allocation4 + $0x30] sm:$0xff] %vm4536, %v4522
      %4544 = vst.msk [vmem:[#allocation4 + $0x38] sm:$0xff] %vm4536, %v4523
      %4545 = vst.msk [vmem:[#allocation4 + $0x40] sm:$0xff] %vm4536, %v4524
      %4546 = vst.msk [vmem:[#allocation4 + $0x48] sm:$0xff] %vm4536, %v4525
      %4547 = vst.msk [vmem:[#allocation4 + $0x50] sm:$0xff] %vm4536, %v4526
      %4548 = vst.msk [vmem:[#allocation4 + $0x58] sm:$0xff] %vm4536, %v4527
      %4549 = vst.msk [vmem:[#allocation4 + $0x60] sm:$0xff] %vm4536, %v4528
      %4550 = vst.msk [vmem:[#allocation4 + $0x68] sm:$0xff] %vm4536, %v4529
      %4551 = vst.msk [vmem:[#allocation4 + $0x70] sm:$0xff] %vm4536, %v4530
      %4552 = vst.msk [vmem:[#allocation4 + $0x78] sm:$0xff] %vm4536, %v4531
      %4553 = vst.msk [vmem:[#allocation4 + $0x80] sm:$0xff] %vm4536, %v4532
      %4554 = vst.msk [vmem:[#allocation4 + $0x88] sm:$0xff] %vm4536, %v4533
      %4555 = vst.msk [vmem:[#allocation4 + $0x90] sm:$0xff] %vm4536, %v4534
      %4556 = vst.msk [vmem:[#allocation4 + $0x98] sm:$0xff] %vm4536, %v4535
      %4557 = vst.msk [vmem:[#allocation4 + $0xa0] sm:$0xff] %vm4536, 0.0
      %v4558 = vld [vmem:[#allocation4 + $0x10] sm:$0xff]
      %v4559 = vld [vmem:[#allocation4 + $0x18] sm:$0xff]
      %v4560 = vld [vmem:[#allocation4 + $0x20] sm:$0xff]
      %v4561 = vld [vmem:[#allocation4 + $0x28] sm:$0xff]
      %v4562 = vld [vmem:[#allocation4 + $0x30] sm:$0xff]
      %v4563 = vld [vmem:[#allocation4 + $0x38] sm:$0xff]
      %v4564 = vld [vmem:[#allocation4 + $0x40] sm:$0xff]
      %v4565 = vld [vmem:[#allocation4 + $0x48] sm:$0xff]
      %v4566 = vld [vmem:[#allocation4 + $0x50] sm:$0xff]
      %v4567 = vld [vmem:[#allocation4 + $0x58] sm:$0xff]
      %v4568 = vld [vmem:[#allocation4 + $0x60] sm:$0xff]
      %v4569 = vld [vmem:[#allocation4 + $0x68] sm:$0xff]
      %v4570 = vld [vmem:[#allocation4 + $0x70] sm:$0xff]
      %v4571 = vld [vmem:[#allocation4 + $0x78] sm:$0xff]
      %v4572 = vld [vmem:[#allocation4 + $0x80] sm:$0xff]
      %v4573 = vld [vmem:[#allocation4 + $0x88] sm:$0xff]
      %v4574 = vld [vmem:[#allocation4 + $0x11] sm:$0xff]
      %v4575 = vld [vmem:[#allocation4 + $0x19] sm:$0xff]
      %v4576 = vld [vmem:[#allocation4 + $0x21] sm:$0xff]
      %v4577 = vld [vmem:[#allocation4 + $0x29] sm:$0xff]
      %v4578 = vld [vmem:[#allocation4 + $0x31] sm:$0xff]
      %v4579 = vld [vmem:[#allocation4 + $0x39] sm:$0xff]
      %v4580 = vld [vmem:[#allocation4 + $0x41] sm:$0xff]
      %v4581 = vld [vmem:[#allocation4 + $0x49] sm:$0xff]
      %v4582 = vld [vmem:[#allocation4 + $0x51] sm:$0xff]
      %v4583 = vld [vmem:[#allocation4 + $0x59] sm:$0xff]
      %v4584 = vld [vmem:[#allocation4 + $0x61] sm:$0xff]
      %v4585 = vld [vmem:[#allocation4 + $0x69] sm:$0xff]
      %v4586 = vld [vmem:[#allocation4 + $0x71] sm:$0xff]
      %v4587 = vld [vmem:[#allocation4 + $0x79] sm:$0xff]
      %v4588 = vld [vmem:[#allocation4 + $0x81] sm:$0xff]
      %v4589 = vld [vmem:[#allocation4 + $0x89] sm:$0xff]
      %v4590 = vadd.f32 %v4558, %v4574
      %v4591 = vadd.f32 %v4559, %v4575
      %v4592 = vadd.f32 %v4560, %v4576
      %v4593 = vadd.f32 %v4561, %v4577
      %v4594 = vadd.f32 %v4562, %v4578
      %v4595 = vadd.f32 %v4563, %v4579
      %v4596 = vadd.f32 %v4564, %v4580
      %v4597 = vadd.f32 %v4565, %v4581
      %v4598 = vadd.f32 %v4566, %v4582
      %v4599 = vadd.f32 %v4567, %v4583
      %v4600 = vadd.f32 %v4568, %v4584
      %v4601 = vadd.f32 %v4569, %v4585
      %v4602 = vadd.f32 %v4570, %v4586
      %v4603 = vadd.f32 %v4571, %v4587
      %v4604 = vadd.f32 %v4572, %v4588
      %v4605 = vadd.f32 %v4573, %v4589
      %v4606 = vld [vmem:[#allocation4 + $0x90] sm:$0xff]
      %v4607 = vld [vmem:[#allocation4 + $0x98] sm:$0xff]
      %v4608 = vadd.f32 %v4590, %v4560
      %v4609 = vadd.f32 %v4591, %v4561
      %v4610 = vadd.f32 %v4592, %v4562
      %v4611 = vadd.f32 %v4593, %v4563
      %v4612 = vadd.f32 %v4594, %v4564
      %v4613 = vadd.f32 %v4595, %v4565
      %v4614 = vadd.f32 %v4596, %v4566
      %v4615 = vadd.f32 %v4597, %v4567
      %v4616 = vadd.f32 %v4598, %v4568
      %v4617 = vadd.f32 %v4599, %v4569
      %v4618 = vadd.f32 %v4600, %v4570
      %v4619 = vadd.f32 %v4601, %v4571
      %v4620 = vadd.f32 %v4602, %v4572
      %v4621 = vadd.f32 %v4603, %v4573
      %v4622 = vadd.f32 %v4604, %v4606
      %v4623 = vadd.f32 %v4605, %v4607
      %v4624 = vld [vmem:[#allocation4 + $0x91] sm:$0xff]
      %v4625 = vld [vmem:[#allocation4 + $0x99] sm:$0xff]
      %v4626 = vadd.f32 %v4608, %v4576
      %v4627 = vadd.f32 %v4609, %v4577
      %v4628 = vadd.f32 %v4610, %v4578
      %v4629 = vadd.f32 %v4611, %v4579
      %v4630 = vadd.f32 %v4612, %v4580
      %v4631 = vadd.f32 %v4613, %v4581
      %v4632 = vadd.f32 %v4614, %v4582
      %v4633 = vadd.f32 %v4615, %v4583
      %v4634 = vadd.f32 %v4616, %v4584
      %v4635 = vadd.f32 %v4617, %v4585
      %v4636 = vadd.f32 %v4618, %v4586
      %v4637 = vadd.f32 %v4619, %v4587
      %v4638 = vadd.f32 %v4620, %v4588
      %v4639 = vadd.f32 %v4621, %v4589
      %v4640 = vadd.f32 %v4622, %v4624
      %v4641 = vadd.f32 %v4623, %v4625
      %v4642 = vmul.f32 %v4626, 0.25
      %v4643 = vmul.f32 %v4627, 0.25
      %v4644 = vmul.f32 %v4628, 0.25
      %v4645 = vmul.f32 %v4629, 0.25
      %v4646 = vmul.f32 %v4630, 0.25
      %v4647 = vmul.f32 %v4631, 0.25
      %v4648 = vmul.f32 %v4632, 0.25
      %v4649 = vmul.f32 %v4633, 0.25
      %v4650 = vmul.f32 %v4634, 0.25
      %v4651 = vmul.f32 %v4635, 0.25
      %v4652 = vmul.f32 %v4636, 0.25
      %v4653 = vmul.f32 %v4637, 0.25
      %v4654 = vmul.f32 %v4638, 0.25
      %v4655 = vmul.f32 %v4639, 0.25
      %v4656 = vmul.f32 %v4640, 0.25
      %v4657 = vmul.f32 %v4641, 0.25
      %4658 = vst.msk [vmem:[%s386] sm:$0xff] %vm4536, %v4642
      %4659 = vst.msk [vmem:[%s386 + $0x8] sm:$0xff] %vm4536, %v4643
      %4660 = vst.msk [vmem:[%s386 + $0x10] sm:$0xff] %vm4536, %v4644
      %4661 = vst.msk [vmem:[%s386 + $0x18] sm:$0xff] %vm4536, %v4645
      %4662 = vst.msk [vmem:[%s386 + $0x20] sm:$0xff] %vm4536, %v4646
      %4663 = vst.msk [vmem:[%s386 + $0x28] sm:$0xff] %vm4536, %v4647
      %4664 = vst.msk [vmem:[%s386 + $0x30] sm:$0xff] %vm4536, %v4648
      %4665 = vst.msk [vmem:[%s386 + $0x38] sm:$0xff] %vm4536, %v4649
      %4666 = vst.msk [vmem:[%s386 + $0x40] sm:$0xff] %vm4536, %v4650
      %4667 = vst.msk [vmem:[%s386 + $0x48] sm:$0xff] %vm4536, %v4651
      %4668 = vst.msk [vmem:[%s386 + $0x50] sm:$0xff] %vm4536, %v4652
      %4669 = vst.msk [vmem:[%s386 + $0x58] sm:$0xff] %vm4536, %v4653
      %4670 = vst.msk [vmem:[%s386 + $0x60] sm:$0xff] %vm4536, %v4654
      %4671 = vst.msk [vmem:[%s386 + $0x68] sm:$0xff] %vm4536, %v4655
      %4672 = vst.msk [vmem:[%s386 + $0x70] sm:$0xff] %vm4536, %v4656
      %4673 = vst.msk [vmem:[%s386 + $0x78] sm:$0xff] %vm4536, %v4657
      %p4674 = scmp.lt.s32.totalorder %s22, 1
      %s4675 = scalar_select %p4674, %s22, 1
      %s4676 = smul.addr %s4675, 16
      %s4677 = smul.addr %s4676, 8
      %s4678 = scalar_lea.vmem %s11, %s4677
      // Predicated region
      $region65: #{tpu_custom_call.1} parent=63 // pred_check
        %p4679 = pneg %p276
      $region66: #{tpu_custom_call.1} parent=63 // pred_check_branch
        %4681 = sbr.rel (%p4679) target = $region68
      $region67: #{tpu_custom_call.1} parent=63 // pred_region
        _
      $region68: #{tpu_custom_call.1} parent=63 // pred_fallthru
        _
    $region64: #{tpu_custom_call.1} parent=5 // pred_fallthru
      _
    %p4682 = scmp.le.s32.totalorder 2, %s17
    // Predicated region
    $region69: #{tpu_custom_call.1} parent=5 // pred_check
      %p4683 = pneg %p4682
    $region70: #{tpu_custom_call.1} parent=5 // pred_check_branch
      %4685 = sbr.rel (%p4683) target = $region72
    $region71: #{tpu_custom_call.1} parent=5 // pred_region
      %s4686 = ssub.s32 %s17, 2
      // Predicated region
      $region73: #{tpu_custom_call.1} parent=71 // pred_check
        %p4687 = pneg %p282
      $region74: #{tpu_custom_call.1} parent=71 // pred_check_branch
        %4689 = sbr.rel (%p4687) target = $region76
      $region75: #{tpu_custom_call.1} parent=71 // pred_region
        %p4690 = scmp.lt.s32.totalorder %s23, 1
        %s4691 = scalar_select %p4690, %s23, 1
        %s4692 = smul.addr %s4691, 16
        %s4693 = smul.addr %s4692, 8
        %s4694 = scalar_lea.vmem %s11, %s4693
      $region76: #{tpu_custom_call.1} parent=71 // pred_fallthru
        _
    $region72: #{tpu_custom_call.1} parent=5 // pred_fallthru
      _
  $region6: #{tpu_custom_call.1} parent=0 // loop_footer
    %s21 = sadd.s32 1, %s17
  $region7: #{tpu_custom_call.1} parent=0 // loop_footer_branch
    %16 = sbr.rel target = $region3
  $region8: #{tpu_custom_call.1} parent=0 // loop_exit
    _

</llo_original>
